<compile_context>
chip_gen: v5e
topology: v5e:2x2
jax: 0.10.0
libtpu: 0.0.40
codegen_flags: <defaults>
</compile_context>

<pallas_src>
import jax
import jax.numpy as jnp
import numpy as np
from jax import lax
from jax.experimental import pallas as pl
from jax.experimental.pallas import tpu as pltpu


# --------------------------- fused conv-path kernel ---------------------------
def _fused_conv_kernel(x_ref, w1_ref, b1_ref, w2_ref, b2_ref, o_ref,
                       xpad_ref, hp1_ref, p1pad_ref, lhs_ref, hz_ref):
    """Per image: conv1(1->32,3x3,p=1)+ReLU+2x2pool -> conv2(32->64)+ReLU+2x2pool.

    All intermediates stay in VMEM; channels live on the lane axis throughout.
    """
    # ---- zero-pad the 28x28 input to 30x30 inside VMEM (no HBM pad/im2col) ----
    xpad_ref[...] = jnp.zeros_like(xpad_ref)
    xpad_ref[1:29, 1:29, :] = x_ref[0]                       # (28, 28, 1)

    w1 = w1_ref[...]                                         # (9, 32)  f32
    b1 = b1_ref[...]                                         # (1, 32)  f32

    # ---- conv1 + ReLU as 9 shifted VPU MACs, fused with the 2x pool over h ----
    @pl.loop(0, 14)
    def _conv1_rows(h2):
        row_max = None
        for dh in range(2):
            acc = jnp.zeros((28, 32), jnp.float32)
            for kh in range(3):
                r = 2 * h2 + dh + kh
                for kw in range(3):
                    t = kh * 3 + kw
                    col = xpad_ref[r, kw:kw + 28, :]         # (28, 1)
                    acc = acc + col * w1[t:t + 1, :]         # -> (28, 32)
            row_max = acc if row_max is None else jnp.maximum(row_max, acc)
        hp1_ref[h2] = jnp.maximum(row_max + b1, 0.0)         # (28, 32)

    # ---- pool over w (sublane-strided loads) + zero-pad for conv2 ----
    p1pad_ref[...] = jnp.zeros_like(p1pad_ref)
    p1pad_ref[1:15, 1:15, 0:32] = jnp.maximum(
        hp1_ref[:, pl.ds(0, 14, stride=2), :],
        hp1_ref[:, pl.ds(1, 14, stride=2), :])               # (14, 14, 32)

    b2 = b2_ref[...]                                         # (1, 64)  f32

    # ---- conv2 + ReLU on the MXU, fused with the 2x pool over h ----
    @pl.loop(0, 7)
    def _conv2_rows(h2):
        row_max = None
        for dh in range(2):
            h = 2 * h2 + dh
            # Build this output row's im2col slab (14, 9*128) in VMEM.  Each
            # tap is a full 128-lane tile store, so everything stays aligned.
            for kh in range(3):
                for kw in range(3):
                    t = kh * 3 + kw
                    lhs_ref[:, t * 128:(t + 1) * 128] = (
                        p1pad_ref[h + kh, kw:kw + 14, :].astype(jnp.bfloat16))
            acc = jnp.dot(lhs_ref[...], w2_ref[...],
                          preferred_element_type=jnp.float32)  # (14, 64) f32
            row_max = acc if row_max is None else jnp.maximum(row_max, acc)
        hz_ref[h2] = jnp.maximum(row_max + b2, 0.0)          # (14, 64)

    # ---- pool over w and emit the (7, 7, 64) NHWC feature block ----
    o_ref[0] = jnp.maximum(hz_ref[:, pl.ds(0, 7, stride=2), :],
                           hz_ref[:, pl.ds(1, 7, stride=2), :])


# ------------------------------- MLP head kernel ------------------------------
def _mlp_kernel(x_ref, w1_ref, b1_ref, w2_ref, b2_ref, o_ref):
    h = jnp.dot(x_ref[...].astype(jnp.bfloat16), w1_ref[...],
                preferred_element_type=jnp.float32)
    h = jnp.maximum(h + b1_ref[...], 0.0)                    # f32 epilogue
    o = jnp.dot(h.astype(jnp.bfloat16), w2_ref[...],
                preferred_element_type=jnp.float32) + b2_ref[...]
    o_ref[...] = o.astype(o_ref.dtype)


# --------------------- one-time parameter re-layout (no jit) -------------------
def prepare_params(params):
    w1 = jnp.asarray(params["conv1_w"], jnp.float32)         # (32, 1, 3, 3)
    w2 = jnp.asarray(params["conv2_w"], jnp.float32)         # (64, 32, 3, 3)
    fc1_w = jnp.asarray(params["fc1_w"], jnp.float32)        # (128, 3136)
    fc2_w = jnp.asarray(params["fc2_w"], jnp.float32)        # (10, 128)

    # conv1 taps laid out (kh*3+kw, cout) for the in-kernel VPU MACs.
    w1p = w1[:, 0].transpose(1, 2, 0).reshape(9, 32)

    # conv2 taps laid out (tap, cin, cout), zero-padded to one 128-lane tile
    # per tap so the in-kernel im2col slab stays lane-tile aligned.
    w2t = w2.transpose(2, 3, 1, 0)                           # (3, 3, 32, 64)
    w2p = jnp.zeros((3, 3, 128, 64), jnp.float32).at[:, :, :32, :].set(w2t)
    w2p = w2p.reshape(9 * 128, 64).astype(jnp.bfloat16)

    # fc1: bake the PyTorch NCHW flatten order into the rows (so the kernel's
    # NHWC (h, w, c) features feed it directly) and pre-transpose to (in, out).
    fc1p = (fc1_w.reshape(128, 64, 7, 7).transpose(2, 3, 1, 0)
            .reshape(7 * 7 * 64, 128).astype(jnp.bfloat16))
    fc2p = fc2_w.T.astype(jnp.bfloat16)                      # (128, 10)

    return {
        "w1": w1p,
        "b1": jnp.asarray(params["conv1_b"], jnp.float32).reshape(1, 32),
        "w2": w2p,
        "b2": jnp.asarray(params["conv2_b"], jnp.float32).reshape(1, 64),
        "fc1_w": fc1p,
        "fc1_b": jnp.asarray(params["fc1_b"], jnp.float32).reshape(1, 128),
        "fc2_w": fc2p,
        "fc2_b": jnp.asarray(params["fc2_b"], jnp.float32).reshape(1, 10),
    }


# ---------------------------------- forward -----------------------------------
def cnn_forward(x_nchw, p):
    N = x_nchw.shape[0]
    x4 = x_nchw.reshape(N, 28, 28, 1)          # NCHW with C=1 -> NHWC, free

    feats = pl.pallas_call(
        _fused_conv_kernel,
        out_shape=jax.ShapeDtypeStruct((N, 7, 7, 64), jnp.float32),
        grid=(N,),
        in_specs=[
            pl.BlockSpec((1, 28, 28, 1), lambda b: (b, 0, 0, 0)),
            pl.BlockSpec((9, 32), lambda b: (0, 0)),
            pl.BlockSpec((1, 32), lambda b: (0, 0)),
            pl.BlockSpec((9 * 128, 64), lambda b: (0, 0)),
            pl.BlockSpec((1, 64), lambda b: (0, 0)),
        ],
        out_specs=pl.BlockSpec((1, 7, 7, 64), lambda b: (b, 0, 0, 0)),
        scratch_shapes=[
            pltpu.VMEM((30, 30, 1), jnp.float32),     # zero-padded input
            pltpu.VMEM((14, 28, 32), jnp.float32),    # conv1 h-pooled rows
            pltpu.VMEM((16, 16, 128), jnp.float32),   # pooled + padded conv2 in
            pltpu.VMEM((14, 9 * 128), jnp.bfloat16),  # per-row im2col slab
            pltpu.VMEM((7, 14, 64), jnp.float32),     # conv2 h-pooled rows
        ],
        compiler_params=pltpu.CompilerParams(
            dimension_semantics=("parallel",),        # megacore-shard the batch
            vmem_limit_bytes=32 * 1024 * 1024),
    )(x4, p["w1"], p["b1"], p["w2"], p["b2"])

    flat = feats.reshape(N, 7 * 7 * 64)        # trailing-dim merge: free

    return pl.pallas_call(
        _mlp_kernel,
        out_shape=jax.ShapeDtypeStruct((N, 10), jnp.float32),
        grid=(1,),
        in_specs=[
            pl.BlockSpec((N, 7 * 7 * 64), lambda i: (0, 0)),
            pl.BlockSpec((7 * 7 * 64, 128), lambda i: (0, 0)),
            pl.BlockSpec((1, 128), lambda i: (0, 0)),
            pl.BlockSpec((128, 10), lambda i: (0, 0)),
            pl.BlockSpec((1, 10), lambda i: (0, 0)),
        ],
        out_specs=pl.BlockSpec((N, 10), lambda i: (0, 0)),
        compiler_params=pltpu.CompilerParams(
            dimension_semantics=("arbitrary",)),
    )(flat, p["fc1_w"], p["fc1_b"], p["fc2_w"], p["fc2_b"])


# ----------------------- pure-JAX reference (for checking) ---------------------
def cnn_reference(x_nchw, params):
    def conv(x, w, b):
        y = lax.conv_general_dilated(x, w, (1, 1), ((1, 1), (1, 1)),
                                     dimension_numbers=("NCHW", "OIHW", "NCHW"))
        return y + b[None, :, None, None]

    def pool(x):
        return lax.reduce_window(x, -jnp.inf, lax.max,
                                 (1, 1, 2, 2), (1, 1, 2, 2), "VALID")

    x = pool(jax.nn.relu(conv(x_nchw, params["conv1_w"], params["conv1_b"])))
    x = pool(jax.nn.relu(conv(x, params["conv2_w"], params["conv2_b"])))
    x = x.reshape(x.shape[0], -1)
    x = jax.nn.relu(x @ params["fc1_w"].T + params["fc1_b"])
    return x @ params["fc2_w"].T + params["fc2_b"]


if __name__ == "__main__":
    key = jax.random.PRNGKey(0)
    kx, k1, k2, k3, k4, k5, k6, k7, k8 = jax.random.split(key, 9)

    N = 2
    # fc1 expects 64*7*7 inputs, which pins the spatial size to 28x28.
    x = jax.random.normal(kx, (N, 1, 28, 28), dtype=jnp.float32)

    params = {
        "conv1_w": 0.10 * jax.random.normal(k1, (32, 1, 3, 3), jnp.float32),
        "conv1_b": 0.10 * jax.random.normal(k2, (32,), jnp.float32),
        "conv2_w": 0.05 * jax.random.normal(k3, (64, 32, 3, 3), jnp.float32),
        "conv2_b": 0.05 * jax.random.normal(k4, (64,), jnp.float32),
        "fc1_w": 0.02 * jax.random.normal(k5, (128, 64 * 7 * 7), jnp.float32),
        "fc1_b": 0.02 * jax.random.normal(k6, (128,), jnp.float32),
        "fc2_w": 0.05 * jax.random.normal(k7, (10, 128), jnp.float32),
        "fc2_b": 0.05 * jax.random.normal(k8, (10,), jnp.float32),
    }

    prep = prepare_params(params)          # one-time weight re-layout, not jitted
    out = jax.block_until_ready(jax.jit(cnn_forward)(x, prep))
    assert out.shape == (N, 10)

    ref = jax.block_until_ready(jax.jit(cnn_reference)(x, params))
    np.testing.assert_allclose(np.asarray(out), np.asarray(ref),
                               rtol=3e-2, atol=3e-2)
    print("KERNEL_OK")
</pallas_src>

<mosaic_0001>
module attributes {stable_mosaic.version = 11 : i64} {
  func.func @_fused_conv_kernel(%arg0: i32, %arg1: memref<1x28x28x1xf32, #tpu.memory_space<vmem>>, %arg2: memref<9x32xf32, #tpu.memory_space<vmem>>, %arg3: memref<1x32xf32, #tpu.memory_space<vmem>>, %arg4: memref<1152x64xbf16, #tpu.memory_space<vmem>>, %arg5: memref<1x64xf32, #tpu.memory_space<vmem>>, %arg6: memref<1x7x7x64xf32, #tpu.memory_space<vmem>>, %arg7: memref<30x30x1xf32, #tpu.memory_space<vmem>>, %arg8: memref<14x28x32xf32, #tpu.memory_space<vmem>>, %arg9: memref<16x16x128xf32, #tpu.memory_space<vmem>>, %arg10: memref<14x1152xbf16, #tpu.memory_space<vmem>>, %arg11: memref<7x14x64xf32, #tpu.memory_space<vmem>>) attributes {dimension_semantics = [#tpu.dimension_semantics<parallel>], iteration_bounds = array<i64: 2>, scalar_prefetch = 0 : i64, scratch_operands = 5 : i64, tpu.core_type = #tpu.core_type<tc>, window_params = [{transform_indices = @transform_0, window_bounds = array<i64: 1, 28, 28, 1>}, {pipeline_mode = #tpu.pipeline_mode<synchronous>, transform_indices = @transform_1, window_bounds = array<i64: 9, 32>}, {pipeline_mode = #tpu.pipeline_mode<synchronous>, transform_indices = @transform_2, window_bounds = array<i64: 1, 32>}, {pipeline_mode = #tpu.pipeline_mode<synchronous>, transform_indices = @transform_3, window_bounds = array<i64: 1152, 64>}, {pipeline_mode = #tpu.pipeline_mode<synchronous>, transform_indices = @transform_4, window_bounds = array<i64: 1, 64>}, {transform_indices = @transform_5, window_bounds = array<i64: 1, 7, 7, 64>}]} {
    %cst = arith.constant 0.000000e+00 : f32
    %0 = vector.broadcast %cst : f32 to vector<30x30x1xf32>
    %c0 = arith.constant 0 : index
    %c0_0 = arith.constant 0 : index
    %c0_1 = arith.constant 0 : index
    %1 = vector.load %arg7[%c0, %c0_0, %c0_1] : memref<30x30x1xf32, #tpu.memory_space<vmem>>, vector<30x30x1xf32>
    tpu.vector_store %arg7[%c0, %c0_0, %c0_1], %0 {strides = array<i32>} : memref<30x30x1xf32, #tpu.memory_space<vmem>>, vector<30x30x1xf32>,
    %c0_2 = arith.constant 0 : index
    %c0_3 = arith.constant 0 : index
    %c0_4 = arith.constant 0 : index
    %c0_5 = arith.constant 0 : index
    %2 = vector.load %arg1[%c0_2, %c0_3, %c0_4, %c0_5] : memref<1x28x28x1xf32, #tpu.memory_space<vmem>>, vector<1x28x28x1xf32>
    %3 = vector.shape_cast %2 : vector<1x28x28x1xf32> to vector<28x28x1xf32>
    %c1 = arith.constant 1 : index
    %c1_6 = arith.constant 1 : index
    %c0_7 = arith.constant 0 : index
    %4 = vector.load %arg7[%c1, %c1_6, %c0_7] : memref<30x30x1xf32, #tpu.memory_space<vmem>>, vector<28x28x1xf32>
    tpu.vector_store %arg7[%c1, %c1_6, %c0_7], %3 {strides = array<i32>} : memref<30x30x1xf32, #tpu.memory_space<vmem>>, vector<28x28x1xf32>,
    %c0_8 = arith.constant 0 : index
    %c0_9 = arith.constant 0 : index
    %5 = vector.load %arg2[%c0_8, %c0_9] : memref<9x32xf32, #tpu.memory_space<vmem>>, vector<9x32xf32>
    %c0_10 = arith.constant 0 : index
    %c0_11 = arith.constant 0 : index
    %6 = vector.load %arg3[%c0_10, %c0_11] : memref<1x32xf32, #tpu.memory_space<vmem>>, vector<1x32xf32>
    %c0_i32 = arith.constant 0 : i32
    %c14_i32 = arith.constant 14 : i32
    %7 = arith.addi %c0_i32, %c14_i32 : i32
    %c1_i32 = arith.constant 1 : i32
    scf.for %arg12 = %c0_i32 to %7 step %c1_i32  : i32 {
      %c1_i32_41 = arith.constant 1 : i32
      %22 = arith.muli %arg12, %c1_i32_41 : i32
      %c0_i32_42 = arith.constant 0 : i32
      %23 = arith.addi %c0_i32_42, %22 : i32
      %cst_43 = arith.constant 0.000000e+00 : f32
      %24 = vector.broadcast %cst_43 : f32 to vector<28x32xf32>
      %c2_i32 = arith.constant 2 : i32
      %25 = arith.muli %c2_i32, %23 : i32
      %c0_i32_44 = arith.constant 0 : i32
      %26 = arith.addi %25, %c0_i32_44 : i32
      %c0_i32_45 = arith.constant 0 : i32
      %27 = arith.addi %26, %c0_i32_45 : i32
      %28 = arith.index_cast %27 : i32 to index
      %c0_46 = arith.constant 0 : index
      %c0_47 = arith.constant 0 : index
      %29 = vector.load %arg7[%28, %c0_46, %c0_47] : memref<30x30x1xf32, #tpu.memory_space<vmem>>, vector<1x28x1xf32>
      %30 = vector.shape_cast %29 : vector<1x28x1xf32> to vector<28x1xf32>
      %31 = vector.extract_strided_slice %5 {offsets = [0, 0], sizes = [1, 32], strides = [1, 1]} : vector<9x32xf32> to vector<1x32xf32>
      %32 = vector.broadcast %30 : vector<28x1xf32> to vector<28x32xf32>
      %33 = vector.broadcast %31 : vector<1x32xf32> to vector<28x32xf32>
      %34 = arith.mulf %32, %33 : vector<28x32xf32>
      %35 = arith.addf %24, %34 : vector<28x32xf32>
      %36 = arith.index_cast %27 : i32 to index
      %c1_48 = arith.constant 1 : index
      %c0_49 = arith.constant 0 : index
      %37 = vector.load %arg7[%36, %c1_48, %c0_49] : memref<30x30x1xf32, #tpu.memory_space<vmem>>, vector<1x28x1xf32>
      %38 = vector.shape_cast %37 : vector<1x28x1xf32> to vector<28x1xf32>
      %39 = vector.extract_strided_slice %5 {offsets = [1, 0], sizes = [1, 32], strides = [1, 1]} : vector<9x32xf32> to vector<1x32xf32>
      %40 = vector.broadcast %38 : vector<28x1xf32> to vector<28x32xf32>
      %41 = vector.broadcast %39 : vector<1x32xf32> to vector<28x32xf32>
      %42 = arith.mulf %40, %41 : vector<28x32xf32>
      %43 = arith.addf %35, %42 : vector<28x32xf32>
      %44 = arith.index_cast %27 : i32 to index
      %c2 = arith.constant 2 : index
      %c0_50 = arith.constant 0 : index
      %45 = vector.load %arg7[%44, %c2, %c0_50] : memref<30x30x1xf32, #tpu.memory_space<vmem>>, vector<1x28x1xf32>
      %46 = vector.shape_cast %45 : vector<1x28x1xf32> to vector<28x1xf32>
      %47 = vector.extract_strided_slice %5 {offsets = [2, 0], sizes = [1, 32], strides = [1, 1]} : vector<9x32xf32> to vector<1x32xf32>
      %48 = vector.broadcast %46 : vector<28x1xf32> to vector<28x32xf32>
      %49 = vector.broadcast %47 : vector<1x32xf32> to vector<28x32xf32>
      %50 = arith.mulf %48, %49 : vector<28x32xf32>
      %51 = arith.addf %43, %50 : vector<28x32xf32>
      %c2_i32_51 = arith.constant 2 : i32
      %52 = arith.muli %c2_i32_51, %23 : i32
      %c0_i32_52 = arith.constant 0 : i32
      %53 = arith.addi %52, %c0_i32_52 : i32
      %c1_i32_53 = arith.constant 1 : i32
      %54 = arith.addi %53, %c1_i32_53 : i32
      %55 = arith.index_cast %54 : i32 to index
      %c0_54 = arith.constant 0 : index
      %c0_55 = arith.constant 0 : index
      %56 = vector.load %arg7[%55, %c0_54, %c0_55] : memref<30x30x1xf32, #tpu.memory_space<vmem>>, vector<1x28x1xf32>
      %57 = vector.shape_cast %56 : vector<1x28x1xf32> to vector<28x1xf32>
      %58 = vector.extract_strided_slice %5 {offsets = [3, 0], sizes = [1, 32], strides = [1, 1]} : vector<9x32xf32> to vector<1x32xf32>
      %59 = vector.broadcast %57 : vector<28x1xf32> to vector<28x32xf32>
      %60 = vector.broadcast %58 : vector<1x32xf32> to vector<28x32xf32>
      %61 = arith.mulf %59, %60 : vector<28x32xf32>
      %62 = arith.addf %51, %61 : vector<28x32xf32>
      %63 = arith.index_cast %54 : i32 to index
      %c1_56 = arith.constant 1 : index
      %c0_57 = arith.constant 0 : index
      %64 = vector.load %arg7[%63, %c1_56, %c0_57] : memref<30x30x1xf32, #tpu.memory_space<vmem>>, vector<1x28x1xf32>
      %65 = vector.shape_cast %64 : vector<1x28x1xf32> to vector<28x1xf32>
      %66 = vector.extract_strided_slice %5 {offsets = [4, 0], sizes = [1, 32], strides = [1, 1]} : vector<9x32xf32> to vector<1x32xf32>
      %67 = vector.broadcast %65 : vector<28x1xf32> to vector<28x32xf32>
      %68 = vector.broadcast %66 : vector<1x32xf32> to vector<28x32xf32>
      %69 = arith.mulf %67, %68 : vector<28x32xf32>
      %70 = arith.addf %62, %69 : vector<28x32xf32>
      %71 = arith.index_cast %54 : i32 to index
      %c2_58 = arith.constant 2 : index
      %c0_59 = arith.constant 0 : index
      %72 = vector.load %arg7[%71, %c2_58, %c0_59] : memref<30x30x1xf32, #tpu.memory_space<vmem>>, vector<1x28x1xf32>
      %73 = vector.shape_cast %72 : vector<1x28x1xf32> to vector<28x1xf32>
      %74 = vector.extract_strided_slice %5 {offsets = [5, 0], sizes = [1, 32], strides = [1, 1]} : vector<9x32xf32> to vector<1x32xf32>
      %75 = vector.broadcast %73 : vector<28x1xf32> to vector<28x32xf32>
      %76 = vector.broadcast %74 : vector<1x32xf32> to vector<28x32xf32>
      %77 = arith.mulf %75, %76 : vector<28x32xf32>
      %78 = arith.addf %70, %77 : vector<28x32xf32>
      %c2_i32_60 = arith.constant 2 : i32
      %79 = arith.muli %c2_i32_60, %23 : i32
      %c0_i32_61 = arith.constant 0 : i32
      %80 = arith.addi %79, %c0_i32_61 : i32
      %c2_i32_62 = arith.constant 2 : i32
      %81 = arith.addi %80, %c2_i32_62 : i32
      %82 = arith.index_cast %81 : i32 to index
      %c0_63 = arith.constant 0 : index
      %c0_64 = arith.constant 0 : index
      %83 = vector.load %arg7[%82, %c0_63, %c0_64] : memref<30x30x1xf32, #tpu.memory_space<vmem>>, vector<1x28x1xf32>
      %84 = vector.shape_cast %83 : vector<1x28x1xf32> to vector<28x1xf32>
      %85 = vector.extract_strided_slice %5 {offsets = [6, 0], sizes = [1, 32], strides = [1, 1]} : vector<9x32xf32> to vector<1x32xf32>
      %86 = vector.broadcast %84 : vector<28x1xf32> to vector<28x32xf32>
      %87 = vector.broadcast %85 : vector<1x32xf32> to vector<28x32xf32>
      %88 = arith.mulf %86, %87 : vector<28x32xf32>
      %89 = arith.addf %78, %88 : vector<28x32xf32>
      %90 = arith.index_cast %81 : i32 to index
      %c1_65 = arith.constant 1 : index
      %c0_66 = arith.constant 0 : index
      %91 = vector.load %arg7[%90, %c1_65, %c0_66] : memref<30x30x1xf32, #tpu.memory_space<vmem>>, vector<1x28x1xf32>
      %92 = vector.shape_cast %91 : vector<1x28x1xf32> to vector<28x1xf32>
      %93 = vector.extract_strided_slice %5 {offsets = [7, 0], sizes = [1, 32], strides = [1, 1]} : vector<9x32xf32> to vector<1x32xf32>
      %94 = vector.broadcast %92 : vector<28x1xf32> to vector<28x32xf32>
      %95 = vector.broadcast %93 : vector<1x32xf32> to vector<28x32xf32>
      %96 = arith.mulf %94, %95 : vector<28x32xf32>
      %97 = arith.addf %89, %96 : vector<28x32xf32>
      %98 = arith.index_cast %81 : i32 to index
      %c2_67 = arith.constant 2 : index
      %c0_68 = arith.constant 0 : index
      %99 = vector.load %arg7[%98, %c2_67, %c0_68] : memref<30x30x1xf32, #tpu.memory_space<vmem>>, vector<1x28x1xf32>
      %100 = vector.shape_cast %99 : vector<1x28x1xf32> to vector<28x1xf32>
      %101 = vector.extract_strided_slice %5 {offsets = [8, 0], sizes = [1, 32], strides = [1, 1]} : vector<9x32xf32> to vector<1x32xf32>
      %102 = vector.broadcast %100 : vector<28x1xf32> to vector<28x32xf32>
      %103 = vector.broadcast %101 : vector<1x32xf32> to vector<28x32xf32>
      %104 = arith.mulf %102, %103 : vector<28x32xf32>
      %105 = arith.addf %97, %104 : vector<28x32xf32>
      %cst_69 = arith.constant 0.000000e+00 : f32
      %106 = vector.broadcast %cst_69 : f32 to vector<28x32xf32>
      %c2_i32_70 = arith.constant 2 : i32
      %107 = arith.muli %c2_i32_70, %23 : i32
      %c1_i32_71 = arith.constant 1 : i32
      %108 = arith.addi %107, %c1_i32_71 : i32
      %c0_i32_72 = arith.constant 0 : i32
      %109 = arith.addi %108, %c0_i32_72 : i32
      %110 = arith.index_cast %109 : i32 to index
      %c0_73 = arith.constant 0 : index
      %c0_74 = arith.constant 0 : index
      %111 = vector.load %arg7[%110, %c0_73, %c0_74] : memref<30x30x1xf32, #tpu.memory_space<vmem>>, vector<1x28x1xf32>
      %112 = vector.shape_cast %111 : vector<1x28x1xf32> to vector<28x1xf32>
      %113 = vector.extract_strided_slice %5 {offsets = [0, 0], sizes = [1, 32], strides = [1, 1]} : vector<9x32xf32> to vector<1x32xf32>
      %114 = vector.broadcast %112 : vector<28x1xf32> to vector<28x32xf32>
      %115 = vector.broadcast %113 : vector<1x32xf32> to vector<28x32xf32>
      %116 = arith.mulf %114, %115 : vector<28x32xf32>
      %117 = arith.addf %106, %116 : vector<28x32xf32>
      %118 = arith.index_cast %109 : i32 to index
      %c1_75 = arith.constant 1 : index
      %c0_76 = arith.constant 0 : index
      %119 = vector.load %arg7[%118, %c1_75, %c0_76] : memref<30x30x1xf32, #tpu.memory_space<vmem>>, vector<1x28x1xf32>
      %120 = vector.shape_cast %119 : vector<1x28x1xf32> to vector<28x1xf32>
      %121 = vector.extract_strided_slice %5 {offsets = [1, 0], sizes = [1, 32], strides = [1, 1]} : vector<9x32xf32> to vector<1x32xf32>
      %122 = vector.broadcast %120 : vector<28x1xf32> to vector<28x32xf32>
      %123 = vector.broadcast %121 : vector<1x32xf32> to vector<28x32xf32>
      %124 = arith.mulf %122, %123 : vector<28x32xf32>
      %125 = arith.addf %117, %124 : vector<28x32xf32>
      %126 = arith.index_cast %109 : i32 to index
      %c2_77 = arith.constant 2 : index
      %c0_78 = arith.constant 0 : index
      %127 = vector.load %arg7[%126, %c2_77, %c0_78] : memref<30x30x1xf32, #tpu.memory_space<vmem>>, vector<1x28x1xf32>
      %128 = vector.shape_cast %127 : vector<1x28x1xf32> to vector<28x1xf32>
      %129 = vector.extract_strided_slice %5 {offsets = [2, 0], sizes = [1, 32], strides = [1, 1]} : vector<9x32xf32> to vector<1x32xf32>
      %130 = vector.broadcast %128 : vector<28x1xf32> to vector<28x32xf32>
      %131 = vector.broadcast %129 : vector<1x32xf32> to vector<28x32xf32>
      %132 = arith.mulf %130, %131 : vector<28x32xf32>
      %133 = arith.addf %125, %132 : vector<28x32xf32>
      %c2_i32_79 = arith.constant 2 : i32
      %134 = arith.muli %c2_i32_79, %23 : i32
      %c1_i32_80 = arith.constant 1 : i32
      %135 = arith.addi %134, %c1_i32_80 : i32
      %c1_i32_81 = arith.constant 1 : i32
      %136 = arith.addi %135, %c1_i32_81 : i32
      %137 = arith.index_cast %136 : i32 to index
      %c0_82 = arith.constant 0 : index
      %c0_83 = arith.constant 0 : index
      %138 = vector.load %arg7[%137, %c0_82, %c0_83] : memref<30x30x1xf32, #tpu.memory_space<vmem>>, vector<1x28x1xf32>
      %139 = vector.shape_cast %138 : vector<1x28x1xf32> to vector<28x1xf32>
      %140 = vector.extract_strided_slice %5 {offsets = [3, 0], sizes = [1, 32], strides = [1, 1]} : vector<9x32xf32> to vector<1x32xf32>
      %141 = vector.broadcast %139 : vector<28x1xf32> to vector<28x32xf32>
      %142 = vector.broadcast %140 : vector<1x32xf32> to vector<28x32xf32>
      %143 = arith.mulf %141, %142 : vector<28x32xf32>
      %144 = arith.addf %133, %143 : vector<28x32xf32>
      %145 = arith.index_cast %136 : i32 to index
      %c1_84 = arith.constant 1 : index
      %c0_85 = arith.constant 0 : index
      %146 = vector.load %arg7[%145, %c1_84, %c0_85] : memref<30x30x1xf32, #tpu.memory_space<vmem>>, vector<1x28x1xf32>
      %147 = vector.shape_cast %146 : vector<1x28x1xf32> to vector<28x1xf32>
      %148 = vector.extract_strided_slice %5 {offsets = [4, 0], sizes = [1, 32], strides = [1, 1]} : vector<9x32xf32> to vector<1x32xf32>
      %149 = vector.broadcast %147 : vector<28x1xf32> to vector<28x32xf32>
      %150 = vector.broadcast %148 : vector<1x32xf32> to vector<28x32xf32>
      %151 = arith.mulf %149, %150 : vector<28x32xf32>
      %152 = arith.addf %144, %151 : vector<28x32xf32>
      %153 = arith.index_cast %136 : i32 to index
      %c2_86 = arith.constant 2 : index
      %c0_87 = arith.constant 0 : index
      %154 = vector.load %arg7[%153, %c2_86, %c0_87] : memref<30x30x1xf32, #tpu.memory_space<vmem>>, vector<1x28x1xf32>
      %155 = vector.shape_cast %154 : vector<1x28x1xf32> to vector<28x1xf32>
      %156 = vector.extract_strided_slice %5 {offsets = [5, 0], sizes = [1, 32], strides = [1, 1]} : vector<9x32xf32> to vector<1x32xf32>
      %157 = vector.broadcast %155 : vector<28x1xf32> to vector<28x32xf32>
      %158 = vector.broadcast %156 : vector<1x32xf32> to vector<28x32xf32>
      %159 = arith.mulf %157, %158 : vector<28x32xf32>
      %160 = arith.addf %152, %159 : vector<28x32xf32>
      %c2_i32_88 = arith.constant 2 : i32
      %161 = arith.muli %c2_i32_88, %23 : i32
      %c1_i32_89 = arith.constant 1 : i32
      %162 = arith.addi %161, %c1_i32_89 : i32
      %c2_i32_90 = arith.constant 2 : i32
      %163 = arith.addi %162, %c2_i32_90 : i32
      %164 = arith.index_cast %163 : i32 to index
      %c0_91 = arith.constant 0 : index
      %c0_92 = arith.constant 0 : index
      %165 = vector.load %arg7[%164, %c0_91, %c0_92] : memref<30x30x1xf32, #tpu.memory_space<vmem>>, vector<1x28x1xf32>
      %166 = vector.shape_cast %165 : vector<1x28x1xf32> to vector<28x1xf32>
      %167 = vector.extract_strided_slice %5 {offsets = [6, 0], sizes = [1, 32], strides = [1, 1]} : vector<9x32xf32> to vector<1x32xf32>
      %168 = vector.broadcast %166 : vector<28x1xf32> to vector<28x32xf32>
      %169 = vector.broadcast %167 : vector<1x32xf32> to vector<28x32xf32>
      %170 = arith.mulf %168, %169 : vector<28x32xf32>
      %171 = arith.addf %160, %170 : vector<28x32xf32>
      %172 = arith.index_cast %163 : i32 to index
      %c1_93 = arith.constant 1 : index
      %c0_94 = arith.constant 0 : index
      %173 = vector.load %arg7[%172, %c1_93, %c0_94] : memref<30x30x1xf32, #tpu.memory_space<vmem>>, vector<1x28x1xf32>
      %174 = vector.shape_cast %173 : vector<1x28x1xf32> to vector<28x1xf32>
      %175 = vector.extract_strided_slice %5 {offsets = [7, 0], sizes = [1, 32], strides = [1, 1]} : vector<9x32xf32> to vector<1x32xf32>
      %176 = vector.broadcast %174 : vector<28x1xf32> to vector<28x32xf32>
      %177 = vector.broadcast %175 : vector<1x32xf32> to vector<28x32xf32>
      %178 = arith.mulf %176, %177 : vector<28x32xf32>
      %179 = arith.addf %171, %178 : vector<28x32xf32>
      %180 = arith.index_cast %163 : i32 to index
      %c2_95 = arith.constant 2 : index
      %c0_96 = arith.constant 0 : index
      %181 = vector.load %arg7[%180, %c2_95, %c0_96] : memref<30x30x1xf32, #tpu.memory_space<vmem>>, vector<1x28x1xf32>
      %182 = vector.shape_cast %181 : vector<1x28x1xf32> to vector<28x1xf32>
      %183 = vector.extract_strided_slice %5 {offsets = [8, 0], sizes = [1, 32], strides = [1, 1]} : vector<9x32xf32> to vector<1x32xf32>
      %184 = vector.broadcast %182 : vector<28x1xf32> to vector<28x32xf32>
      %185 = vector.broadcast %183 : vector<1x32xf32> to vector<28x32xf32>
      %186 = arith.mulf %184, %185 : vector<28x32xf32>
      %187 = arith.addf %179, %186 : vector<28x32xf32>
      %188 = arith.maximumf %105, %187 : vector<28x32xf32>
      %189 = vector.broadcast %6 : vector<1x32xf32> to vector<28x32xf32>
      %190 = arith.addf %188, %189 : vector<28x32xf32>
      %cst_97 = arith.constant 0.000000e+00 : f32
      %191 = vector.broadcast %cst_97 : f32 to vector<28x32xf32>
      %192 = arith.maximumf %190, %191 : vector<28x32xf32>
      %193 = arith.index_cast %23 : i32 to index
      %c0_98 = arith.constant 0 : index
      %c0_99 = arith.constant 0 : index
      %194 = vector.load %arg8[%193, %c0_98, %c0_99] : memref<14x28x32xf32, #tpu.memory_space<vmem>>, vector<1x28x32xf32>
      %195 = vector.shape_cast %194 : vector<1x28x32xf32> to vector<28x32xf32>
      %196 = vector.shape_cast %192 : vector<28x32xf32> to vector<1x28x32xf32>
      tpu.vector_store %arg8[%193, %c0_98, %c0_99], %196 {strides = array<i32>} : memref<14x28x32xf32, #tpu.memory_space<vmem>>, vector<1x28x32xf32>,
    }
    %c14_i32_12 = arith.constant 14 : i32
    %cst_13 = arith.constant 0.000000e+00 : f32
    %8 = vector.broadcast %cst_13 : f32 to vector<16x16x128xf32>
    %c0_14 = arith.constant 0 : index
    %c0_15 = arith.constant 0 : index
    %c0_16 = arith.constant 0 : index
    %9 = vector.load %arg9[%c0_14, %c0_15, %c0_16] : memref<16x16x128xf32, #tpu.memory_space<vmem>>, vector<16x16x128xf32>
    tpu.vector_store %arg9[%c0_14, %c0_15, %c0_16], %8 {strides = array<i32>} : memref<16x16x128xf32, #tpu.memory_space<vmem>>, vector<16x16x128xf32>,
    %c0_17 = arith.constant 0 : index
    %c0_18 = arith.constant 0 : index
    %c0_19 = arith.constant 0 : index
    %10 = tpu.strided_load %arg8[%c0_17, %c0_18, %c0_19] {strides = array<i32: 1, 2, 1>} : memref<14x28x32xf32, #tpu.memory_space<vmem>>, vector<14x14x32xf32>
    %c0_20 = arith.constant 0 : index
    %c1_21 = arith.constant 1 : index
    %c0_22 = arith.constant 0 : index
    %11 = tpu.strided_load %arg8[%c0_20, %c1_21, %c0_22] {strides = array<i32: 1, 2, 1>} : memref<14x28x32xf32, #tpu.memory_space<vmem>>, vector<14x14x32xf32>
    %12 = arith.maximumf %10, %11 : vector<14x14x32xf32>
    %c1_23 = arith.constant 1 : index
    %c1_24 = arith.constant 1 : index
    %c0_25 = arith.constant 0 : index
    %13 = vector.load %arg9[%c1_23, %c1_24, %c0_25] : memref<16x16x128xf32, #tpu.memory_space<vmem>>, vector<14x14x32xf32>
    tpu.vector_store %arg9[%c1_23, %c1_24, %c0_25], %12 {strides = array<i32>} : memref<16x16x128xf32, #tpu.memory_space<vmem>>, vector<14x14x32xf32>,
    %c0_26 = arith.constant 0 : index
    %c0_27 = arith.constant 0 : index
    %14 = vector.load %arg5[%c0_26, %c0_27] : memref<1x64xf32, #tpu.memory_space<vmem>>, vector<1x64xf32>
    %c0_i32_28 = arith.constant 0 : i32
    %c7_i32 = arith.constant 7 : i32
    %15 = arith.addi %c0_i32_28, %c7_i32 : i32
    %c1_i32_29 = arith.constant 1 : i32
    scf.for %arg12 = %c0_i32_28 to %15 step %c1_i32_29  : i32 {
      %c1_i32_41 = arith.constant 1 : i32
      %22 = arith.muli %arg12, %c1_i32_41 : i32
      %c0_i32_42 = arith.constant 0 : i32
      %23 = arith.addi %c0_i32_42, %22 : i32
      %c2_i32 = arith.constant 2 : i32
      %24 = arith.muli %c2_i32, %23 : i32
      %c0_i32_43 = arith.constant 0 : i32
      %25 = arith.addi %24, %c0_i32_43 : i32
      %c0_i32_44 = arith.constant 0 : i32
      %26 = arith.addi %25, %c0_i32_44 : i32
      %27 = arith.index_cast %26 : i32 to index
      %c0_45 = arith.constant 0 : index
      %c0_46 = arith.constant 0 : index
      %28 = vector.load %arg9[%27, %c0_45, %c0_46] : memref<16x16x128xf32, #tpu.memory_space<vmem>>, vector<1x14x128xf32>
      %29 = vector.shape_cast %28 : vector<1x14x128xf32> to vector<14x128xf32>
      %30 = arith.truncf %29 : vector<14x128xf32> to vector<14x128xbf16>
      %c0_47 = arith.constant 0 : index
      %c0_48 = arith.constant 0 : index
      %31 = vector.load %arg10[%c0_47, %c0_48] : memref<14x1152xbf16, #tpu.memory_space<vmem>>, vector<14x128xbf16>
      tpu.vector_store %arg10[%c0_47, %c0_48], %30 {strides = array<i32>} : memref<14x1152xbf16, #tpu.memory_space<vmem>>, vector<14x128xbf16>,
      %c0_i32_49 = arith.constant 0 : i32
      %32 = arith.addi %25, %c0_i32_49 : i32
      %33 = arith.index_cast %32 : i32 to index
      %c1_50 = arith.constant 1 : index
      %c0_51 = arith.constant 0 : index
      %34 = vector.load %arg9[%33, %c1_50, %c0_51] : memref<16x16x128xf32, #tpu.memory_space<vmem>>, vector<1x14x128xf32>
      %35 = vector.shape_cast %34 : vector<1x14x128xf32> to vector<14x128xf32>
      %36 = arith.truncf %35 : vector<14x128xf32> to vector<14x128xbf16>
      %c0_52 = arith.constant 0 : index
      %c128 = arith.constant 128 : index
      %37 = vector.load %arg10[%c0_52, %c128] : memref<14x1152xbf16, #tpu.memory_space<vmem>>, vector<14x128xbf16>
      tpu.vector_store %arg10[%c0_52, %c128], %36 {strides = array<i32>} : memref<14x1152xbf16, #tpu.memory_space<vmem>>, vector<14x128xbf16>,
      %c0_i32_53 = arith.constant 0 : i32
      %38 = arith.addi %25, %c0_i32_53 : i32
      %39 = arith.index_cast %38 : i32 to index
      %c2 = arith.constant 2 : index
      %c0_54 = arith.constant 0 : index
      %40 = vector.load %arg9[%39, %c2, %c0_54] : memref<16x16x128xf32, #tpu.memory_space<vmem>>, vector<1x14x128xf32>
      %41 = vector.shape_cast %40 : vector<1x14x128xf32> to vector<14x128xf32>
      %42 = arith.truncf %41 : vector<14x128xf32> to vector<14x128xbf16>
      %c0_55 = arith.constant 0 : index
      %c256 = arith.constant 256 : index
      %43 = vector.load %arg10[%c0_55, %c256] : memref<14x1152xbf16, #tpu.memory_space<vmem>>, vector<14x128xbf16>
      tpu.vector_store %arg10[%c0_55, %c256], %42 {strides = array<i32>} : memref<14x1152xbf16, #tpu.memory_space<vmem>>, vector<14x128xbf16>,
      %c1_i32_56 = arith.constant 1 : i32
      %44 = arith.addi %25, %c1_i32_56 : i32
      %45 = arith.index_cast %44 : i32 to index
      %c0_57 = arith.constant 0 : index
      %c0_58 = arith.constant 0 : index
      %46 = vector.load %arg9[%45, %c0_57, %c0_58] : memref<16x16x128xf32, #tpu.memory_space<vmem>>, vector<1x14x128xf32>
      %47 = vector.shape_cast %46 : vector<1x14x128xf32> to vector<14x128xf32>
      %48 = arith.truncf %47 : vector<14x128xf32> to vector<14x128xbf16>
      %c0_59 = arith.constant 0 : index
      %c384 = arith.constant 384 : index
      %49 = vector.load %arg10[%c0_59, %c384] : memref<14x1152xbf16, #tpu.memory_space<vmem>>, vector<14x128xbf16>
      tpu.vector_store %arg10[%c0_59, %c384], %48 {strides = array<i32>} : memref<14x1152xbf16, #tpu.memory_space<vmem>>, vector<14x128xbf16>,
      %c1_i32_60 = arith.constant 1 : i32
      %50 = arith.addi %25, %c1_i32_60 : i32
      %51 = arith.index_cast %50 : i32 to index
      %c1_61 = arith.constant 1 : index
      %c0_62 = arith.constant 0 : index
      %52 = vector.load %arg9[%51, %c1_61, %c0_62] : memref<16x16x128xf32, #tpu.memory_space<vmem>>, vector<1x14x128xf32>
      %53 = vector.shape_cast %52 : vector<1x14x128xf32> to vector<14x128xf32>
      %54 = arith.truncf %53 : vector<14x128xf32> to vector<14x128xbf16>
      %c0_63 = arith.constant 0 : index
      %c512 = arith.constant 512 : index
      %55 = vector.load %arg10[%c0_63, %c512] : memref<14x1152xbf16, #tpu.memory_space<vmem>>, vector<14x128xbf16>
      tpu.vector_store %arg10[%c0_63, %c512], %54 {strides = array<i32>} : memref<14x1152xbf16, #tpu.memory_space<vmem>>, vector<14x128xbf16>,
      %c1_i32_64 = arith.constant 1 : i32
      %56 = arith.addi %25, %c1_i32_64 : i32
      %57 = arith.index_cast %56 : i32 to index
      %c2_65 = arith.constant 2 : index
      %c0_66 = arith.constant 0 : index
      %58 = vector.load %arg9[%57, %c2_65, %c0_66] : memref<16x16x128xf32, #tpu.memory_space<vmem>>, vector<1x14x128xf32>
      %59 = vector.shape_cast %58 : vector<1x14x128xf32> to vector<14x128xf32>
      %60 = arith.truncf %59 : vector<14x128xf32> to vector<14x128xbf16>
      %c0_67 = arith.constant 0 : index
      %c640 = arith.constant 640 : index
      %61 = vector.load %arg10[%c0_67, %c640] : memref<14x1152xbf16, #tpu.memory_space<vmem>>, vector<14x128xbf16>
      tpu.vector_store %arg10[%c0_67, %c640], %60 {strides = array<i32>} : memref<14x1152xbf16, #tpu.memory_space<vmem>>, vector<14x128xbf16>,
      %c2_i32_68 = arith.constant 2 : i32
      %62 = arith.addi %25, %c2_i32_68 : i32
      %63 = arith.index_cast %62 : i32 to index
      %c0_69 = arith.constant 0 : index
      %c0_70 = arith.constant 0 : index
      %64 = vector.load %arg9[%63, %c0_69, %c0_70] : memref<16x16x128xf32, #tpu.memory_space<vmem>>, vector<1x14x128xf32>
      %65 = vector.shape_cast %64 : vector<1x14x128xf32> to vector<14x128xf32>
      %66 = arith.truncf %65 : vector<14x128xf32> to vector<14x128xbf16>
      %c0_71 = arith.constant 0 : index
      %c768 = arith.constant 768 : index
      %67 = vector.load %arg10[%c0_71, %c768] : memref<14x1152xbf16, #tpu.memory_space<vmem>>, vector<14x128xbf16>
      tpu.vector_store %arg10[%c0_71, %c768], %66 {strides = array<i32>} : memref<14x1152xbf16, #tpu.memory_space<vmem>>, vector<14x128xbf16>,
      %c2_i32_72 = arith.constant 2 : i32
      %68 = arith.addi %25, %c2_i32_72 : i32
      %69 = arith.index_cast %68 : i32 to index
      %c1_73 = arith.constant 1 : index
      %c0_74 = arith.constant 0 : index
      %70 = vector.load %arg9[%69, %c1_73, %c0_74] : memref<16x16x128xf32, #tpu.memory_space<vmem>>, vector<1x14x128xf32>
      %71 = vector.shape_cast %70 : vector<1x14x128xf32> to vector<14x128xf32>
      %72 = arith.truncf %71 : vector<14x128xf32> to vector<14x128xbf16>
      %c0_75 = arith.constant 0 : index
      %c896 = arith.constant 896 : index
      %73 = vector.load %arg10[%c0_75, %c896] : memref<14x1152xbf16, #tpu.memory_space<vmem>>, vector<14x128xbf16>
      tpu.vector_store %arg10[%c0_75, %c896], %72 {strides = array<i32>} : memref<14x1152xbf16, #tpu.memory_space<vmem>>, vector<14x128xbf16>,
      %c2_i32_76 = arith.constant 2 : i32
      %74 = arith.addi %25, %c2_i32_76 : i32
      %75 = arith.index_cast %74 : i32 to index
      %c2_77 = arith.constant 2 : index
      %c0_78 = arith.constant 0 : index
      %76 = vector.load %arg9[%75, %c2_77, %c0_78] : memref<16x16x128xf32, #tpu.memory_space<vmem>>, vector<1x14x128xf32>
      %77 = vector.shape_cast %76 : vector<1x14x128xf32> to vector<14x128xf32>
      %78 = arith.truncf %77 : vector<14x128xf32> to vector<14x128xbf16>
      %c0_79 = arith.constant 0 : index
      %c1024 = arith.constant 1024 : index
      %79 = vector.load %arg10[%c0_79, %c1024] : memref<14x1152xbf16, #tpu.memory_space<vmem>>, vector<14x128xbf16>
      tpu.vector_store %arg10[%c0_79, %c1024], %78 {strides = array<i32>} : memref<14x1152xbf16, #tpu.memory_space<vmem>>, vector<14x128xbf16>,
      %c0_80 = arith.constant 0 : index
      %c0_81 = arith.constant 0 : index
      %80 = vector.load %arg10[%c0_80, %c0_81] : memref<14x1152xbf16, #tpu.memory_space<vmem>>, vector<14x1152xbf16>
      %c0_82 = arith.constant 0 : index
      %c0_83 = arith.constant 0 : index
      %81 = vector.load %arg4[%c0_82, %c0_83] : memref<1152x64xbf16, #tpu.memory_space<vmem>>, vector<1152x64xbf16>
      %cst_84 = arith.constant dense<0.000000e+00> : vector<14x64xf32>
      %82 = tpu.matmul %80, %81, %cst_84 {dimension_numbers = #tpu.dot_dimension_numbers<[1], [0], [0], [1], [0, 0, 1, 1], [], []>} : vector<14x1152xbf16>, vector<1152x64xbf16>, vector<14x64xf32> -> vector<14x64xf32>
      %c2_i32_85 = arith.constant 2 : i32
      %83 = arith.muli %c2_i32_85, %23 : i32
      %c1_i32_86 = arith.constant 1 : i32
      %84 = arith.addi %83, %c1_i32_86 : i32
      %c0_i32_87 = arith.constant 0 : i32
      %85 = arith.addi %84, %c0_i32_87 : i32
      %86 = arith.index_cast %85 : i32 to index
      %c0_88 = arith.constant 0 : index
      %c0_89 = arith.constant 0 : index
      %87 = vector.load %arg9[%86, %c0_88, %c0_89] : memref<16x16x128xf32, #tpu.memory_space<vmem>>, vector<1x14x128xf32>
      %88 = vector.shape_cast %87 : vector<1x14x128xf32> to vector<14x128xf32>
      %89 = arith.truncf %88 : vector<14x128xf32> to vector<14x128xbf16>
      %c0_90 = arith.constant 0 : index
      %c0_91 = arith.constant 0 : index
      %90 = vector.load %arg10[%c0_90, %c0_91] : memref<14x1152xbf16, #tpu.memory_space<vmem>>, vector<14x128xbf16>
      tpu.vector_store %arg10[%c0_90, %c0_91], %89 {strides = array<i32>} : memref<14x1152xbf16, #tpu.memory_space<vmem>>, vector<14x128xbf16>,
      %c0_i32_92 = arith.constant 0 : i32
      %91 = arith.addi %84, %c0_i32_92 : i32
      %92 = arith.index_cast %91 : i32 to index
      %c1_93 = arith.constant 1 : index
      %c0_94 = arith.constant 0 : index
      %93 = vector.load %arg9[%92, %c1_93, %c0_94] : memref<16x16x128xf32, #tpu.memory_space<vmem>>, vector<1x14x128xf32>
      %94 = vector.shape_cast %93 : vector<1x14x128xf32> to vector<14x128xf32>
      %95 = arith.truncf %94 : vector<14x128xf32> to vector<14x128xbf16>
      %c0_95 = arith.constant 0 : index
      %c128_96 = arith.constant 128 : index
      %96 = vector.load %arg10[%c0_95, %c128_96] : memref<14x1152xbf16, #tpu.memory_space<vmem>>, vector<14x128xbf16>
      tpu.vector_store %arg10[%c0_95, %c128_96], %95 {strides = array<i32>} : memref<14x1152xbf16, #tpu.memory_space<vmem>>, vector<14x128xbf16>,
      %c0_i32_97 = arith.constant 0 : i32
      %97 = arith.addi %84, %c0_i32_97 : i32
      %98 = arith.index_cast %97 : i32 to index
      %c2_98 = arith.constant 2 : index
      %c0_99 = arith.constant 0 : index
      %99 = vector.load %arg9[%98, %c2_98, %c0_99] : memref<16x16x128xf32, #tpu.memory_space<vmem>>, vector<1x14x128xf32>
      %100 = vector.shape_cast %99 : vector<1x14x128xf32> to vector<14x128xf32>
      %101 = arith.truncf %100 : vector<14x128xf32> to vector<14x128xbf16>
      %c0_100 = arith.constant 0 : index
      %c256_101 = arith.constant 256 : index
      %102 = vector.load %arg10[%c0_100, %c256_101] : memref<14x1152xbf16, #tpu.memory_space<vmem>>, vector<14x128xbf16>
      tpu.vector_store %arg10[%c0_100, %c256_101], %101 {strides = array<i32>} : memref<14x1152xbf16, #tpu.memory_space<vmem>>, vector<14x128xbf16>,
      %c1_i32_102 = arith.constant 1 : i32
      %103 = arith.addi %84, %c1_i32_102 : i32
      %104 = arith.index_cast %103 : i32 to index
      %c0_103 = arith.constant 0 : index
      %c0_104 = arith.constant 0 : index
      %105 = vector.load %arg9[%104, %c0_103, %c0_104] : memref<16x16x128xf32, #tpu.memory_space<vmem>>, vector<1x14x128xf32>
      %106 = vector.shape_cast %105 : vector<1x14x128xf32> to vector<14x128xf32>
      %107 = arith.truncf %106 : vector<14x128xf32> to vector<14x128xbf16>
      %c0_105 = arith.constant 0 : index
      %c384_106 = arith.constant 384 : index
      %108 = vector.load %arg10[%c0_105, %c384_106] : memref<14x1152xbf16, #tpu.memory_space<vmem>>, vector<14x128xbf16>
      tpu.vector_store %arg10[%c0_105, %c384_106], %107 {strides = array<i32>} : memref<14x1152xbf16, #tpu.memory_space<vmem>>, vector<14x128xbf16>,
      %c1_i32_107 = arith.constant 1 : i32
      %109 = arith.addi %84, %c1_i32_107 : i32
      %110 = arith.index_cast %109 : i32 to index
      %c1_108 = arith.constant 1 : index
      %c0_109 = arith.constant 0 : index
      %111 = vector.load %arg9[%110, %c1_108, %c0_109] : memref<16x16x128xf32, #tpu.memory_space<vmem>>, vector<1x14x128xf32>
      %112 = vector.shape_cast %111 : vector<1x14x128xf32> to vector<14x128xf32>
      %113 = arith.truncf %112 : vector<14x128xf32> to vector<14x128xbf16>
      %c0_110 = arith.constant 0 : index
      %c512_111 = arith.constant 512 : index
      %114 = vector.load %arg10[%c0_110, %c512_111] : memref<14x1152xbf16, #tpu.memory_space<vmem>>, vector<14x128xbf16>
      tpu.vector_store %arg10[%c0_110, %c512_111], %113 {strides = array<i32>} : memref<14x1152xbf16, #tpu.memory_space<vmem>>, vector<14x128xbf16>,
      %c1_i32_112 = arith.constant 1 : i32
      %115 = arith.addi %84, %c1_i32_112 : i32
      %116 = arith.index_cast %115 : i32 to index
      %c2_113 = arith.constant 2 : index
      %c0_114 = arith.constant 0 : index
      %117 = vector.load %arg9[%116, %c2_113, %c0_114] : memref<16x16x128xf32, #tpu.memory_space<vmem>>, vector<1x14x128xf32>
      %118 = vector.shape_cast %117 : vector<1x14x128xf32> to vector<14x128xf32>
      %119 = arith.truncf %118 : vector<14x128xf32> to vector<14x128xbf16>
      %c0_115 = arith.constant 0 : index
      %c640_116 = arith.constant 640 : index
      %120 = vector.load %arg10[%c0_115, %c640_116] : memref<14x1152xbf16, #tpu.memory_space<vmem>>, vector<14x128xbf16>
      tpu.vector_store %arg10[%c0_115, %c640_116], %119 {strides = array<i32>} : memref<14x1152xbf16, #tpu.memory_space<vmem>>, vector<14x128xbf16>,
      %c2_i32_117 = arith.constant 2 : i32
      %121 = arith.addi %84, %c2_i32_117 : i32
      %122 = arith.index_cast %121 : i32 to index
      %c0_118 = arith.constant 0 : index
      %c0_119 = arith.constant 0 : index
      %123 = vector.load %arg9[%122, %c0_118, %c0_119] : memref<16x16x128xf32, #tpu.memory_space<vmem>>, vector<1x14x128xf32>
      %124 = vector.shape_cast %123 : vector<1x14x128xf32> to vector<14x128xf32>
      %125 = arith.truncf %124 : vector<14x128xf32> to vector<14x128xbf16>
      %c0_120 = arith.constant 0 : index
      %c768_121 = arith.constant 768 : index
      %126 = vector.load %arg10[%c0_120, %c768_121] : memref<14x1152xbf16, #tpu.memory_space<vmem>>, vector<14x128xbf16>
      tpu.vector_store %arg10[%c0_120, %c768_121], %125 {strides = array<i32>} : memref<14x1152xbf16, #tpu.memory_space<vmem>>, vector<14x128xbf16>,
      %c2_i32_122 = arith.constant 2 : i32
      %127 = arith.addi %84, %c2_i32_122 : i32
      %128 = arith.index_cast %127 : i32 to index
      %c1_123 = arith.constant 1 : index
      %c0_124 = arith.constant 0 : index
      %129 = vector.load %arg9[%128, %c1_123, %c0_124] : memref<16x16x128xf32, #tpu.memory_space<vmem>>, vector<1x14x128xf32>
      %130 = vector.shape_cast %129 : vector<1x14x128xf32> to vector<14x128xf32>
      %131 = arith.truncf %130 : vector<14x128xf32> to vector<14x128xbf16>
      %c0_125 = arith.constant 0 : index
      %c896_126 = arith.constant 896 : index
      %132 = vector.load %arg10[%c0_125, %c896_126] : memref<14x1152xbf16, #tpu.memory_space<vmem>>, vector<14x128xbf16>
      tpu.vector_store %arg10[%c0_125, %c896_126], %131 {strides = array<i32>} : memref<14x1152xbf16, #tpu.memory_space<vmem>>, vector<14x128xbf16>,
      %c2_i32_127 = arith.constant 2 : i32
      %133 = arith.addi %84, %c2_i32_127 : i32
      %134 = arith.index_cast %133 : i32 to index
      %c2_128 = arith.constant 2 : index
      %c0_129 = arith.constant 0 : index
      %135 = vector.load %arg9[%134, %c2_128, %c0_129] : memref<16x16x128xf32, #tpu.memory_space<vmem>>, vector<1x14x128xf32>
      %136 = vector.shape_cast %135 : vector<1x14x128xf32> to vector<14x128xf32>
      %137 = arith.truncf %136 : vector<14x128xf32> to vector<14x128xbf16>
      %c0_130 = arith.constant 0 : index
      %c1024_131 = arith.constant 1024 : index
      %138 = vector.load %arg10[%c0_130, %c1024_131] : memref<14x1152xbf16, #tpu.memory_space<vmem>>, vector<14x128xbf16>
      tpu.vector_store %arg10[%c0_130, %c1024_131], %137 {strides = array<i32>} : memref<14x1152xbf16, #tpu.memory_space<vmem>>, vector<14x128xbf16>,
      %c0_132 = arith.constant 0 : index
      %c0_133 = arith.constant 0 : index
      %139 = vector.load %arg10[%c0_132, %c0_133] : memref<14x1152xbf16, #tpu.memory_space<vmem>>, vector<14x1152xbf16>
      %c0_134 = arith.constant 0 : index
      %c0_135 = arith.constant 0 : index
      %140 = vector.load %arg4[%c0_134, %c0_135] : memref<1152x64xbf16, #tpu.memory_space<vmem>>, vector<1152x64xbf16>
      %cst_136 = arith.constant dense<0.000000e+00> : vector<14x64xf32>
      %141 = tpu.matmul %139, %140, %cst_136 {dimension_numbers = #tpu.dot_dimension_numbers<[1], [0], [0], [1], [0, 0, 1, 1], [], []>} : vector<14x1152xbf16>, vector<1152x64xbf16>, vector<14x64xf32> -> vector<14x64xf32>
      %142 = arith.maximumf %82, %141 : vector<14x64xf32>
      %143 = vector.broadcast %14 : vector<1x64xf32> to vector<14x64xf32>
      %144 = arith.addf %142, %143 : vector<14x64xf32>
      %cst_137 = arith.constant 0.000000e+00 : f32
      %145 = vector.broadcast %cst_137 : f32 to vector<14x64xf32>
      %146 = arith.maximumf %144, %145 : vector<14x64xf32>
      %147 = arith.index_cast %23 : i32 to index
      %c0_138 = arith.constant 0 : index
      %c0_139 = arith.constant 0 : index
      %148 = vector.load %arg11[%147, %c0_138, %c0_139] : memref<7x14x64xf32, #tpu.memory_space<vmem>>, vector<1x14x64xf32>
      %149 = vector.shape_cast %148 : vector<1x14x64xf32> to vector<14x64xf32>
      %150 = vector.shape_cast %146 : vector<14x64xf32> to vector<1x14x64xf32>
      tpu.vector_store %arg11[%147, %c0_138, %c0_139], %150 {strides = array<i32>} : memref<7x14x64xf32, #tpu.memory_space<vmem>>, vector<1x14x64xf32>,
    }
    %c7_i32_30 = arith.constant 7 : i32
    %c0_31 = arith.constant 0 : index
    %c0_32 = arith.constant 0 : index
    %c0_33 = arith.constant 0 : index
    %16 = tpu.strided_load %arg11[%c0_31, %c0_32, %c0_33] {strides = array<i32: 1, 2, 1>} : memref<7x14x64xf32, #tpu.memory_space<vmem>>, vector<7x7x64xf32>
    %c0_34 = arith.constant 0 : index
    %c1_35 = arith.constant 1 : index
    %c0_36 = arith.constant 0 : index
    %17 = tpu.strided_load %arg11[%c0_34, %c1_35, %c0_36] {strides = array<i32: 1, 2, 1>} : memref<7x14x64xf32, #tpu.memory_space<vmem>>, vector<7x7x64xf32>
    %18 = arith.maximumf %16, %17 : vector<7x7x64xf32>
    %c0_37 = arith.constant 0 : index
    %c0_38 = arith.constant 0 : index
    %c0_39 = arith.constant 0 : index
    %c0_40 = arith.constant 0 : index
    %19 = vector.load %arg6[%c0_37, %c0_38, %c0_39, %c0_40] : memref<1x7x7x64xf32, #tpu.memory_space<vmem>>, vector<1x7x7x64xf32>
    %20 = vector.shape_cast %19 : vector<1x7x7x64xf32> to vector<7x7x64xf32>
    %21 = vector.shape_cast %18 : vector<7x7x64xf32> to vector<1x7x7x64xf32>
    tpu.vector_store %arg6[%c0_37, %c0_38, %c0_39, %c0_40], %21 {strides = array<i32>} : memref<1x7x7x64xf32, #tpu.memory_space<vmem>>, vector<1x7x7x64xf32>,
    return
  }
  func.func @transform_0(%arg0: i32) -> (i32, i32, i32, i32) {
    %c0_i32 = arith.constant 0 : i32
    %c0_i32_0 = arith.constant 0 : i32
    %c0_i32_1 = arith.constant 0 : i32
    %c0_i32_2 = arith.constant 0 : i32
    return %arg0, %c0_i32, %c0_i32_0, %c0_i32_1 : i32, i32, i32, i32
  }
  func.func @transform_1(%arg0: i32) -> (i32, i32) {
    %c0_i32 = arith.constant 0 : i32
    %c0_i32_0 = arith.constant 0 : i32
    %c0_i32_1 = arith.constant 0 : i32
    return %c0_i32, %c0_i32_0 : i32, i32
  }
  func.func @transform_2(%arg0: i32) -> (i32, i32) {
    %c0_i32 = arith.constant 0 : i32
    %c0_i32_0 = arith.constant 0 : i32
    %c0_i32_1 = arith.constant 0 : i32
    return %c0_i32, %c0_i32_0 : i32, i32
  }
  func.func @transform_3(%arg0: i32) -> (i32, i32) {
    %c0_i32 = arith.constant 0 : i32
    %c0_i32_0 = arith.constant 0 : i32
    %c0_i32_1 = arith.constant 0 : i32
    return %c0_i32, %c0_i32_0 : i32, i32
  }
  func.func @transform_4(%arg0: i32) -> (i32, i32) {
    %c0_i32 = arith.constant 0 : i32
    %c0_i32_0 = arith.constant 0 : i32
    %c0_i32_1 = arith.constant 0 : i32
    return %c0_i32, %c0_i32_0 : i32, i32
  }
  func.func @transform_5(%arg0: i32) -> (i32, i32, i32, i32) {
    %c0_i32 = arith.constant 0 : i32
    %c0_i32_0 = arith.constant 0 : i32
    %c0_i32_1 = arith.constant 0 : i32
    %c0_i32_2 = arith.constant 0 : i32
    return %arg0, %c0_i32, %c0_i32_0, %c0_i32_1 : i32, i32, i32, i32
  }
}

module attributes {stable_mosaic.version = 11 : i64} {
  func.func @_mlp_kernel(%arg0: i32, %arg1: memref<2x3136xf32, #tpu.memory_space<vmem>>, %arg2: memref<3136x128xbf16, #tpu.memory_space<vmem>>, %arg3: memref<1x128xf32, #tpu.memory_space<vmem>>, %arg4: memref<128x10xbf16, #tpu.memory_space<vmem>>, %arg5: memref<1x10xf32, #tpu.memory_space<vmem>>, %arg6: memref<2x10xf32, #tpu.memory_space<vmem>>) attributes {dimension_semantics = [#tpu.dimension_semantics<arbitrary>], iteration_bounds = array<i64: 1>, scalar_prefetch = 0 : i64, scratch_operands = 0 : i64, tpu.core_type = #tpu.core_type<tc>, window_params = [{pipeline_mode = #tpu.pipeline_mode<synchronous>, transform_indices = @transform_0, window_bounds = array<i64: 2, 3136>}, {pipeline_mode = #tpu.pipeline_mode<synchronous>, transform_indices = @transform_1, window_bounds = array<i64: 3136, 128>}, {pipeline_mode = #tpu.pipeline_mode<synchronous>, transform_indices = @transform_2, window_bounds = array<i64: 1, 128>}, {pipeline_mode = #tpu.pipeline_mode<synchronous>, transform_indices = @transform_3, window_bounds = array<i64: 128, 10>}, {pipeline_mode = #tpu.pipeline_mode<synchronous>, transform_indices = @transform_4, window_bounds = array<i64: 1, 10>}, {pipeline_mode = #tpu.pipeline_mode<synchronous>, transform_indices = @transform_5, window_bounds = array<i64: 2, 10>}]} {
    %c0 = arith.constant 0 : index
    %c0_0 = arith.constant 0 : index
    %0 = vector.load %arg1[%c0, %c0_0] : memref<2x3136xf32, #tpu.memory_space<vmem>>, vector<2x3136xf32>
    %1 = arith.truncf %0 : vector<2x3136xf32> to vector<2x3136xbf16>
    %c0_1 = arith.constant 0 : index
    %c0_2 = arith.constant 0 : index
    %2 = vector.load %arg2[%c0_1, %c0_2] : memref<3136x128xbf16, #tpu.memory_space<vmem>>, vector<3136x128xbf16>
    %cst = arith.constant dense<0.000000e+00> : vector<2x128xf32>
    %3 = tpu.matmul %1, %2, %cst {dimension_numbers = #tpu.dot_dimension_numbers<[1], [0], [0], [1], [0, 0, 1, 1], [], []>} : vector<2x3136xbf16>, vector<3136x128xbf16>, vector<2x128xf32> -> vector<2x128xf32>
    %c0_3 = arith.constant 0 : index
    %c0_4 = arith.constant 0 : index
    %4 = vector.load %arg3[%c0_3, %c0_4] : memref<1x128xf32, #tpu.memory_space<vmem>>, vector<1x128xf32>
    %5 = vector.broadcast %4 : vector<1x128xf32> to vector<2x128xf32>
    %6 = arith.addf %3, %5 : vector<2x128xf32>
    %cst_5 = arith.constant 0.000000e+00 : f32
    %7 = vector.broadcast %cst_5 : f32 to vector<2x128xf32>
    %8 = arith.maximumf %6, %7 : vector<2x128xf32>
    %9 = arith.truncf %8 : vector<2x128xf32> to vector<2x128xbf16>
    %c0_6 = arith.constant 0 : index
    %c0_7 = arith.constant 0 : index
    %10 = vector.load %arg4[%c0_6, %c0_7] : memref<128x10xbf16, #tpu.memory_space<vmem>>, vector<128x10xbf16>
    %cst_8 = arith.constant dense<0.000000e+00> : vector<2x10xf32>
    %11 = tpu.matmul %9, %10, %cst_8 {dimension_numbers = #tpu.dot_dimension_numbers<[1], [0], [0], [1], [0, 0, 1, 1], [], []>} : vector<2x128xbf16>, vector<128x10xbf16>, vector<2x10xf32> -> vector<2x10xf32>
    %c0_9 = arith.constant 0 : index
    %c0_10 = arith.constant 0 : index
    %12 = vector.load %arg5[%c0_9, %c0_10] : memref<1x10xf32, #tpu.memory_space<vmem>>, vector<1x10xf32>
    %13 = vector.broadcast %12 : vector<1x10xf32> to vector<2x10xf32>
    %14 = arith.addf %11, %13 : vector<2x10xf32>
    %c0_11 = arith.constant 0 : index
    %c0_12 = arith.constant 0 : index
    %15 = vector.load %arg6[%c0_11, %c0_12] : memref<2x10xf32, #tpu.memory_space<vmem>>, vector<2x10xf32>
    tpu.vector_store %arg6[%c0_11, %c0_12], %14 {strides = array<i32>} : memref<2x10xf32, #tpu.memory_space<vmem>>, vector<2x10xf32>,
    return
  }
  func.func @transform_0(%arg0: i32) -> (i32, i32) {
    %c0_i32 = arith.constant 0 : i32
    %c0_i32_0 = arith.constant 0 : i32
    %c0_i32_1 = arith.constant 0 : i32
    return %c0_i32, %c0_i32_0 : i32, i32
  }
  func.func @transform_1(%arg0: i32) -> (i32, i32) {
    %c0_i32 = arith.constant 0 : i32
    %c0_i32_0 = arith.constant 0 : i32
    %c0_i32_1 = arith.constant 0 : i32
    return %c0_i32, %c0_i32_0 : i32, i32
  }
  func.func @transform_2(%arg0: i32) -> (i32, i32) {
    %c0_i32 = arith.constant 0 : i32
    %c0_i32_0 = arith.constant 0 : i32
    %c0_i32_1 = arith.constant 0 : i32
    return %c0_i32, %c0_i32_0 : i32, i32
  }
  func.func @transform_3(%arg0: i32) -> (i32, i32) {
    %c0_i32 = arith.constant 0 : i32
    %c0_i32_0 = arith.constant 0 : i32
    %c0_i32_1 = arith.constant 0 : i32
    return %c0_i32, %c0_i32_0 : i32, i32
  }
  func.func @transform_4(%arg0: i32) -> (i32, i32) {
    %c0_i32 = arith.constant 0 : i32
    %c0_i32_0 = arith.constant 0 : i32
    %c0_i32_1 = arith.constant 0 : i32
    return %c0_i32, %c0_i32_0 : i32, i32
  }
  func.func @transform_5(%arg0: i32) -> (i32, i32) {
    %c0_i32 = arith.constant 0 : i32
    %c0_i32_0 = arith.constant 0 : i32
    %c0_i32_1 = arith.constant 0 : i32
    return %c0_i32, %c0_i32_0 : i32, i32
  }
}

</mosaic_0001>

<llo_original>
// kernel: cnn_forward.3
$region0: #{cnn_forward.3}
  #allocation0 [shape = 'u32[]', space=smem, size = 0x4, offset = 0x4, fixed_abs, tag = 'smem constant byte address 0x4 - core index']
  #allocation1 [shape = 'u32[72,128]{1,0:T(1,128)}', space=vmem, size = 0x9000, scoped, tag = 'internal scratch']
  %s0 = inlined_call_operand.vmem [shape: f32[2,3136], index: 0, kind: input, shape index: {}]
  %s1 = inlined_call_operand.vmem [shape: bf16[3136,128], index: 1, kind: input, shape index: {}]
  %s2 = inlined_call_operand.vmem [shape: f32[1,128], index: 2, kind: input, shape index: {}]
  %s3 = inlined_call_operand.vmem [shape: bf16[128,10], index: 3, kind: input, shape index: {}]
  %s4 = inlined_call_operand.vmem [shape: f32[1,10], index: 4, kind: input, shape index: {}]
  %s5 = inlined_call_operand.hbm [shape: f32[2,10], index: 5, kind: output, shape index: {}]
  %s6 = sld [smem:[#allocation0]]
  $region30: #{cnn_forward.3} parent=0
    _
  %s8 = ssub.s32 1, %s6
  %s9 = scalar_select 0, %s8, %s6
  $region1: #{cnn_forward.3} parent=0
    #allocation2 [shape = 'u8[1024]{0}', space=vmem, size = 0x400, scoped, tag = 'output window, operand 0, single buffered']
    #allocation3 [shape = 's32[1]{0}', space=sflag, size = 0x4, scoped, tag = 'scoped memory for cnn_forward.3']
    %10 = vsyncpa [#allocation3], 0
    // Predicated region
    $region2: #{cnn_forward.3} parent=1 // pred_check
      _
    $region3: #{cnn_forward.3} parent=1 // pred_check_branch
      %12 = sbr.rel (0) target = $region5
    $region4: #{cnn_forward.3} parent=1 // pred_region
      _
    $region5: #{cnn_forward.3} parent=1 // pred_fallthru
      _
    // Predicated region
    $region6: #{cnn_forward.3} parent=1 // pred_check
      _
    $region7: #{cnn_forward.3} parent=1 // pred_check_branch
      %14 = sbr.rel (0) target = $region9
    $region8: #{cnn_forward.3} parent=1 // pred_region
      _
    $region9: #{cnn_forward.3} parent=1 // pred_fallthru
      _
    // Predicated region
    $region10: #{cnn_forward.3} parent=1 // pred_check
      _
    $region11: #{cnn_forward.3} parent=1 // pred_check_branch
      %16 = sbr.rel (0) target = $region13
    $region12: #{cnn_forward.3} parent=1 // pred_region
      _
    $region13: #{cnn_forward.3} parent=1 // pred_fallthru
      _
    // Predicated region
    $region14: #{cnn_forward.3} parent=1 // pred_check
      _
    $region15: #{cnn_forward.3} parent=1 // pred_check_branch
      %18 = sbr.rel (0) target = $region17
    $region16: #{cnn_forward.3} parent=1 // pred_region
      _
    $region17: #{cnn_forward.3} parent=1 // pred_fallthru
      _
    // Predicated region
    $region18: #{cnn_forward.3} parent=1 // pred_check
      _
    $region19: #{cnn_forward.3} parent=1 // pred_check_branch
      %20 = sbr.rel (0) target = $region21
    $region20: #{cnn_forward.3} parent=1 // pred_region
      _
    $region21: #{cnn_forward.3} parent=1 // pred_fallthru
      _
    %v22 = vld [vmem:[%s0] sm:$0xff]
    %v23 = vld [vmem:[%s0 + $0x8] sm:$0xff]
    %v24 = vld [vmem:[%s0 + $0x10] sm:$0xff]
    %v25 = vld [vmem:[%s0 + $0x18] sm:$0xff]
    %v26 = vld [vmem:[%s0 + $0x20] sm:$0xff]
    %v27 = vld [vmem:[%s0 + $0x28] sm:$0xff]
    %v28 = vld [vmem:[%s0 + $0x30] sm:$0x3]
    %36 = vst [vmem:[#allocation1] ss:$4 sm:$0xff] %v22
    %s37 = scalar_lea.vmem [#allocation1], 32
    %38 = vst [vmem:[%s37] ss:$4 sm:$0xff] %v23
    %v39 = vld.sshfl [vmem:[#allocation1] sm:$0xff pattern:$0x73625140]
    %v40 = vld.sshfl [vmem:[#allocation1 + $0x8] sm:$0xff pattern:$0x73625140]
    %v41 = vld.sshfl [vmem:[#allocation1 + $0x10] sm:$0xff pattern:$0x73625140]
    %v42 = vld.sshfl [vmem:[#allocation1 + $0x18] sm:$0xff pattern:$0x73625140]
    %v43 = vld.sshfl [vmem:[#allocation1 + $0x20] sm:$0xff pattern:$0x73625140]
    %v44 = vld.sshfl [vmem:[#allocation1 + $0x28] sm:$0xff pattern:$0x73625140]
    %v45 = vld.sshfl [vmem:[#allocation1 + $0x30] sm:$0xff pattern:$0x73625140]
    %v46 = vld.sshfl [vmem:[#allocation1 + $0x38] sm:$0xff pattern:$0x73625140]
    %47 = vst [vmem:[#allocation1] ss:$4 sm:$0xff] %v24
    %48 = vst [vmem:[%s37] ss:$4 sm:$0xff] %v25
    %v49 = vld.sshfl [vmem:[#allocation1] sm:$0xff pattern:$0x73625140]
    %v50 = vld.sshfl [vmem:[#allocation1 + $0x8] sm:$0xff pattern:$0x73625140]
    %v51 = vld.sshfl [vmem:[#allocation1 + $0x10] sm:$0xff pattern:$0x73625140]
    %v52 = vld.sshfl [vmem:[#allocation1 + $0x18] sm:$0xff pattern:$0x73625140]
    %v53 = vld.sshfl [vmem:[#allocation1 + $0x20] sm:$0xff pattern:$0x73625140]
    %v54 = vld.sshfl [vmem:[#allocation1 + $0x28] sm:$0xff pattern:$0x73625140]
    %v55 = vld.sshfl [vmem:[#allocation1 + $0x30] sm:$0xff pattern:$0x73625140]
    %v56 = vld.sshfl [vmem:[#allocation1 + $0x38] sm:$0xff pattern:$0x73625140]
    %57 = vst [vmem:[#allocation1] ss:$4 sm:$0xff] %v26
    %58 = vst [vmem:[%s37] ss:$4 sm:$0xff] %v27
    %v59 = vld.sshfl [vmem:[#allocation1] sm:$0xff pattern:$0x73625140]
    %v60 = vld.sshfl [vmem:[#allocation1 + $0x8] sm:$0xff pattern:$0x73625140]
    %v61 = vld.sshfl [vmem:[#allocation1 + $0x10] sm:$0xff pattern:$0x73625140]
    %v62 = vld.sshfl [vmem:[#allocation1 + $0x18] sm:$0xff pattern:$0x73625140]
    %v63 = vld.sshfl [vmem:[#allocation1 + $0x20] sm:$0xff pattern:$0x73625140]
    %v64 = vld.sshfl [vmem:[#allocation1 + $0x28] sm:$0xff pattern:$0x73625140]
    %v65 = vld.sshfl [vmem:[#allocation1 + $0x30] sm:$0xff pattern:$0x73625140]
    %v66 = vld.sshfl [vmem:[#allocation1 + $0x38] sm:$0xff pattern:$0x73625140]
    %67 = vst [vmem:[#allocation1] ss:$4 sm:$0xff] %v28
    %v68 = vld.sshfl [vmem:[#allocation1] sm:$0xff pattern:$0x73625140]
    %v94 = vpack.c.bf16 %v39, %v39
    %v95 = vpack.c.bf16 %v40, %v40
    %v96 = vpack.c.bf16 %v41, %v41
    %v97 = vpack.c.bf16 %v42, %v42
    %v98 = vpack.c.bf16 %v43, %v43
    %v99 = vpack.c.bf16 %v44, %v44
    %v100 = vpack.c.bf16 %v45, %v45
    %v101 = vpack.c.bf16 %v46, %v46
    %v102 = vpack.c.bf16 %v49, %v49
    %v103 = vpack.c.bf16 %v50, %v50
    %v104 = vpack.c.bf16 %v51, %v51
    %v105 = vpack.c.bf16 %v52, %v52
    %v106 = vpack.c.bf16 %v53, %v53
    %v107 = vpack.c.bf16 %v54, %v54
    %v108 = vpack.c.bf16 %v55, %v55
    %v109 = vpack.c.bf16 %v56, %v56
    %v110 = vpack.c.bf16 %v59, %v59
    %v111 = vpack.c.bf16 %v60, %v60
    %v112 = vpack.c.bf16 %v61, %v61
    %v113 = vpack.c.bf16 %v62, %v62
    %v114 = vpack.c.bf16 %v63, %v63
    %v115 = vpack.c.bf16 %v64, %v64
    %v116 = vpack.c.bf16 %v65, %v65
    %v117 = vpack.c.bf16 %v66, %v66
    %v118 = vpack.c.bf16 %v68, %v68
    %v119 = vld [vmem:[%s1] sm:$0xf]
    %v120 = vld [vmem:[%s1 + $0x4] sm:$0xf]
    %v121 = vld [vmem:[%s1 + $0x8] sm:$0xf]
    %v122 = vld [vmem:[%s1 + $0xc] sm:$0xf]
    %v123 = vld [vmem:[%s1 + $0x10] sm:$0xf]
    %v124 = vld [vmem:[%s1 + $0x14] sm:$0xf]
    %v125 = vld [vmem:[%s1 + $0x18] sm:$0xf]
    %v126 = vld [vmem:[%s1 + $0x1c] sm:$0xf]
    %v127 = vld [vmem:[%s1 + $0x20] sm:$0xf]
    %v128 = vld [vmem:[%s1 + $0x24] sm:$0xf]
    %v129 = vld [vmem:[%s1 + $0x28] sm:$0xf]
    %v130 = vld [vmem:[%s1 + $0x2c] sm:$0xf]
    %v131 = vld [vmem:[%s1 + $0x30] sm:$0xf]
    %v132 = vld [vmem:[%s1 + $0x34] sm:$0xf]
    %v133 = vld [vmem:[%s1 + $0x38] sm:$0xf]
    %v134 = vld [vmem:[%s1 + $0x3c] sm:$0xf]
    %v135 = vld [vmem:[%s1 + $0x40] sm:$0xf]
    %v136 = vld [vmem:[%s1 + $0x44] sm:$0xf]
    %v137 = vld [vmem:[%s1 + $0x48] sm:$0xf]
    %v138 = vld [vmem:[%s1 + $0x4c] sm:$0xf]
    %v139 = vld [vmem:[%s1 + $0x50] sm:$0xf]
    %v140 = vld [vmem:[%s1 + $0x54] sm:$0xf]
    %v141 = vld [vmem:[%s1 + $0x58] sm:$0xf]
    %v142 = vld [vmem:[%s1 + $0x5c] sm:$0xf]
    %v143 = vld [vmem:[%s1 + $0x60] sm:$0xf]
    %v144 = vld [vmem:[%s1 + $0x64] sm:$0xf]
    %v145 = vld [vmem:[%s1 + $0x68] sm:$0xf]
    %v146 = vld [vmem:[%s1 + $0x6c] sm:$0xf]
    %v147 = vld [vmem:[%s1 + $0x70] sm:$0xf]
    %v148 = vld [vmem:[%s1 + $0x74] sm:$0xf]
    %v149 = vld [vmem:[%s1 + $0x78] sm:$0xf]
    %v150 = vld [vmem:[%s1 + $0x7c] sm:$0xf]
    %v151 = vld [vmem:[%s1 + $0x80] sm:$0xf]
    %v152 = vld [vmem:[%s1 + $0x84] sm:$0xf]
    %v153 = vld [vmem:[%s1 + $0x88] sm:$0xf]
    %v154 = vld [vmem:[%s1 + $0x8c] sm:$0xf]
    %v155 = vld [vmem:[%s1 + $0x90] sm:$0xf]
    %v156 = vld [vmem:[%s1 + $0x94] sm:$0xf]
    %v157 = vld [vmem:[%s1 + $0x98] sm:$0xf]
    %v158 = vld [vmem:[%s1 + $0x9c] sm:$0xf]
    %v159 = vld [vmem:[%s1 + $0xa0] sm:$0xf]
    %v160 = vld [vmem:[%s1 + $0xa4] sm:$0xf]
    %v161 = vld [vmem:[%s1 + $0xa8] sm:$0xf]
    %v162 = vld [vmem:[%s1 + $0xac] sm:$0xf]
    %v163 = vld [vmem:[%s1 + $0xb0] sm:$0xf]
    %v164 = vld [vmem:[%s1 + $0xb4] sm:$0xf]
    %v165 = vld [vmem:[%s1 + $0xb8] sm:$0xf]
    %v166 = vld [vmem:[%s1 + $0xbc] sm:$0xf]
    %v167 = vld [vmem:[%s1 + $0xc0] sm:$0xf]
    %v168 = vld [vmem:[%s1 + $0xc4] sm:$0xf]
    %v169 = vld [vmem:[%s1 + $0xc8] sm:$0xf]
    %v170 = vld [vmem:[%s1 + $0xcc] sm:$0xf]
    %v171 = vld [vmem:[%s1 + $0xd0] sm:$0xf]
    %v172 = vld [vmem:[%s1 + $0xd4] sm:$0xf]
    %v173 = vld [vmem:[%s1 + $0xd8] sm:$0xf]
    %v174 = vld [vmem:[%s1 + $0xdc] sm:$0xf]
    %v175 = vld [vmem:[%s1 + $0xe0] sm:$0xf]
    %v176 = vld [vmem:[%s1 + $0xe4] sm:$0xf]
    %v177 = vld [vmem:[%s1 + $0xe8] sm:$0xf]
    %v178 = vld [vmem:[%s1 + $0xec] sm:$0xf]
    %v179 = vld [vmem:[%s1 + $0xf0] sm:$0xf]
    %v180 = vld [vmem:[%s1 + $0xf4] sm:$0xf]
    %v181 = vld [vmem:[%s1 + $0xf8] sm:$0xf]
    %v182 = vld [vmem:[%s1 + $0xfc] sm:$0xf]
    %v183 = vld [vmem:[%s1 + $0x100] sm:$0xf]
    %v184 = vld [vmem:[%s1 + $0x104] sm:$0xf]
    %v185 = vld [vmem:[%s1 + $0x108] sm:$0xf]
    %v186 = vld [vmem:[%s1 + $0x10c] sm:$0xf]
    %v187 = vld [vmem:[%s1 + $0x110] sm:$0xf]
    %v188 = vld [vmem:[%s1 + $0x114] sm:$0xf]
    %v189 = vld [vmem:[%s1 + $0x118] sm:$0xf]
    %v190 = vld [vmem:[%s1 + $0x11c] sm:$0xf]
    %v191 = vld [vmem:[%s1 + $0x120] sm:$0xf]
    %v192 = vld [vmem:[%s1 + $0x124] sm:$0xf]
    %v193 = vld [vmem:[%s1 + $0x128] sm:$0xf]
    %v194 = vld [vmem:[%s1 + $0x12c] sm:$0xf]
    %v195 = vld [vmem:[%s1 + $0x130] sm:$0xf]
    %v196 = vld [vmem:[%s1 + $0x134] sm:$0xf]
    %v197 = vld [vmem:[%s1 + $0x138] sm:$0xf]
    %v198 = vld [vmem:[%s1 + $0x13c] sm:$0xf]
    %v199 = vld [vmem:[%s1 + $0x140] sm:$0xf]
    %v200 = vld [vmem:[%s1 + $0x144] sm:$0xf]
    %v201 = vld [vmem:[%s1 + $0x148] sm:$0xf]
    %v202 = vld [vmem:[%s1 + $0x14c] sm:$0xf]
    %v203 = vld [vmem:[%s1 + $0x150] sm:$0xf]
    %v204 = vld [vmem:[%s1 + $0x154] sm:$0xf]
    %v205 = vld [vmem:[%s1 + $0x158] sm:$0xf]
    %v206 = vld [vmem:[%s1 + $0x15c] sm:$0xf]
    %v207 = vld [vmem:[%s1 + $0x160] sm:$0xf]
    %v208 = vld [vmem:[%s1 + $0x164] sm:$0xf]
    %v209 = vld [vmem:[%s1 + $0x168] sm:$0xf]
    %v210 = vld [vmem:[%s1 + $0x16c] sm:$0xf]
    %v211 = vld [vmem:[%s1 + $0x170] sm:$0xf]
    %v212 = vld [vmem:[%s1 + $0x174] sm:$0xf]
    %v213 = vld [vmem:[%s1 + $0x178] sm:$0xf]
    %v214 = vld [vmem:[%s1 + $0x17c] sm:$0xf]
    %v215 = vld [vmem:[%s1 + $0x180] sm:$0xf]
    %v216 = vld [vmem:[%s1 + $0x184] sm:$0xf]
    %v217 = vld [vmem:[%s1 + $0x188] sm:$0xf]
    %v218 = vld [vmem:[%s1 + $0x18c] sm:$0xf]
    %v219 = vld [vmem:[%s1 + $0x190] sm:$0xf]
    %v220 = vld [vmem:[%s1 + $0x194] sm:$0xf]
    %v221 = vld [vmem:[%s1 + $0x198] sm:$0xf]
    %v222 = vld [vmem:[%s1 + $0x19c] sm:$0xf]
    %v223 = vld [vmem:[%s1 + $0x1a0] sm:$0xf]
    %v224 = vld [vmem:[%s1 + $0x1a4] sm:$0xf]
    %v225 = vld [vmem:[%s1 + $0x1a8] sm:$0xf]
    %v226 = vld [vmem:[%s1 + $0x1ac] sm:$0xf]
    %v227 = vld [vmem:[%s1 + $0x1b0] sm:$0xf]
    %v228 = vld [vmem:[%s1 + $0x1b4] sm:$0xf]
    %v229 = vld [vmem:[%s1 + $0x1b8] sm:$0xf]
    %v230 = vld [vmem:[%s1 + $0x1bc] sm:$0xf]
    %v231 = vld [vmem:[%s1 + $0x1c0] sm:$0xf]
    %v232 = vld [vmem:[%s1 + $0x1c4] sm:$0xf]
    %v233 = vld [vmem:[%s1 + $0x1c8] sm:$0xf]
    %v234 = vld [vmem:[%s1 + $0x1cc] sm:$0xf]
    %v235 = vld [vmem:[%s1 + $0x1d0] sm:$0xf]
    %v236 = vld [vmem:[%s1 + $0x1d4] sm:$0xf]
    %v237 = vld [vmem:[%s1 + $0x1d8] sm:$0xf]
    %v238 = vld [vmem:[%s1 + $0x1dc] sm:$0xf]
    %v239 = vld [vmem:[%s1 + $0x1e0] sm:$0xf]
    %v240 = vld [vmem:[%s1 + $0x1e4] sm:$0xf]
    %v241 = vld [vmem:[%s1 + $0x1e8] sm:$0xf]
    %v242 = vld [vmem:[%s1 + $0x1ec] sm:$0xf]
    %v243 = vld [vmem:[%s1 + $0x1f0] sm:$0xf]
    %v244 = vld [vmem:[%s1 + $0x1f4] sm:$0xf]
    %v245 = vld [vmem:[%s1 + $0x1f8] sm:$0xf]
    %v246 = vld [vmem:[%s1 + $0x1fc] sm:$0xf]
    %v247 = vld [vmem:[%s1 + $0x200] sm:$0xf]
    %v248 = vld [vmem:[%s1 + $0x204] sm:$0xf]
    %v249 = vld [vmem:[%s1 + $0x208] sm:$0xf]
    %v250 = vld [vmem:[%s1 + $0x20c] sm:$0xf]
    %v251 = vld [vmem:[%s1 + $0x210] sm:$0xf]
    %v252 = vld [vmem:[%s1 + $0x214] sm:$0xf]
    %v253 = vld [vmem:[%s1 + $0x218] sm:$0xf]
    %v254 = vld [vmem:[%s1 + $0x21c] sm:$0xf]
    %v255 = vld [vmem:[%s1 + $0x220] sm:$0xf]
    %v256 = vld [vmem:[%s1 + $0x224] sm:$0xf]
    %v257 = vld [vmem:[%s1 + $0x228] sm:$0xf]
    %v258 = vld [vmem:[%s1 + $0x22c] sm:$0xf]
    %v259 = vld [vmem:[%s1 + $0x230] sm:$0xf]
    %v260 = vld [vmem:[%s1 + $0x234] sm:$0xf]
    %v261 = vld [vmem:[%s1 + $0x238] sm:$0xf]
    %v262 = vld [vmem:[%s1 + $0x23c] sm:$0xf]
    %v263 = vld [vmem:[%s1 + $0x240] sm:$0xf]
    %v264 = vld [vmem:[%s1 + $0x244] sm:$0xf]
    %v265 = vld [vmem:[%s1 + $0x248] sm:$0xf]
    %v266 = vld [vmem:[%s1 + $0x24c] sm:$0xf]
    %v267 = vld [vmem:[%s1 + $0x250] sm:$0xf]
    %v268 = vld [vmem:[%s1 + $0x254] sm:$0xf]
    %v269 = vld [vmem:[%s1 + $0x258] sm:$0xf]
    %v270 = vld [vmem:[%s1 + $0x25c] sm:$0xf]
    %v271 = vld [vmem:[%s1 + $0x260] sm:$0xf]
    %v272 = vld [vmem:[%s1 + $0x264] sm:$0xf]
    %v273 = vld [vmem:[%s1 + $0x268] sm:$0xf]
    %v274 = vld [vmem:[%s1 + $0x26c] sm:$0xf]
    %v275 = vld [vmem:[%s1 + $0x270] sm:$0xf]
    %v276 = vld [vmem:[%s1 + $0x274] sm:$0xf]
    %v277 = vld [vmem:[%s1 + $0x278] sm:$0xf]
    %v278 = vld [vmem:[%s1 + $0x27c] sm:$0xf]
    %v279 = vld [vmem:[%s1 + $0x280] sm:$0xf]
    %v280 = vld [vmem:[%s1 + $0x284] sm:$0xf]
    %v281 = vld [vmem:[%s1 + $0x288] sm:$0xf]
    %v282 = vld [vmem:[%s1 + $0x28c] sm:$0xf]
    %v283 = vld [vmem:[%s1 + $0x290] sm:$0xf]
    %v284 = vld [vmem:[%s1 + $0x294] sm:$0xf]
    %v285 = vld [vmem:[%s1 + $0x298] sm:$0xf]
    %v286 = vld [vmem:[%s1 + $0x29c] sm:$0xf]
    %v287 = vld [vmem:[%s1 + $0x2a0] sm:$0xf]
    %v288 = vld [vmem:[%s1 + $0x2a4] sm:$0xf]
    %v289 = vld [vmem:[%s1 + $0x2a8] sm:$0xf]
    %v290 = vld [vmem:[%s1 + $0x2ac] sm:$0xf]
    %v291 = vld [vmem:[%s1 + $0x2b0] sm:$0xf]
    %v292 = vld [vmem:[%s1 + $0x2b4] sm:$0xf]
    %v293 = vld [vmem:[%s1 + $0x2b8] sm:$0xf]
    %v294 = vld [vmem:[%s1 + $0x2bc] sm:$0xf]
    %v295 = vld [vmem:[%s1 + $0x2c0] sm:$0xf]
    %v296 = vld [vmem:[%s1 + $0x2c4] sm:$0xf]
    %v297 = vld [vmem:[%s1 + $0x2c8] sm:$0xf]
    %v298 = vld [vmem:[%s1 + $0x2cc] sm:$0xf]
    %v299 = vld [vmem:[%s1 + $0x2d0] sm:$0xf]
    %v300 = vld [vmem:[%s1 + $0x2d4] sm:$0xf]
    %v301 = vld [vmem:[%s1 + $0x2d8] sm:$0xf]
    %v302 = vld [vmem:[%s1 + $0x2dc] sm:$0xf]
    %v303 = vld [vmem:[%s1 + $0x2e0] sm:$0xf]
    %v304 = vld [vmem:[%s1 + $0x2e4] sm:$0xf]
    %v305 = vld [vmem:[%s1 + $0x2e8] sm:$0xf]
    %v306 = vld [vmem:[%s1 + $0x2ec] sm:$0xf]
    %v307 = vld [vmem:[%s1 + $0x2f0] sm:$0xf]
    %v308 = vld [vmem:[%s1 + $0x2f4] sm:$0xf]
    %v309 = vld [vmem:[%s1 + $0x2f8] sm:$0xf]
    %v310 = vld [vmem:[%s1 + $0x2fc] sm:$0xf]
    %v311 = vld [vmem:[%s1 + $0x300] sm:$0xf]
    %v312 = vld [vmem:[%s1 + $0x304] sm:$0xf]
    %v313 = vld [vmem:[%s1 + $0x308] sm:$0xf]
    %v314 = vld [vmem:[%s1 + $0x30c] sm:$0xf]
    %v315 = vld [vmem:[%s1 + $0x310] sm:$0xf]
    %v316 = vld [vmem:[%s1 + $0x314] sm:$0xf]
    %v317 = vld [vmem:[%s1 + $0x318] sm:$0xf]
    %v318 = vld [vmem:[%s1 + $0x31c] sm:$0xf]
    %v319 = vld [vmem:[%s1 + $0x320] sm:$0xf]
    %v320 = vld [vmem:[%s1 + $0x324] sm:$0xf]
    %v321 = vld [vmem:[%s1 + $0x328] sm:$0xf]
    %v322 = vld [vmem:[%s1 + $0x32c] sm:$0xf]
    %v323 = vld [vmem:[%s1 + $0x330] sm:$0xf]
    %v324 = vld [vmem:[%s1 + $0x334] sm:$0xf]
    %v325 = vld [vmem:[%s1 + $0x338] sm:$0xf]
    %v326 = vld [vmem:[%s1 + $0x33c] sm:$0xf]
    %v327 = vld [vmem:[%s1 + $0x340] sm:$0xf]
    %v328 = vld [vmem:[%s1 + $0x344] sm:$0xf]
    %v329 = vld [vmem:[%s1 + $0x348] sm:$0xf]
    %v330 = vld [vmem:[%s1 + $0x34c] sm:$0xf]
    %v331 = vld [vmem:[%s1 + $0x350] sm:$0xf]
    %v332 = vld [vmem:[%s1 + $0x354] sm:$0xf]
    %v333 = vld [vmem:[%s1 + $0x358] sm:$0xf]
    %v334 = vld [vmem:[%s1 + $0x35c] sm:$0xf]
    %v335 = vld [vmem:[%s1 + $0x360] sm:$0xf]
    %v336 = vld [vmem:[%s1 + $0x364] sm:$0xf]
    %v337 = vld [vmem:[%s1 + $0x368] sm:$0xf]
    %v338 = vld [vmem:[%s1 + $0x36c] sm:$0xf]
    %v339 = vld [vmem:[%s1 + $0x370] sm:$0xf]
    %v340 = vld [vmem:[%s1 + $0x374] sm:$0xf]
    %v341 = vld [vmem:[%s1 + $0x378] sm:$0xf]
    %v342 = vld [vmem:[%s1 + $0x37c] sm:$0xf]
    %v343 = vld [vmem:[%s1 + $0x380] sm:$0xf]
    %v344 = vld [vmem:[%s1 + $0x384] sm:$0xf]
    %v345 = vld [vmem:[%s1 + $0x388] sm:$0xf]
    %v346 = vld [vmem:[%s1 + $0x38c] sm:$0xf]
    %v347 = vld [vmem:[%s1 + $0x390] sm:$0xf]
    %v348 = vld [vmem:[%s1 + $0x394] sm:$0xf]
    %v349 = vld [vmem:[%s1 + $0x398] sm:$0xf]
    %v350 = vld [vmem:[%s1 + $0x39c] sm:$0xf]
    %v351 = vld [vmem:[%s1 + $0x3a0] sm:$0xf]
    %v352 = vld [vmem:[%s1 + $0x3a4] sm:$0xf]
    %v353 = vld [vmem:[%s1 + $0x3a8] sm:$0xf]
    %v354 = vld [vmem:[%s1 + $0x3ac] sm:$0xf]
    %v355 = vld [vmem:[%s1 + $0x3b0] sm:$0xf]
    %v356 = vld [vmem:[%s1 + $0x3b4] sm:$0xf]
    %v357 = vld [vmem:[%s1 + $0x3b8] sm:$0xf]
    %v358 = vld [vmem:[%s1 + $0x3bc] sm:$0xf]
    %v359 = vld [vmem:[%s1 + $0x3c0] sm:$0xf]
    %v360 = vld [vmem:[%s1 + $0x3c4] sm:$0xf]
    %v361 = vld [vmem:[%s1 + $0x3c8] sm:$0xf]
    %v362 = vld [vmem:[%s1 + $0x3cc] sm:$0xf]
    %v363 = vld [vmem:[%s1 + $0x3d0] sm:$0xf]
    %v364 = vld [vmem:[%s1 + $0x3d4] sm:$0xf]
    %v365 = vld [vmem:[%s1 + $0x3d8] sm:$0xf]
    %v366 = vld [vmem:[%s1 + $0x3dc] sm:$0xf]
    %v367 = vld [vmem:[%s1 + $0x3e0] sm:$0xf]
    %v368 = vld [vmem:[%s1 + $0x3e4] sm:$0xf]
    %v369 = vld [vmem:[%s1 + $0x3e8] sm:$0xf]
    %v370 = vld [vmem:[%s1 + $0x3ec] sm:$0xf]
    %v371 = vld [vmem:[%s1 + $0x3f0] sm:$0xf]
    %v372 = vld [vmem:[%s1 + $0x3f4] sm:$0xf]
    %v373 = vld [vmem:[%s1 + $0x3f8] sm:$0xf]
    %v374 = vld [vmem:[%s1 + $0x3fc] sm:$0xf]
    %v375 = vld [vmem:[%s1 + $0x400] sm:$0xf]
    %v376 = vld [vmem:[%s1 + $0x404] sm:$0xf]
    %v377 = vld [vmem:[%s1 + $0x408] sm:$0xf]
    %v378 = vld [vmem:[%s1 + $0x40c] sm:$0xf]
    %v379 = vld [vmem:[%s1 + $0x410] sm:$0xf]
    %v380 = vld [vmem:[%s1 + $0x414] sm:$0xf]
    %v381 = vld [vmem:[%s1 + $0x418] sm:$0xf]
    %v382 = vld [vmem:[%s1 + $0x41c] sm:$0xf]
    %v383 = vld [vmem:[%s1 + $0x420] sm:$0xf]
    %v384 = vld [vmem:[%s1 + $0x424] sm:$0xf]
    %v385 = vld [vmem:[%s1 + $0x428] sm:$0xf]
    %v386 = vld [vmem:[%s1 + $0x42c] sm:$0xf]
    %v387 = vld [vmem:[%s1 + $0x430] sm:$0xf]
    %v388 = vld [vmem:[%s1 + $0x434] sm:$0xf]
    %v389 = vld [vmem:[%s1 + $0x438] sm:$0xf]
    %v390 = vld [vmem:[%s1 + $0x43c] sm:$0xf]
    %v391 = vld [vmem:[%s1 + $0x440] sm:$0xf]
    %v392 = vld [vmem:[%s1 + $0x444] sm:$0xf]
    %v393 = vld [vmem:[%s1 + $0x448] sm:$0xf]
    %v394 = vld [vmem:[%s1 + $0x44c] sm:$0xf]
    %v395 = vld [vmem:[%s1 + $0x450] sm:$0xf]
    %v396 = vld [vmem:[%s1 + $0x454] sm:$0xf]
    %v397 = vld [vmem:[%s1 + $0x458] sm:$0xf]
    %v398 = vld [vmem:[%s1 + $0x45c] sm:$0xf]
    %v399 = vld [vmem:[%s1 + $0x460] sm:$0xf]
    %v400 = vld [vmem:[%s1 + $0x464] sm:$0xf]
    %v401 = vld [vmem:[%s1 + $0x468] sm:$0xf]
    %v402 = vld [vmem:[%s1 + $0x46c] sm:$0xf]
    %v403 = vld [vmem:[%s1 + $0x470] sm:$0xf]
    %v404 = vld [vmem:[%s1 + $0x474] sm:$0xf]
    %v405 = vld [vmem:[%s1 + $0x478] sm:$0xf]
    %v406 = vld [vmem:[%s1 + $0x47c] sm:$0xf]
    %v407 = vld [vmem:[%s1 + $0x480] sm:$0xf]
    %v408 = vld [vmem:[%s1 + $0x484] sm:$0xf]
    %v409 = vld [vmem:[%s1 + $0x488] sm:$0xf]
    %v410 = vld [vmem:[%s1 + $0x48c] sm:$0xf]
    %v411 = vld [vmem:[%s1 + $0x490] sm:$0xf]
    %v412 = vld [vmem:[%s1 + $0x494] sm:$0xf]
    %v413 = vld [vmem:[%s1 + $0x498] sm:$0xf]
    %v414 = vld [vmem:[%s1 + $0x49c] sm:$0xf]
    %v415 = vld [vmem:[%s1 + $0x4a0] sm:$0xf]
    %v416 = vld [vmem:[%s1 + $0x4a4] sm:$0xf]
    %v417 = vld [vmem:[%s1 + $0x4a8] sm:$0xf]
    %v418 = vld [vmem:[%s1 + $0x4ac] sm:$0xf]
    %v419 = vld [vmem:[%s1 + $0x4b0] sm:$0xf]
    %v420 = vld [vmem:[%s1 + $0x4b4] sm:$0xf]
    %v421 = vld [vmem:[%s1 + $0x4b8] sm:$0xf]
    %v422 = vld [vmem:[%s1 + $0x4bc] sm:$0xf]
    %v423 = vld [vmem:[%s1 + $0x4c0] sm:$0xf]
    %v424 = vld [vmem:[%s1 + $0x4c4] sm:$0xf]
    %v425 = vld [vmem:[%s1 + $0x4c8] sm:$0xf]
    %v426 = vld [vmem:[%s1 + $0x4cc] sm:$0xf]
    %v427 = vld [vmem:[%s1 + $0x4d0] sm:$0xf]
    %v428 = vld [vmem:[%s1 + $0x4d4] sm:$0xf]
    %v429 = vld [vmem:[%s1 + $0x4d8] sm:$0xf]
    %v430 = vld [vmem:[%s1 + $0x4dc] sm:$0xf]
    %v431 = vld [vmem:[%s1 + $0x4e0] sm:$0xf]
    %v432 = vld [vmem:[%s1 + $0x4e4] sm:$0xf]
    %v433 = vld [vmem:[%s1 + $0x4e8] sm:$0xf]
    %v434 = vld [vmem:[%s1 + $0x4ec] sm:$0xf]
    %v435 = vld [vmem:[%s1 + $0x4f0] sm:$0xf]
    %v436 = vld [vmem:[%s1 + $0x4f4] sm:$0xf]
    %v437 = vld [vmem:[%s1 + $0x4f8] sm:$0xf]
    %v438 = vld [vmem:[%s1 + $0x4fc] sm:$0xf]
    %v439 = vld [vmem:[%s1 + $0x500] sm:$0xf]
    %v440 = vld [vmem:[%s1 + $0x504] sm:$0xf]
    %v441 = vld [vmem:[%s1 + $0x508] sm:$0xf]
    %v442 = vld [vmem:[%s1 + $0x50c] sm:$0xf]
    %v443 = vld [vmem:[%s1 + $0x510] sm:$0xf]
    %v444 = vld [vmem:[%s1 + $0x514] sm:$0xf]
    %v445 = vld [vmem:[%s1 + $0x518] sm:$0xf]
    %v446 = vld [vmem:[%s1 + $0x51c] sm:$0xf]
    %v447 = vld [vmem:[%s1 + $0x520] sm:$0xf]
    %v448 = vld [vmem:[%s1 + $0x524] sm:$0xf]
    %v449 = vld [vmem:[%s1 + $0x528] sm:$0xf]
    %v450 = vld [vmem:[%s1 + $0x52c] sm:$0xf]
    %v451 = vld [vmem:[%s1 + $0x530] sm:$0xf]
    %v452 = vld [vmem:[%s1 + $0x534] sm:$0xf]
    %v453 = vld [vmem:[%s1 + $0x538] sm:$0xf]
    %v454 = vld [vmem:[%s1 + $0x53c] sm:$0xf]
    %v455 = vld [vmem:[%s1 + $0x540] sm:$0xf]
    %v456 = vld [vmem:[%s1 + $0x544] sm:$0xf]
    %v457 = vld [vmem:[%s1 + $0x548] sm:$0xf]
    %v458 = vld [vmem:[%s1 + $0x54c] sm:$0xf]
    %v459 = vld [vmem:[%s1 + $0x550] sm:$0xf]
    %v460 = vld [vmem:[%s1 + $0x554] sm:$0xf]
    %v461 = vld [vmem:[%s1 + $0x558] sm:$0xf]
    %v462 = vld [vmem:[%s1 + $0x55c] sm:$0xf]
    %v463 = vld [vmem:[%s1 + $0x560] sm:$0xf]
    %v464 = vld [vmem:[%s1 + $0x564] sm:$0xf]
    %v465 = vld [vmem:[%s1 + $0x568] sm:$0xf]
    %v466 = vld [vmem:[%s1 + $0x56c] sm:$0xf]
    %v467 = vld [vmem:[%s1 + $0x570] sm:$0xf]
    %v468 = vld [vmem:[%s1 + $0x574] sm:$0xf]
    %v469 = vld [vmem:[%s1 + $0x578] sm:$0xf]
    %v470 = vld [vmem:[%s1 + $0x57c] sm:$0xf]
    %v471 = vld [vmem:[%s1 + $0x580] sm:$0xf]
    %v472 = vld [vmem:[%s1 + $0x584] sm:$0xf]
    %v473 = vld [vmem:[%s1 + $0x588] sm:$0xf]
    %v474 = vld [vmem:[%s1 + $0x58c] sm:$0xf]
    %v475 = vld [vmem:[%s1 + $0x590] sm:$0xf]
    %v476 = vld [vmem:[%s1 + $0x594] sm:$0xf]
    %v477 = vld [vmem:[%s1 + $0x598] sm:$0xf]
    %v478 = vld [vmem:[%s1 + $0x59c] sm:$0xf]
    %v479 = vld [vmem:[%s1 + $0x5a0] sm:$0xf]
    %v480 = vld [vmem:[%s1 + $0x5a4] sm:$0xf]
    %v481 = vld [vmem:[%s1 + $0x5a8] sm:$0xf]
    %v482 = vld [vmem:[%s1 + $0x5ac] sm:$0xf]
    %v483 = vld [vmem:[%s1 + $0x5b0] sm:$0xf]
    %v484 = vld [vmem:[%s1 + $0x5b4] sm:$0xf]
    %v485 = vld [vmem:[%s1 + $0x5b8] sm:$0xf]
    %v486 = vld [vmem:[%s1 + $0x5bc] sm:$0xf]
    %v487 = vld [vmem:[%s1 + $0x5c0] sm:$0xf]
    %v488 = vld [vmem:[%s1 + $0x5c4] sm:$0xf]
    %v489 = vld [vmem:[%s1 + $0x5c8] sm:$0xf]
    %v490 = vld [vmem:[%s1 + $0x5cc] sm:$0xf]
    %v491 = vld [vmem:[%s1 + $0x5d0] sm:$0xf]
    %v492 = vld [vmem:[%s1 + $0x5d4] sm:$0xf]
    %v493 = vld [vmem:[%s1 + $0x5d8] sm:$0xf]
    %v494 = vld [vmem:[%s1 + $0x5dc] sm:$0xf]
    %v495 = vld [vmem:[%s1 + $0x5e0] sm:$0xf]
    %v496 = vld [vmem:[%s1 + $0x5e4] sm:$0xf]
    %v497 = vld [vmem:[%s1 + $0x5e8] sm:$0xf]
    %v498 = vld [vmem:[%s1 + $0x5ec] sm:$0xf]
    %v499 = vld [vmem:[%s1 + $0x5f0] sm:$0xf]
    %v500 = vld [vmem:[%s1 + $0x5f4] sm:$0xf]
    %v501 = vld [vmem:[%s1 + $0x5f8] sm:$0xf]
    %v502 = vld [vmem:[%s1 + $0x5fc] sm:$0xf]
    %v503 = vld [vmem:[%s1 + $0x600] sm:$0xf]
    %v504 = vld [vmem:[%s1 + $0x604] sm:$0xf]
    %v505 = vld [vmem:[%s1 + $0x608] sm:$0xf]
    %v506 = vld [vmem:[%s1 + $0x60c] sm:$0xf]
    %v507 = vld [vmem:[%s1 + $0x610] sm:$0xf]
    %v508 = vld [vmem:[%s1 + $0x614] sm:$0xf]
    %v509 = vld [vmem:[%s1 + $0x618] sm:$0xf]
    %v510 = vld [vmem:[%s1 + $0x61c] sm:$0xf]
    %v511 = vld [vmem:[%s2] sm:$0x1]
    %v513 = vperm.slane %v511, 0
    %v907 = vunpack.c.l.b16 %v119
    %v908 = vunpack.c.l.b16 %v120
    %v909 = vunpack.c.l.b16 %v121
    %v910 = vunpack.c.l.b16 %v122
    %v911 = vunpack.c.l.b16 %v123
    %v912 = vunpack.c.l.b16 %v124
    %v913 = vunpack.c.l.b16 %v125
    %v914 = vunpack.c.l.b16 %v126
    %v915 = vunpack.c.l.b16 %v127
    %v916 = vunpack.c.l.b16 %v128
    %v917 = vunpack.c.l.b16 %v129
    %v918 = vunpack.c.l.b16 %v130
    %v919 = vunpack.c.l.b16 %v131
    %v920 = vunpack.c.l.b16 %v132
    %v921 = vunpack.c.l.b16 %v133
    %v922 = vunpack.c.l.b16 %v134
    %v923 = vunpack.c.l.b16 %v135
    %v924 = vunpack.c.l.b16 %v136
    %v925 = vunpack.c.l.b16 %v137
    %v926 = vunpack.c.l.b16 %v138
    %v927 = vunpack.c.l.b16 %v139
    %v928 = vunpack.c.l.b16 %v140
    %v929 = vunpack.c.l.b16 %v141
    %v930 = vunpack.c.l.b16 %v142
    %v931 = vunpack.c.l.b16 %v143
    %v932 = vunpack.c.l.b16 %v144
    %v933 = vunpack.c.l.b16 %v145
    %v934 = vunpack.c.l.b16 %v146
    %v935 = vunpack.c.l.b16 %v147
    %v936 = vunpack.c.l.b16 %v148
    %v937 = vunpack.c.l.b16 %v149
    %v938 = vunpack.c.l.b16 %v150
    %v939 = vunpack.c.l.b16 %v151
    %v940 = vunpack.c.l.b16 %v152
    %v941 = vunpack.c.l.b16 %v153
    %v942 = vunpack.c.l.b16 %v154
    %v943 = vunpack.c.l.b16 %v155
    %v944 = vunpack.c.l.b16 %v156
    %v945 = vunpack.c.l.b16 %v157
    %v946 = vunpack.c.l.b16 %v158
    %v947 = vunpack.c.l.b16 %v159
    %v948 = vunpack.c.l.b16 %v160
    %v949 = vunpack.c.l.b16 %v161
    %v950 = vunpack.c.l.b16 %v162
    %v951 = vunpack.c.l.b16 %v163
    %v952 = vunpack.c.l.b16 %v164
    %v953 = vunpack.c.l.b16 %v165
    %v954 = vunpack.c.l.b16 %v166
    %v955 = vunpack.c.l.b16 %v167
    %v956 = vunpack.c.l.b16 %v168
    %v957 = vunpack.c.l.b16 %v169
    %v958 = vunpack.c.l.b16 %v170
    %v959 = vunpack.c.l.b16 %v171
    %v960 = vunpack.c.l.b16 %v172
    %v961 = vunpack.c.l.b16 %v173
    %v962 = vunpack.c.l.b16 %v174
    %v963 = vunpack.c.l.b16 %v175
    %v964 = vunpack.c.l.b16 %v176
    %v965 = vunpack.c.l.b16 %v177
    %v966 = vunpack.c.l.b16 %v178
    %v967 = vunpack.c.l.b16 %v179
    %v968 = vunpack.c.l.b16 %v180
    %v969 = vunpack.c.l.b16 %v181
    %v970 = vunpack.c.l.b16 %v182
    %v971 = vunpack.c.l.b16 %v183
    %v972 = vunpack.c.l.b16 %v184
    %v973 = vunpack.c.l.b16 %v185
    %v974 = vunpack.c.l.b16 %v186
    %v975 = vunpack.c.l.b16 %v187
    %v976 = vunpack.c.l.b16 %v188
    %v977 = vunpack.c.l.b16 %v189
    %v978 = vunpack.c.l.b16 %v190
    %v979 = vunpack.c.l.b16 %v191
    %v980 = vunpack.c.l.b16 %v192
    %v981 = vunpack.c.l.b16 %v193
    %v982 = vunpack.c.l.b16 %v194
    %v983 = vunpack.c.l.b16 %v195
    %v984 = vunpack.c.l.b16 %v196
    %v985 = vunpack.c.l.b16 %v197
    %v986 = vunpack.c.l.b16 %v198
    %v987 = vunpack.c.l.b16 %v199
    %v988 = vunpack.c.l.b16 %v200
    %v989 = vunpack.c.l.b16 %v201
    %v990 = vunpack.c.l.b16 %v202
    %v991 = vunpack.c.l.b16 %v203
    %v992 = vunpack.c.l.b16 %v204
    %v993 = vunpack.c.l.b16 %v205
    %v994 = vunpack.c.l.b16 %v206
    %v995 = vunpack.c.l.b16 %v207
    %v996 = vunpack.c.l.b16 %v208
    %v997 = vunpack.c.l.b16 %v209
    %v998 = vunpack.c.l.b16 %v210
    %v999 = vunpack.c.l.b16 %v211
    %v1000 = vunpack.c.l.b16 %v212
    %v1001 = vunpack.c.l.b16 %v213
    %v1002 = vunpack.c.l.b16 %v214
    %v1003 = vunpack.c.l.b16 %v215
    %v1004 = vunpack.c.l.b16 %v216
    %v1005 = vunpack.c.l.b16 %v217
    %v1006 = vunpack.c.l.b16 %v218
    %v1007 = vunpack.c.l.b16 %v219
    %v1008 = vunpack.c.l.b16 %v220
    %v1009 = vunpack.c.l.b16 %v221
    %v1010 = vunpack.c.l.b16 %v222
    %v1011 = vunpack.c.l.b16 %v223
    %v1012 = vunpack.c.l.b16 %v224
    %v1013 = vunpack.c.l.b16 %v225
    %v1014 = vunpack.c.l.b16 %v226
    %v1015 = vunpack.c.l.b16 %v227
    %v1016 = vunpack.c.l.b16 %v228
    %v1017 = vunpack.c.l.b16 %v229
    %v1018 = vunpack.c.l.b16 %v230
    %v1019 = vunpack.c.l.b16 %v231
    %v1020 = vunpack.c.l.b16 %v232
    %v1021 = vunpack.c.l.b16 %v233
    %v1022 = vunpack.c.l.b16 %v234
    %v1023 = vunpack.c.l.b16 %v235
    %v1024 = vunpack.c.l.b16 %v236
    %v1025 = vunpack.c.l.b16 %v237
    %v1026 = vunpack.c.l.b16 %v238
    %v1027 = vunpack.c.l.b16 %v239
    %v1028 = vunpack.c.l.b16 %v240
    %v1029 = vunpack.c.l.b16 %v241
    %v1030 = vunpack.c.l.b16 %v242
    %v1031 = vunpack.c.l.b16 %v243
    %v1032 = vunpack.c.l.b16 %v244
    %v1033 = vunpack.c.l.b16 %v245
    %v1034 = vunpack.c.l.b16 %v246
    %v1035 = vunpack.c.l.b16 %v247
    %v1036 = vunpack.c.l.b16 %v248
    %v1037 = vunpack.c.l.b16 %v249
    %v1038 = vunpack.c.l.b16 %v250
    %v1039 = vunpack.c.l.b16 %v251
    %v1040 = vunpack.c.l.b16 %v252
    %v1041 = vunpack.c.l.b16 %v253
    %v1042 = vunpack.c.l.b16 %v254
    %v1043 = vunpack.c.l.b16 %v255
    %v1044 = vunpack.c.l.b16 %v256
    %v1045 = vunpack.c.l.b16 %v257
    %v1046 = vunpack.c.l.b16 %v258
    %v1047 = vunpack.c.l.b16 %v259
    %v1048 = vunpack.c.l.b16 %v260
    %v1049 = vunpack.c.l.b16 %v261
    %v1050 = vunpack.c.l.b16 %v262
    %v1051 = vunpack.c.l.b16 %v263
    %v1052 = vunpack.c.l.b16 %v264
    %v1053 = vunpack.c.l.b16 %v265
    %v1054 = vunpack.c.l.b16 %v266
    %v1055 = vunpack.c.l.b16 %v267
    %v1056 = vunpack.c.l.b16 %v268
    %v1057 = vunpack.c.l.b16 %v269
    %v1058 = vunpack.c.l.b16 %v270
    %v1059 = vunpack.c.l.b16 %v271
    %v1060 = vunpack.c.l.b16 %v272
    %v1061 = vunpack.c.l.b16 %v273
    %v1062 = vunpack.c.l.b16 %v274
    %v1063 = vunpack.c.l.b16 %v275
    %v1064 = vunpack.c.l.b16 %v276
    %v1065 = vunpack.c.l.b16 %v277
    %v1066 = vunpack.c.l.b16 %v278
    %v1067 = vunpack.c.l.b16 %v279
    %v1068 = vunpack.c.l.b16 %v280
    %v1069 = vunpack.c.l.b16 %v281
    %v1070 = vunpack.c.l.b16 %v282
    %v1071 = vunpack.c.l.b16 %v283
    %v1072 = vunpack.c.l.b16 %v284
    %v1073 = vunpack.c.l.b16 %v285
    %v1074 = vunpack.c.l.b16 %v286
    %v1075 = vunpack.c.l.b16 %v287
    %v1076 = vunpack.c.l.b16 %v288
    %v1077 = vunpack.c.l.b16 %v289
    %v1078 = vunpack.c.l.b16 %v290
    %v1079 = vunpack.c.l.b16 %v291
    %v1080 = vunpack.c.l.b16 %v292
    %v1081 = vunpack.c.l.b16 %v293
    %v1082 = vunpack.c.l.b16 %v294
    %v1083 = vunpack.c.l.b16 %v295
    %v1084 = vunpack.c.l.b16 %v296
    %v1085 = vunpack.c.l.b16 %v297
    %v1086 = vunpack.c.l.b16 %v298
    %v1087 = vunpack.c.l.b16 %v299
    %v1088 = vunpack.c.l.b16 %v300
    %v1089 = vunpack.c.l.b16 %v301
    %v1090 = vunpack.c.l.b16 %v302
    %v1091 = vunpack.c.l.b16 %v303
    %v1092 = vunpack.c.l.b16 %v304
    %v1093 = vunpack.c.l.b16 %v305
    %v1094 = vunpack.c.l.b16 %v306
    %v1095 = vunpack.c.l.b16 %v307
    %v1096 = vunpack.c.l.b16 %v308
    %v1097 = vunpack.c.l.b16 %v309
    %v1098 = vunpack.c.l.b16 %v310
    %v1099 = vunpack.c.l.b16 %v311
    %v1100 = vunpack.c.l.b16 %v312
    %v1101 = vunpack.c.l.b16 %v313
    %v1102 = vunpack.c.l.b16 %v314
    %v1103 = vunpack.c.l.b16 %v315
    %v1104 = vunpack.c.l.b16 %v316
    %v1105 = vunpack.c.l.b16 %v317
    %v1106 = vunpack.c.l.b16 %v318
    %v1107 = vunpack.c.l.b16 %v319
    %v1108 = vunpack.c.l.b16 %v320
    %v1109 = vunpack.c.l.b16 %v321
    %v1110 = vunpack.c.l.b16 %v322
    %v1111 = vunpack.c.l.b16 %v323
    %v1112 = vunpack.c.l.b16 %v324
    %v1113 = vunpack.c.l.b16 %v325
    %v1114 = vunpack.c.l.b16 %v326
    %v1115 = vunpack.c.l.b16 %v327
    %v1116 = vunpack.c.l.b16 %v328
    %v1117 = vunpack.c.l.b16 %v329
    %v1118 = vunpack.c.l.b16 %v330
    %v1119 = vunpack.c.l.b16 %v331
    %v1120 = vunpack.c.l.b16 %v332
    %v1121 = vunpack.c.l.b16 %v333
    %v1122 = vunpack.c.l.b16 %v334
    %v1123 = vunpack.c.l.b16 %v335
    %v1124 = vunpack.c.l.b16 %v336
    %v1125 = vunpack.c.l.b16 %v337
    %v1126 = vunpack.c.l.b16 %v338
    %v1127 = vunpack.c.l.b16 %v339
    %v1128 = vunpack.c.l.b16 %v340
    %v1129 = vunpack.c.l.b16 %v341
    %v1130 = vunpack.c.l.b16 %v342
    %v1131 = vunpack.c.l.b16 %v343
    %v1132 = vunpack.c.l.b16 %v344
    %v1133 = vunpack.c.l.b16 %v345
    %v1134 = vunpack.c.l.b16 %v346
    %v1135 = vunpack.c.l.b16 %v347
    %v1136 = vunpack.c.l.b16 %v348
    %v1137 = vunpack.c.l.b16 %v349
    %v1138 = vunpack.c.l.b16 %v350
    %v1139 = vunpack.c.l.b16 %v351
    %v1140 = vunpack.c.l.b16 %v352
    %v1141 = vunpack.c.l.b16 %v353
    %v1142 = vunpack.c.l.b16 %v354
    %v1143 = vunpack.c.l.b16 %v355
    %v1144 = vunpack.c.l.b16 %v356
    %v1145 = vunpack.c.l.b16 %v357
    %v1146 = vunpack.c.l.b16 %v358
    %v1147 = vunpack.c.l.b16 %v359
    %v1148 = vunpack.c.l.b16 %v360
    %v1149 = vunpack.c.l.b16 %v361
    %v1150 = vunpack.c.l.b16 %v362
    %v1151 = vunpack.c.l.b16 %v363
    %v1152 = vunpack.c.l.b16 %v364
    %v1153 = vunpack.c.l.b16 %v365
    %v1154 = vunpack.c.l.b16 %v366
    %v1155 = vunpack.c.l.b16 %v367
    %v1156 = vunpack.c.l.b16 %v368
    %v1157 = vunpack.c.l.b16 %v369
    %v1158 = vunpack.c.l.b16 %v370
    %v1159 = vunpack.c.l.b16 %v371
    %v1160 = vunpack.c.l.b16 %v372
    %v1161 = vunpack.c.l.b16 %v373
    %v1162 = vunpack.c.l.b16 %v374
    %v1163 = vunpack.c.l.b16 %v375
    %v1164 = vunpack.c.l.b16 %v376
    %v1165 = vunpack.c.l.b16 %v377
    %v1166 = vunpack.c.l.b16 %v378
    %v1167 = vunpack.c.l.b16 %v379
    %v1168 = vunpack.c.l.b16 %v380
    %v1169 = vunpack.c.l.b16 %v381
    %v1170 = vunpack.c.l.b16 %v382
    %v1171 = vunpack.c.l.b16 %v383
    %v1172 = vunpack.c.l.b16 %v384
    %v1173 = vunpack.c.l.b16 %v385
    %v1174 = vunpack.c.l.b16 %v386
    %v1175 = vunpack.c.l.b16 %v387
    %v1176 = vunpack.c.l.b16 %v388
    %v1177 = vunpack.c.l.b16 %v389
    %v1178 = vunpack.c.l.b16 %v390
    %v1179 = vunpack.c.l.b16 %v391
    %v1180 = vunpack.c.l.b16 %v392
    %v1181 = vunpack.c.l.b16 %v393
    %v1182 = vunpack.c.l.b16 %v394
    %v1183 = vunpack.c.l.b16 %v395
    %v1184 = vunpack.c.l.b16 %v396
    %v1185 = vunpack.c.l.b16 %v397
    %v1186 = vunpack.c.l.b16 %v398
    %v1187 = vunpack.c.l.b16 %v399
    %v1188 = vunpack.c.l.b16 %v400
    %v1189 = vunpack.c.l.b16 %v401
    %v1190 = vunpack.c.l.b16 %v402
    %v1191 = vunpack.c.l.b16 %v403
    %v1192 = vunpack.c.l.b16 %v404
    %v1193 = vunpack.c.l.b16 %v405
    %v1194 = vunpack.c.l.b16 %v406
    %v1195 = vunpack.c.l.b16 %v407
    %v1196 = vunpack.c.l.b16 %v408
    %v1197 = vunpack.c.l.b16 %v409
    %v1198 = vunpack.c.l.b16 %v410
    %v1199 = vunpack.c.l.b16 %v411
    %v1200 = vunpack.c.l.b16 %v412
    %v1201 = vunpack.c.l.b16 %v413
    %v1202 = vunpack.c.l.b16 %v414
    %v1203 = vunpack.c.l.b16 %v415
    %v1204 = vunpack.c.l.b16 %v416
    %v1205 = vunpack.c.l.b16 %v417
    %v1206 = vunpack.c.l.b16 %v418
    %v1207 = vunpack.c.l.b16 %v419
    %v1208 = vunpack.c.l.b16 %v420
    %v1209 = vunpack.c.l.b16 %v421
    %v1210 = vunpack.c.l.b16 %v422
    %v1211 = vunpack.c.l.b16 %v423
    %v1212 = vunpack.c.l.b16 %v424
    %v1213 = vunpack.c.l.b16 %v425
    %v1214 = vunpack.c.l.b16 %v426
    %v1215 = vunpack.c.l.b16 %v427
    %v1216 = vunpack.c.l.b16 %v428
    %v1217 = vunpack.c.l.b16 %v429
    %v1218 = vunpack.c.l.b16 %v430
    %v1219 = vunpack.c.l.b16 %v431
    %v1220 = vunpack.c.l.b16 %v432
    %v1221 = vunpack.c.l.b16 %v433
    %v1222 = vunpack.c.l.b16 %v434
    %v1223 = vunpack.c.l.b16 %v435
    %v1224 = vunpack.c.l.b16 %v436
    %v1225 = vunpack.c.l.b16 %v437
    %v1226 = vunpack.c.l.b16 %v438
    %v1227 = vunpack.c.l.b16 %v439
    %v1228 = vunpack.c.l.b16 %v440
    %v1229 = vunpack.c.l.b16 %v441
    %v1230 = vunpack.c.l.b16 %v442
    %v1231 = vunpack.c.l.b16 %v443
    %v1232 = vunpack.c.l.b16 %v444
    %v1233 = vunpack.c.l.b16 %v445
    %v1234 = vunpack.c.l.b16 %v446
    %v1235 = vunpack.c.l.b16 %v447
    %v1236 = vunpack.c.l.b16 %v448
    %v1237 = vunpack.c.l.b16 %v449
    %v1238 = vunpack.c.l.b16 %v450
    %v1239 = vunpack.c.l.b16 %v451
    %v1240 = vunpack.c.l.b16 %v452
    %v1241 = vunpack.c.l.b16 %v453
    %v1242 = vunpack.c.l.b16 %v454
    %v1243 = vunpack.c.l.b16 %v455
    %v1244 = vunpack.c.l.b16 %v456
    %v1245 = vunpack.c.l.b16 %v457
    %v1246 = vunpack.c.l.b16 %v458
    %v1247 = vunpack.c.l.b16 %v459
    %v1248 = vunpack.c.l.b16 %v460
    %v1249 = vunpack.c.l.b16 %v461
    %v1250 = vunpack.c.l.b16 %v462
    %v1251 = vunpack.c.l.b16 %v463
    %v1252 = vunpack.c.l.b16 %v464
    %v1253 = vunpack.c.l.b16 %v465
    %v1254 = vunpack.c.l.b16 %v466
    %v1255 = vunpack.c.l.b16 %v467
    %v1256 = vunpack.c.l.b16 %v468
    %v1257 = vunpack.c.l.b16 %v469
    %v1258 = vunpack.c.l.b16 %v470
    %v1259 = vunpack.c.l.b16 %v471
    %v1260 = vunpack.c.l.b16 %v472
    %v1261 = vunpack.c.l.b16 %v473
    %v1262 = vunpack.c.l.b16 %v474
    %v1263 = vunpack.c.l.b16 %v475
    %v1264 = vunpack.c.l.b16 %v476
    %v1265 = vunpack.c.l.b16 %v477
    %v1266 = vunpack.c.l.b16 %v478
    %v1267 = vunpack.c.l.b16 %v479
    %v1268 = vunpack.c.l.b16 %v480
    %v1269 = vunpack.c.l.b16 %v481
    %v1270 = vunpack.c.l.b16 %v482
    %v1271 = vunpack.c.l.b16 %v483
    %v1272 = vunpack.c.l.b16 %v484
    %v1273 = vunpack.c.l.b16 %v485
    %v1274 = vunpack.c.l.b16 %v486
    %v1275 = vunpack.c.l.b16 %v487
    %v1276 = vunpack.c.l.b16 %v488
    %v1277 = vunpack.c.l.b16 %v489
    %v1278 = vunpack.c.l.b16 %v490
    %v1279 = vunpack.c.l.b16 %v491
    %v1280 = vunpack.c.l.b16 %v492
    %v1281 = vunpack.c.l.b16 %v493
    %v1282 = vunpack.c.l.b16 %v494
    %v1283 = vunpack.c.l.b16 %v495
    %v1284 = vunpack.c.l.b16 %v496
    %v1285 = vunpack.c.l.b16 %v497
    %v1286 = vunpack.c.l.b16 %v498
    %v1287 = vunpack.c.l.b16 %v499
    %v1288 = vunpack.c.l.b16 %v500
    %v1289 = vunpack.c.l.b16 %v501
    %v1290 = vunpack.c.l.b16 %v502
    %v1291 = vunpack.c.l.b16 %v503
    %v1292 = vunpack.c.l.b16 %v504
    %v1293 = vunpack.c.l.b16 %v505
    %v1294 = vunpack.c.l.b16 %v506
    %v1295 = vunpack.c.l.b16 %v507
    %v1296 = vunpack.c.l.b16 %v508
    %v1297 = vunpack.c.l.b16 %v509
    %v1298 = vunpack.c.l.b16 %v510
    %v1299 = vpack.c.b16 %v908, %v907
    %v1300 = vpack.c.b16 %v910, %v909
    %v1301 = vpack.c.b16 %v912, %v911
    %v1302 = vpack.c.b16 %v914, %v913
    %v1303 = vpack.c.b16 %v916, %v915
    %v1304 = vpack.c.b16 %v918, %v917
    %v1305 = vpack.c.b16 %v920, %v919
    %v1306 = vpack.c.b16 %v922, %v921
    %v1307 = vpack.c.b16 %v924, %v923
    %v1308 = vpack.c.b16 %v926, %v925
    %v1309 = vpack.c.b16 %v928, %v927
    %v1310 = vpack.c.b16 %v930, %v929
    %v1311 = vpack.c.b16 %v932, %v931
    %v1312 = vpack.c.b16 %v934, %v933
    %v1313 = vpack.c.b16 %v936, %v935
    %v1314 = vpack.c.b16 %v938, %v937
    %v1315 = vpack.c.b16 %v940, %v939
    %v1316 = vpack.c.b16 %v942, %v941
    %v1317 = vpack.c.b16 %v944, %v943
    %v1318 = vpack.c.b16 %v946, %v945
    %v1319 = vpack.c.b16 %v948, %v947
    %v1320 = vpack.c.b16 %v950, %v949
    %v1321 = vpack.c.b16 %v952, %v951
    %v1322 = vpack.c.b16 %v954, %v953
    %v1323 = vpack.c.b16 %v956, %v955
    %v1324 = vpack.c.b16 %v958, %v957
    %v1325 = vpack.c.b16 %v960, %v959
    %v1326 = vpack.c.b16 %v962, %v961
    %v1327 = vpack.c.b16 %v964, %v963
    %v1328 = vpack.c.b16 %v966, %v965
    %v1329 = vpack.c.b16 %v968, %v967
    %v1330 = vpack.c.b16 %v970, %v969
    %v1331 = vpack.c.b16 %v972, %v971
    %v1332 = vpack.c.b16 %v974, %v973
    %v1333 = vpack.c.b16 %v976, %v975
    %v1334 = vpack.c.b16 %v978, %v977
    %v1335 = vpack.c.b16 %v980, %v979
    %v1336 = vpack.c.b16 %v982, %v981
    %v1337 = vpack.c.b16 %v984, %v983
    %v1338 = vpack.c.b16 %v986, %v985
    %v1339 = vpack.c.b16 %v988, %v987
    %v1340 = vpack.c.b16 %v990, %v989
    %v1341 = vpack.c.b16 %v992, %v991
    %v1342 = vpack.c.b16 %v994, %v993
    %v1343 = vpack.c.b16 %v996, %v995
    %v1344 = vpack.c.b16 %v998, %v997
    %v1345 = vpack.c.b16 %v1000, %v999
    %v1346 = vpack.c.b16 %v1002, %v1001
    %v1347 = vpack.c.b16 %v1004, %v1003
    %v1348 = vpack.c.b16 %v1006, %v1005
    %v1349 = vpack.c.b16 %v1008, %v1007
    %v1350 = vpack.c.b16 %v1010, %v1009
    %v1351 = vpack.c.b16 %v1012, %v1011
    %v1352 = vpack.c.b16 %v1014, %v1013
    %v1353 = vpack.c.b16 %v1016, %v1015
    %v1354 = vpack.c.b16 %v1018, %v1017
    %v1355 = vpack.c.b16 %v1020, %v1019
    %v1356 = vpack.c.b16 %v1022, %v1021
    %v1357 = vpack.c.b16 %v1024, %v1023
    %v1358 = vpack.c.b16 %v1026, %v1025
    %v1359 = vpack.c.b16 %v1028, %v1027
    %v1360 = vpack.c.b16 %v1030, %v1029
    %v1361 = vpack.c.b16 %v1032, %v1031
    %v1362 = vpack.c.b16 %v1034, %v1033
    %v1363 = vpack.c.b16 %v1036, %v1035
    %v1364 = vpack.c.b16 %v1038, %v1037
    %v1365 = vpack.c.b16 %v1040, %v1039
    %v1366 = vpack.c.b16 %v1042, %v1041
    %v1367 = vpack.c.b16 %v1044, %v1043
    %v1368 = vpack.c.b16 %v1046, %v1045
    %v1369 = vpack.c.b16 %v1048, %v1047
    %v1370 = vpack.c.b16 %v1050, %v1049
    %v1371 = vpack.c.b16 %v1052, %v1051
    %v1372 = vpack.c.b16 %v1054, %v1053
    %v1373 = vpack.c.b16 %v1056, %v1055
    %v1374 = vpack.c.b16 %v1058, %v1057
    %v1375 = vpack.c.b16 %v1060, %v1059
    %v1376 = vpack.c.b16 %v1062, %v1061
    %v1377 = vpack.c.b16 %v1064, %v1063
    %v1378 = vpack.c.b16 %v1066, %v1065
    %v1379 = vpack.c.b16 %v1068, %v1067
    %v1380 = vpack.c.b16 %v1070, %v1069
    %v1381 = vpack.c.b16 %v1072, %v1071
    %v1382 = vpack.c.b16 %v1074, %v1073
    %v1383 = vpack.c.b16 %v1076, %v1075
    %v1384 = vpack.c.b16 %v1078, %v1077
    %v1385 = vpack.c.b16 %v1080, %v1079
    %v1386 = vpack.c.b16 %v1082, %v1081
    %v1387 = vpack.c.b16 %v1084, %v1083
    %v1388 = vpack.c.b16 %v1086, %v1085
    %v1389 = vpack.c.b16 %v1088, %v1087
    %v1390 = vpack.c.b16 %v1090, %v1089
    %v1391 = vpack.c.b16 %v1092, %v1091
    %v1392 = vpack.c.b16 %v1094, %v1093
    %v1393 = vpack.c.b16 %v1096, %v1095
    %v1394 = vpack.c.b16 %v1098, %v1097
    %v1395 = vpack.c.b16 %v1100, %v1099
    %v1396 = vpack.c.b16 %v1102, %v1101
    %v1397 = vpack.c.b16 %v1104, %v1103
    %v1398 = vpack.c.b16 %v1106, %v1105
    %v1399 = vpack.c.b16 %v1108, %v1107
    %v1400 = vpack.c.b16 %v1110, %v1109
    %v1401 = vpack.c.b16 %v1112, %v1111
    %v1402 = vpack.c.b16 %v1114, %v1113
    %v1403 = vpack.c.b16 %v1116, %v1115
    %v1404 = vpack.c.b16 %v1118, %v1117
    %v1405 = vpack.c.b16 %v1120, %v1119
    %v1406 = vpack.c.b16 %v1122, %v1121
    %v1407 = vpack.c.b16 %v1124, %v1123
    %v1408 = vpack.c.b16 %v1126, %v1125
    %v1409 = vpack.c.b16 %v1128, %v1127
    %v1410 = vpack.c.b16 %v1130, %v1129
    %v1411 = vpack.c.b16 %v1132, %v1131
    %v1412 = vpack.c.b16 %v1134, %v1133
    %v1413 = vpack.c.b16 %v1136, %v1135
    %v1414 = vpack.c.b16 %v1138, %v1137
    %v1415 = vpack.c.b16 %v1140, %v1139
    %v1416 = vpack.c.b16 %v1142, %v1141
    %v1417 = vpack.c.b16 %v1144, %v1143
    %v1418 = vpack.c.b16 %v1146, %v1145
    %v1419 = vpack.c.b16 %v1148, %v1147
    %v1420 = vpack.c.b16 %v1150, %v1149
    %v1421 = vpack.c.b16 %v1152, %v1151
    %v1422 = vpack.c.b16 %v1154, %v1153
    %v1423 = vpack.c.b16 %v1156, %v1155
    %v1424 = vpack.c.b16 %v1158, %v1157
    %v1425 = vpack.c.b16 %v1160, %v1159
    %v1426 = vpack.c.b16 %v1162, %v1161
    %v1427 = vpack.c.b16 %v1164, %v1163
    %v1428 = vpack.c.b16 %v1166, %v1165
    %v1429 = vpack.c.b16 %v1168, %v1167
    %v1430 = vpack.c.b16 %v1170, %v1169
    %v1431 = vpack.c.b16 %v1172, %v1171
    %v1432 = vpack.c.b16 %v1174, %v1173
    %v1433 = vpack.c.b16 %v1176, %v1175
    %v1434 = vpack.c.b16 %v1178, %v1177
    %v1435 = vpack.c.b16 %v1180, %v1179
    %v1436 = vpack.c.b16 %v1182, %v1181
    %v1437 = vpack.c.b16 %v1184, %v1183
    %v1438 = vpack.c.b16 %v1186, %v1185
    %v1439 = vpack.c.b16 %v1188, %v1187
    %v1440 = vpack.c.b16 %v1190, %v1189
    %v1441 = vpack.c.b16 %v1192, %v1191
    %v1442 = vpack.c.b16 %v1194, %v1193
    %v1443 = vpack.c.b16 %v1196, %v1195
    %v1444 = vpack.c.b16 %v1198, %v1197
    %v1445 = vpack.c.b16 %v1200, %v1199
    %v1446 = vpack.c.b16 %v1202, %v1201
    %v1447 = vpack.c.b16 %v1204, %v1203
    %v1448 = vpack.c.b16 %v1206, %v1205
    %v1449 = vpack.c.b16 %v1208, %v1207
    %v1450 = vpack.c.b16 %v1210, %v1209
    %v1451 = vpack.c.b16 %v1212, %v1211
    %v1452 = vpack.c.b16 %v1214, %v1213
    %v1453 = vpack.c.b16 %v1216, %v1215
    %v1454 = vpack.c.b16 %v1218, %v1217
    %v1455 = vpack.c.b16 %v1220, %v1219
    %v1456 = vpack.c.b16 %v1222, %v1221
    %v1457 = vpack.c.b16 %v1224, %v1223
    %v1458 = vpack.c.b16 %v1226, %v1225
    %v1459 = vpack.c.b16 %v1228, %v1227
    %v1460 = vpack.c.b16 %v1230, %v1229
    %v1461 = vpack.c.b16 %v1232, %v1231
    %v1462 = vpack.c.b16 %v1234, %v1233
    %v1463 = vpack.c.b16 %v1236, %v1235
    %v1464 = vpack.c.b16 %v1238, %v1237
    %v1465 = vpack.c.b16 %v1240, %v1239
    %v1466 = vpack.c.b16 %v1242, %v1241
    %v1467 = vpack.c.b16 %v1244, %v1243
    %v1468 = vpack.c.b16 %v1246, %v1245
    %v1469 = vpack.c.b16 %v1248, %v1247
    %v1470 = vpack.c.b16 %v1250, %v1249
    %v1471 = vpack.c.b16 %v1252, %v1251
    %v1472 = vpack.c.b16 %v1254, %v1253
    %v1473 = vpack.c.b16 %v1256, %v1255
    %v1474 = vpack.c.b16 %v1258, %v1257
    %v1475 = vpack.c.b16 %v1260, %v1259
    %v1476 = vpack.c.b16 %v1262, %v1261
    %v1477 = vpack.c.b16 %v1264, %v1263
    %v1478 = vpack.c.b16 %v1266, %v1265
    %v1479 = vpack.c.b16 %v1268, %v1267
    %v1480 = vpack.c.b16 %v1270, %v1269
    %v1481 = vpack.c.b16 %v1272, %v1271
    %v1482 = vpack.c.b16 %v1274, %v1273
    %v1483 = vpack.c.b16 %v1276, %v1275
    %v1484 = vpack.c.b16 %v1278, %v1277
    %v1485 = vpack.c.b16 %v1280, %v1279
    %v1486 = vpack.c.b16 %v1282, %v1281
    %v1487 = vpack.c.b16 %v1284, %v1283
    %v1488 = vpack.c.b16 %v1286, %v1285
    %v1489 = vpack.c.b16 %v1288, %v1287
    %v1490 = vpack.c.b16 %v1290, %v1289
    %v1491 = vpack.c.b16 %v1292, %v1291
    %v1492 = vpack.c.b16 %v1294, %v1293
    %v1493 = vpack.c.b16 %v1296, %v1295
    %v1494 = vpack.c.b16 %v1298, %v1297
    %vm1691 = vcmask 523264
    %v1693 = vsel %vm1691, %v118, 0
    %1695 = vmatpush.bf16.msra.mxu0 %v1306
    %1696 = vmatpush.bf16.msra.mxu0 %v1305
    %1697 = vmatpush.bf16.msra.mxu0 %v1304
    %1698 = vmatpush.bf16.msra.mxu0 %v1303
    %1699 = vmatpush.bf16.msra.mxu0 %v1302
    %1700 = vmatpush.bf16.msra.mxu0 %v1301
    %1701 = vmatpush.bf16.msra.mxu0 %v1300
    %1702 = vmatpush.bf16.msra.mxu0 %v1299
    %1703 = vmatmul.bf16.gmra.mxu0 %v94
    %v1704 = vpop.f32.mrf.mxu0
    %v1705 = vadd.f32 %v513, %v1704
    %v1706 = vpop.f32.mrf.mxu0
    %1707 = vdwg.mxu0
    %1708 = vmatpush.bf16.msra.mxu0 %v1314
    %1709 = vmatpush.bf16.msra.mxu0 %v1313
    %1710 = vmatpush.bf16.msra.mxu0 %v1312
    %1711 = vmatpush.bf16.msra.mxu0 %v1311
    %1712 = vmatpush.bf16.msra.mxu0 %v1310
    %1713 = vmatpush.bf16.msra.mxu0 %v1309
    %1714 = vmatpush.bf16.msra.mxu0 %v1308
    %1715 = vmatpush.bf16.msra.mxu0 %v1307
    %1716 = vmatmul.bf16.gmra.mxu0 %v95
    %v1717 = vpop.f32.mrf.mxu0
    %v1718 = vadd.f32 %v1705, %v1717
    %v1719 = vpop.f32.mrf.mxu0
    %1720 = vdwg.mxu0
    %1721 = vmatpush.bf16.msra.mxu0 %v1322
    %1722 = vmatpush.bf16.msra.mxu0 %v1321
    %1723 = vmatpush.bf16.msra.mxu0 %v1320
    %1724 = vmatpush.bf16.msra.mxu0 %v1319
    %1725 = vmatpush.bf16.msra.mxu0 %v1318
    %1726 = vmatpush.bf16.msra.mxu0 %v1317
    %1727 = vmatpush.bf16.msra.mxu0 %v1316
    %1728 = vmatpush.bf16.msra.mxu0 %v1315
    %1729 = vmatmul.bf16.gmra.mxu0 %v96
    %v1730 = vpop.f32.mrf.mxu0
    %v1731 = vadd.f32 %v1718, %v1730
    %v1732 = vpop.f32.mrf.mxu0
    %1733 = vdwg.mxu0
    %1734 = vmatpush.bf16.msra.mxu0 %v1330
    %1735 = vmatpush.bf16.msra.mxu0 %v1329
    %1736 = vmatpush.bf16.msra.mxu0 %v1328
    %1737 = vmatpush.bf16.msra.mxu0 %v1327
    %1738 = vmatpush.bf16.msra.mxu0 %v1326
    %1739 = vmatpush.bf16.msra.mxu0 %v1325
    %1740 = vmatpush.bf16.msra.mxu0 %v1324
    %1741 = vmatpush.bf16.msra.mxu0 %v1323
    %1742 = vmatmul.bf16.gmra.mxu0 %v97
    %v1743 = vpop.f32.mrf.mxu0
    %v1744 = vadd.f32 %v1731, %v1743
    %v1745 = vpop.f32.mrf.mxu0
    %1746 = vdwg.mxu0
    %1747 = vmatpush.bf16.msra.mxu0 %v1338
    %1748 = vmatpush.bf16.msra.mxu0 %v1337
    %1749 = vmatpush.bf16.msra.mxu0 %v1336
    %1750 = vmatpush.bf16.msra.mxu0 %v1335
    %1751 = vmatpush.bf16.msra.mxu0 %v1334
    %1752 = vmatpush.bf16.msra.mxu0 %v1333
    %1753 = vmatpush.bf16.msra.mxu0 %v1332
    %1754 = vmatpush.bf16.msra.mxu0 %v1331
    %1755 = vmatmul.bf16.gmra.mxu0 %v98
    %v1756 = vpop.f32.mrf.mxu0
    %v1757 = vadd.f32 %v1744, %v1756
    %v1758 = vpop.f32.mrf.mxu0
    %1759 = vdwg.mxu0
    %1760 = vmatpush.bf16.msra.mxu0 %v1346
    %1761 = vmatpush.bf16.msra.mxu0 %v1345
    %1762 = vmatpush.bf16.msra.mxu0 %v1344
    %1763 = vmatpush.bf16.msra.mxu0 %v1343
    %1764 = vmatpush.bf16.msra.mxu0 %v1342
    %1765 = vmatpush.bf16.msra.mxu0 %v1341
    %1766 = vmatpush.bf16.msra.mxu0 %v1340
    %1767 = vmatpush.bf16.msra.mxu0 %v1339
    %1768 = vmatmul.bf16.gmra.mxu0 %v99
    %v1769 = vpop.f32.mrf.mxu0
    %v1770 = vadd.f32 %v1757, %v1769
    %v1771 = vpop.f32.mrf.mxu0
    %1772 = vdwg.mxu0
    %1773 = vmatpush.bf16.msra.mxu0 %v1354
    %1774 = vmatpush.bf16.msra.mxu0 %v1353
    %1775 = vmatpush.bf16.msra.mxu0 %v1352
    %1776 = vmatpush.bf16.msra.mxu0 %v1351
    %1777 = vmatpush.bf16.msra.mxu0 %v1350
    %1778 = vmatpush.bf16.msra.mxu0 %v1349
    %1779 = vmatpush.bf16.msra.mxu0 %v1348
    %1780 = vmatpush.bf16.msra.mxu0 %v1347
    %1781 = vmatmul.bf16.gmra.mxu0 %v100
    %v1782 = vpop.f32.mrf.mxu0
    %v1783 = vadd.f32 %v1770, %v1782
    %v1784 = vpop.f32.mrf.mxu0
    %1785 = vdwg.mxu0
    %1786 = vmatpush.bf16.msra.mxu0 %v1362
    %1787 = vmatpush.bf16.msra.mxu0 %v1361
    %1788 = vmatpush.bf16.msra.mxu0 %v1360
    %1789 = vmatpush.bf16.msra.mxu0 %v1359
    %1790 = vmatpush.bf16.msra.mxu0 %v1358
    %1791 = vmatpush.bf16.msra.mxu0 %v1357
    %1792 = vmatpush.bf16.msra.mxu0 %v1356
    %1793 = vmatpush.bf16.msra.mxu0 %v1355
    %1794 = vmatmul.bf16.gmra.mxu0 %v101
    %v1795 = vpop.f32.mrf.mxu0
    %v1796 = vadd.f32 %v1783, %v1795
    %v1797 = vpop.f32.mrf.mxu0
    %1798 = vdwg.mxu0
    %1799 = vmatpush.bf16.msra.mxu0 %v1370
    %1800 = vmatpush.bf16.msra.mxu0 %v1369
    %1801 = vmatpush.bf16.msra.mxu0 %v1368
    %1802 = vmatpush.bf16.msra.mxu0 %v1367
    %1803 = vmatpush.bf16.msra.mxu0 %v1366
    %1804 = vmatpush.bf16.msra.mxu0 %v1365
    %1805 = vmatpush.bf16.msra.mxu0 %v1364
    %1806 = vmatpush.bf16.msra.mxu0 %v1363
    %1807 = vmatmul.bf16.gmra.mxu0 %v102
    %v1808 = vpop.f32.mrf.mxu0
    %v1809 = vadd.f32 %v1796, %v1808
    %v1810 = vpop.f32.mrf.mxu0
    %1811 = vdwg.mxu0
    %1812 = vmatpush.bf16.msra.mxu0 %v1378
    %1813 = vmatpush.bf16.msra.mxu0 %v1377
    %1814 = vmatpush.bf16.msra.mxu0 %v1376
    %1815 = vmatpush.bf16.msra.mxu0 %v1375
    %1816 = vmatpush.bf16.msra.mxu0 %v1374
    %1817 = vmatpush.bf16.msra.mxu0 %v1373
    %1818 = vmatpush.bf16.msra.mxu0 %v1372
    %1819 = vmatpush.bf16.msra.mxu0 %v1371
    %1820 = vmatmul.bf16.gmra.mxu0 %v103
    %v1821 = vpop.f32.mrf.mxu0
    %v1822 = vadd.f32 %v1809, %v1821
    %v1823 = vpop.f32.mrf.mxu0
    %1824 = vdwg.mxu0
    %1825 = vmatpush.bf16.msra.mxu0 %v1386
    %1826 = vmatpush.bf16.msra.mxu0 %v1385
    %1827 = vmatpush.bf16.msra.mxu0 %v1384
    %1828 = vmatpush.bf16.msra.mxu0 %v1383
    %1829 = vmatpush.bf16.msra.mxu0 %v1382
    %1830 = vmatpush.bf16.msra.mxu0 %v1381
    %1831 = vmatpush.bf16.msra.mxu0 %v1380
    %1832 = vmatpush.bf16.msra.mxu0 %v1379
    %1833 = vmatmul.bf16.gmra.mxu0 %v104
    %v1834 = vpop.f32.mrf.mxu0
    %v1835 = vadd.f32 %v1822, %v1834
    %v1836 = vpop.f32.mrf.mxu0
    %1837 = vdwg.mxu0
    %1838 = vmatpush.bf16.msra.mxu0 %v1394
    %1839 = vmatpush.bf16.msra.mxu0 %v1393
    %1840 = vmatpush.bf16.msra.mxu0 %v1392
    %1841 = vmatpush.bf16.msra.mxu0 %v1391
    %1842 = vmatpush.bf16.msra.mxu0 %v1390
    %1843 = vmatpush.bf16.msra.mxu0 %v1389
    %1844 = vmatpush.bf16.msra.mxu0 %v1388
    %1845 = vmatpush.bf16.msra.mxu0 %v1387
    %1846 = vmatmul.bf16.gmra.mxu0 %v105
    %v1847 = vpop.f32.mrf.mxu0
    %v1848 = vadd.f32 %v1835, %v1847
    %v1849 = vpop.f32.mrf.mxu0
    %1850 = vdwg.mxu0
    %1851 = vmatpush.bf16.msra.mxu0 %v1402
    %1852 = vmatpush.bf16.msra.mxu0 %v1401
    %1853 = vmatpush.bf16.msra.mxu0 %v1400
    %1854 = vmatpush.bf16.msra.mxu0 %v1399
    %1855 = vmatpush.bf16.msra.mxu0 %v1398
    %1856 = vmatpush.bf16.msra.mxu0 %v1397
    %1857 = vmatpush.bf16.msra.mxu0 %v1396
    %1858 = vmatpush.bf16.msra.mxu0 %v1395
    %1859 = vmatmul.bf16.gmra.mxu0 %v106
    %v1860 = vpop.f32.mrf.mxu0
    %v1861 = vadd.f32 %v1848, %v1860
    %v1862 = vpop.f32.mrf.mxu0
    %1863 = vdwg.mxu0
    %1864 = vmatpush.bf16.msra.mxu0 %v1410
    %1865 = vmatpush.bf16.msra.mxu0 %v1409
    %1866 = vmatpush.bf16.msra.mxu0 %v1408
    %1867 = vmatpush.bf16.msra.mxu0 %v1407
    %1868 = vmatpush.bf16.msra.mxu0 %v1406
    %1869 = vmatpush.bf16.msra.mxu0 %v1405
    %1870 = vmatpush.bf16.msra.mxu0 %v1404
    %1871 = vmatpush.bf16.msra.mxu0 %v1403
    %1872 = vmatmul.bf16.gmra.mxu0 %v107
    %v1873 = vpop.f32.mrf.mxu0
    %v1874 = vadd.f32 %v1861, %v1873
    %v1875 = vpop.f32.mrf.mxu0
    %1876 = vdwg.mxu0
    %1877 = vmatpush.bf16.msra.mxu0 %v1418
    %1878 = vmatpush.bf16.msra.mxu0 %v1417
    %1879 = vmatpush.bf16.msra.mxu0 %v1416
    %1880 = vmatpush.bf16.msra.mxu0 %v1415
    %1881 = vmatpush.bf16.msra.mxu0 %v1414
    %1882 = vmatpush.bf16.msra.mxu0 %v1413
    %1883 = vmatpush.bf16.msra.mxu0 %v1412
    %1884 = vmatpush.bf16.msra.mxu0 %v1411
    %1885 = vmatmul.bf16.gmra.mxu0 %v108
    %v1886 = vpop.f32.mrf.mxu0
    %v1887 = vadd.f32 %v1874, %v1886
    %v1888 = vpop.f32.mrf.mxu0
    %1889 = vdwg.mxu0
    %1890 = vmatpush.bf16.msra.mxu0 %v1426
    %1891 = vmatpush.bf16.msra.mxu0 %v1425
    %1892 = vmatpush.bf16.msra.mxu0 %v1424
    %1893 = vmatpush.bf16.msra.mxu0 %v1423
    %1894 = vmatpush.bf16.msra.mxu0 %v1422
    %1895 = vmatpush.bf16.msra.mxu0 %v1421
    %1896 = vmatpush.bf16.msra.mxu0 %v1420
    %1897 = vmatpush.bf16.msra.mxu0 %v1419
    %1898 = vmatmul.bf16.gmra.mxu0 %v109
    %v1899 = vpop.f32.mrf.mxu0
    %v1900 = vadd.f32 %v1887, %v1899
    %v1901 = vpop.f32.mrf.mxu0
    %1902 = vdwg.mxu0
    %1903 = vmatpush.bf16.msra.mxu0 %v1434
    %1904 = vmatpush.bf16.msra.mxu0 %v1433
    %1905 = vmatpush.bf16.msra.mxu0 %v1432
    %1906 = vmatpush.bf16.msra.mxu0 %v1431
    %1907 = vmatpush.bf16.msra.mxu0 %v1430
    %1908 = vmatpush.bf16.msra.mxu0 %v1429
    %1909 = vmatpush.bf16.msra.mxu0 %v1428
    %1910 = vmatpush.bf16.msra.mxu0 %v1427
    %1911 = vmatmul.bf16.gmra.mxu0 %v110
    %v1912 = vpop.f32.mrf.mxu0
    %v1913 = vadd.f32 %v1900, %v1912
    %v1914 = vpop.f32.mrf.mxu0
    %1915 = vdwg.mxu0
    %1916 = vmatpush.bf16.msra.mxu0 %v1442
    %1917 = vmatpush.bf16.msra.mxu0 %v1441
    %1918 = vmatpush.bf16.msra.mxu0 %v1440
    %1919 = vmatpush.bf16.msra.mxu0 %v1439
    %1920 = vmatpush.bf16.msra.mxu0 %v1438
    %1921 = vmatpush.bf16.msra.mxu0 %v1437
    %1922 = vmatpush.bf16.msra.mxu0 %v1436
    %1923 = vmatpush.bf16.msra.mxu0 %v1435
    %1924 = vmatmul.bf16.gmra.mxu0 %v111
    %v1925 = vpop.f32.mrf.mxu0
    %v1926 = vadd.f32 %v1913, %v1925
    %v1927 = vpop.f32.mrf.mxu0
    %1928 = vdwg.mxu0
    %1929 = vmatpush.bf16.msra.mxu0 %v1450
    %1930 = vmatpush.bf16.msra.mxu0 %v1449
    %1931 = vmatpush.bf16.msra.mxu0 %v1448
    %1932 = vmatpush.bf16.msra.mxu0 %v1447
    %1933 = vmatpush.bf16.msra.mxu0 %v1446
    %1934 = vmatpush.bf16.msra.mxu0 %v1445
    %1935 = vmatpush.bf16.msra.mxu0 %v1444
    %1936 = vmatpush.bf16.msra.mxu0 %v1443
    %1937 = vmatmul.bf16.gmra.mxu0 %v112
    %v1938 = vpop.f32.mrf.mxu0
    %v1939 = vadd.f32 %v1926, %v1938
    %v1940 = vpop.f32.mrf.mxu0
    %1941 = vdwg.mxu0
    %1942 = vmatpush.bf16.msra.mxu0 %v1458
    %1943 = vmatpush.bf16.msra.mxu0 %v1457
    %1944 = vmatpush.bf16.msra.mxu0 %v1456
    %1945 = vmatpush.bf16.msra.mxu0 %v1455
    %1946 = vmatpush.bf16.msra.mxu0 %v1454
    %1947 = vmatpush.bf16.msra.mxu0 %v1453
    %1948 = vmatpush.bf16.msra.mxu0 %v1452
    %1949 = vmatpush.bf16.msra.mxu0 %v1451
    %1950 = vmatmul.bf16.gmra.mxu0 %v113
    %v1951 = vpop.f32.mrf.mxu0
    %v1952 = vadd.f32 %v1939, %v1951
    %v1953 = vpop.f32.mrf.mxu0
    %1954 = vdwg.mxu0
    %1955 = vmatpush.bf16.msra.mxu0 %v1466
    %1956 = vmatpush.bf16.msra.mxu0 %v1465
    %1957 = vmatpush.bf16.msra.mxu0 %v1464
    %1958 = vmatpush.bf16.msra.mxu0 %v1463
    %1959 = vmatpush.bf16.msra.mxu0 %v1462
    %1960 = vmatpush.bf16.msra.mxu0 %v1461
    %1961 = vmatpush.bf16.msra.mxu0 %v1460
    %1962 = vmatpush.bf16.msra.mxu0 %v1459
    %1963 = vmatmul.bf16.gmra.mxu0 %v114
    %v1964 = vpop.f32.mrf.mxu0
    %v1965 = vadd.f32 %v1952, %v1964
    %v1966 = vpop.f32.mrf.mxu0
    %1967 = vdwg.mxu0
    %1968 = vmatpush.bf16.msra.mxu0 %v1474
    %1969 = vmatpush.bf16.msra.mxu0 %v1473
    %1970 = vmatpush.bf16.msra.mxu0 %v1472
    %1971 = vmatpush.bf16.msra.mxu0 %v1471
    %1972 = vmatpush.bf16.msra.mxu0 %v1470
    %1973 = vmatpush.bf16.msra.mxu0 %v1469
    %1974 = vmatpush.bf16.msra.mxu0 %v1468
    %1975 = vmatpush.bf16.msra.mxu0 %v1467
    %1976 = vmatmul.bf16.gmra.mxu0 %v115
    %v1977 = vpop.f32.mrf.mxu0
    %v1978 = vadd.f32 %v1965, %v1977
    %v1979 = vpop.f32.mrf.mxu0
    %1980 = vdwg.mxu0
    %1981 = vmatpush.bf16.msra.mxu0 %v1482
    %1982 = vmatpush.bf16.msra.mxu0 %v1481
    %1983 = vmatpush.bf16.msra.mxu0 %v1480
    %1984 = vmatpush.bf16.msra.mxu0 %v1479
    %1985 = vmatpush.bf16.msra.mxu0 %v1478
    %1986 = vmatpush.bf16.msra.mxu0 %v1477
    %1987 = vmatpush.bf16.msra.mxu0 %v1476
    %1988 = vmatpush.bf16.msra.mxu0 %v1475
    %1989 = vmatmul.bf16.gmra.mxu0 %v116
    %v1990 = vpop.f32.mrf.mxu0
    %v1991 = vadd.f32 %v1978, %v1990
    %v1992 = vpop.f32.mrf.mxu0
    %1993 = vdwg.mxu0
    %1994 = vmatpush.bf16.msra.mxu0 %v1490
    %1995 = vmatpush.bf16.msra.mxu0 %v1489
    %1996 = vmatpush.bf16.msra.mxu0 %v1488
    %1997 = vmatpush.bf16.msra.mxu0 %v1487
    %1998 = vmatpush.bf16.msra.mxu0 %v1486
    %1999 = vmatpush.bf16.msra.mxu0 %v1485
    %2000 = vmatpush.bf16.msra.mxu0 %v1484
    %2001 = vmatpush.bf16.msra.mxu0 %v1483
    %2002 = vmatmul.bf16.gmra.mxu0 %v117
    %v2003 = vpop.f32.mrf.mxu0
    %v2004 = vadd.f32 %v1991, %v2003
    %v2005 = vpop.f32.mrf.mxu0
    %2006 = vdwg.mxu0
    %2007 = vmatpush.bf16.msra.mxu0 0
    %2008 = vmatpush.bf16.msra.mxu0 0
    %2009 = vmatpush.bf16.msra.mxu0 0
    %2010 = vmatpush.bf16.msra.mxu0 0
    %2011 = vmatpush.bf16.msra.mxu0 %v1494
    %2012 = vmatpush.bf16.msra.mxu0 %v1493
    %2013 = vmatpush.bf16.msra.mxu0 %v1492
    %2014 = vmatpush.bf16.msra.mxu0 %v1491
    %2015 = vmatmul.bf16.gmra.mxu0 %v1693
    %v2016 = vpop.f32.mrf.mxu0
    %v2017 = vadd.f32 %v2004, %v2016
    %v2018 = vpop.f32.mrf.mxu0
    %2019 = vdwg.mxu0
    %v2020 = vmax.f32 %v2017, 0.0
    %v2021 = vpack.c.bf16 %v2020, %v2020
    %v2022 = vld [vmem:[%s3] sm:$0xf]
    %v2023 = vld [vmem:[%s3 + $0x4] sm:$0xf]
    %v2024 = vld [vmem:[%s3 + $0x8] sm:$0xf]
    %v2025 = vld [vmem:[%s3 + $0xc] sm:$0xf]
    %v2026 = vld [vmem:[%s3 + $0x10] sm:$0xf]
    %v2027 = vld [vmem:[%s3 + $0x14] sm:$0xf]
    %v2028 = vld [vmem:[%s3 + $0x18] sm:$0xf]
    %v2029 = vld [vmem:[%s3 + $0x1c] sm:$0xf]
    %v2030 = vld [vmem:[%s3 + $0x20] sm:$0xf]
    %v2031 = vld [vmem:[%s3 + $0x24] sm:$0xf]
    %v2032 = vld [vmem:[%s3 + $0x28] sm:$0xf]
    %v2033 = vld [vmem:[%s3 + $0x2c] sm:$0xf]
    %v2034 = vld [vmem:[%s3 + $0x30] sm:$0xf]
    %v2035 = vld [vmem:[%s3 + $0x34] sm:$0xf]
    %v2036 = vld [vmem:[%s3 + $0x38] sm:$0xf]
    %v2037 = vld [vmem:[%s3 + $0x3c] sm:$0xf]
    %v2038 = vld [vmem:[%s4] sm:$0x1]
    %v2040 = vperm.slane %v2038, 0
    %v2058 = vunpack.c.l.b16 %v2022
    %v2059 = vunpack.c.l.b16 %v2023
    %v2060 = vunpack.c.l.b16 %v2024
    %v2061 = vunpack.c.l.b16 %v2025
    %v2062 = vunpack.c.l.b16 %v2026
    %v2063 = vunpack.c.l.b16 %v2027
    %v2064 = vunpack.c.l.b16 %v2028
    %v2065 = vunpack.c.l.b16 %v2029
    %v2066 = vunpack.c.l.b16 %v2030
    %v2067 = vunpack.c.l.b16 %v2031
    %v2068 = vunpack.c.l.b16 %v2032
    %v2069 = vunpack.c.l.b16 %v2033
    %v2070 = vunpack.c.l.b16 %v2034
    %v2071 = vunpack.c.l.b16 %v2035
    %v2072 = vunpack.c.l.b16 %v2036
    %v2073 = vunpack.c.l.b16 %v2037
    %v2074 = vpack.c.b16 %v2059, %v2058
    %v2075 = vpack.c.b16 %v2061, %v2060
    %v2076 = vpack.c.b16 %v2063, %v2062
    %v2077 = vpack.c.b16 %v2065, %v2064
    %v2078 = vpack.c.b16 %v2067, %v2066
    %v2079 = vpack.c.b16 %v2069, %v2068
    %v2080 = vpack.c.b16 %v2071, %v2070
    %v2081 = vpack.c.b16 %v2073, %v2072
    %2090 = vmatpush.bf16.msra.mxu0 %v2081
    %2091 = vmatpush.bf16.msra.mxu0 %v2080
    %2092 = vmatpush.bf16.msra.mxu0 %v2079
    %2093 = vmatpush.bf16.msra.mxu0 %v2078
    %2094 = vmatpush.bf16.msra.mxu0 %v2077
    %2095 = vmatpush.bf16.msra.mxu0 %v2076
    %2096 = vmatpush.bf16.msra.mxu0 %v2075
    %2097 = vmatpush.bf16.msra.mxu0 %v2074
    %2098 = vmatmul.bf16.gmra.mxu0 %v2021
    %v2099 = vpop.f32.mrf.mxu0
    %v2100 = vadd.f32 %v2040, %v2099
    %v2101 = vpop.f32.mrf.mxu0
    %2102 = vdwg.mxu0
    %vm2103 = vcmask 74752
    %2104 = vst.msk [vmem:[#allocation2] sm:$0x3] %vm2103, %v2100
    // Predicated region
    $region22: #{cnn_forward.3} parent=1 // pred_check
      _
    $region23: #{cnn_forward.3} parent=1 // pred_check_branch
      %2106 = sbr.rel (0) target = $region25
    $region24: #{cnn_forward.3} parent=1 // pred_region
      %2108 = vsyncadd [#allocation3], 0
      %s2110 = sshll.u32 [#allocation2], 4
      %s2111 = int_to_ptr.vmem [resolvable:$true] %s2110
      %s2112 = sshll.u32 %s5, 4
      %s2113 = int_to_ptr.hbm [resolvable:$true] %s2112
      %2115 = dma.vmem_to_hbm [thread:$0]  %s2111, 32, %s2113, [#allocation3]
    $region25: #{cnn_forward.3} parent=1 // pred_fallthru
      _
    // Predicated region
    $region26: #{cnn_forward.3} parent=1 // pred_check
      _
    $region27: #{cnn_forward.3} parent=1 // pred_check_branch
      %2117 = sbr.rel (0) target = $region29
    $region28: #{cnn_forward.3} parent=1 // pred_region
      %2119 = dma.done [#allocation3], 32
    $region29: #{cnn_forward.3} parent=1 // pred_fallthru
      _
    %2120 = vsyncpa [#allocation3], 1

// kernel: cnn_forward.2
$region0: #{cnn_forward.2}
  #allocation0 [shape = 'u32[]', space=smem, size = 0x4, offset = 0x4, fixed_abs, tag = 'smem constant byte address 0x4 - core index']
  #allocation1 [shape = 'u32[72,128]{1,0:T(1,128)}', space=vmem, size = 0x9000, scoped, tag = 'internal scratch']
  #allocation2 [shape = 'f32[30,30,1]{2,1,0:T(8,128)}', space=vmem, size = 0x78000, scoped, tag = 'scratch operand']
  #allocation3 [shape = 'f32[14,28,32]{2,1,0:T(8,128)}', space=vmem, size = 0x38000, scoped, tag = 'scratch operand']
  #allocation4 [shape = 'f32[16,16,128]{2,1,0:T(8,128)}', space=vmem, size = 0x20000, scoped, tag = 'scratch operand']
  #allocation5 [shape = 'bf16[14,1152]{1,0:T(8,128)(2,1)}', space=vmem, size = 0x9000, scoped, tag = 'scratch operand']
  #allocation6 [shape = 'f32[7,14,64]{2,1,0:T(8,128)}', space=vmem, size = 0xe000, scoped, tag = 'scratch operand']
  %s0 = inlined_call_operand.vmem [shape: f32[2,28,28,1], index: 0, kind: input, shape index: {}]
  %s1 = inlined_call_operand.vmem [shape: f32[9,32], index: 1, kind: input, shape index: {}]
  %s2 = inlined_call_operand.vmem [shape: f32[1,32], index: 2, kind: input, shape index: {}]
  %s3 = inlined_call_operand.vmem [shape: bf16[1152,64], index: 3, kind: input, shape index: {}]
  %s4 = inlined_call_operand.vmem [shape: f32[1,64], index: 4, kind: input, shape index: {}]
  %s5 = inlined_call_operand.vmem [shape: f32[2,7,7,64], index: 5, kind: output, shape index: {}]
  %s6 = sld [smem:[#allocation0]]
  $region67: #{cnn_forward.2} parent=0
    _
  %s8 = ssub.s32 1, %s6
  %s9 = scalar_select 0, %s8, %s6
  loop: start=0, step=1, limit=4
  $region2: #{cnn_forward.2} parent=0 // loop_pre_header
    _
  $region3: #{cnn_forward.2} parent=0 // loop_header
    %s11 = sphi 0, %s15
    %p12 = scmp.ge.s32.totalorder %s11, 4
    %s21 = sphi 0, %s23
    %s24 = sphi 0, %s21
    %s25 = sphi 0, %s24
    %s41 = sphi 0, %s25
    %s45 = sphi 0, %s45
    %s47 = sphi 0, %s45
    %s48 = sphi 0, %s47
    %s62 = sphi 0, %s48
    %s66 = sphi 0, %s66
    %s68 = sphi 0, %s66
    %s69 = sphi 0, %s68
    %s83 = sphi 0, %s69
    %s87 = sphi 0, %s87
    %s89 = sphi 0, %s87
    %s90 = sphi 0, %s89
    %s104 = sphi 0, %s90
    %s108 = sphi 0, %s108
    %s110 = sphi 0, %s108
    %s111 = sphi 0, %s110
    %s125 = sphi 0, %s111
    %s131 = sphi 0, %s133
    %s134 = sphi 0, %s131
    %s135 = sphi 0, %s134
    %s151 = sphi 0, %s135
  $region4: #{cnn_forward.2} parent=0 // loop_header_branch
    %14 = sbr.rel (%p12) target = $region8
  $region5: #{cnn_forward.2} parent=0 // loop_body
    %s16 = ssub.s32 %s11, 1
    %s17 = ssub.s32 %s11, 2
    %s18 = sadd.s32 %s11, 1
    %s19 = ssub.s32 %s11, %s18
    %p20 = scmp.eq.s32.totalorder %s19, 0
    %s22 = sadd.s32 %s21, 1
    %s23 = scalar_select %p20, %s21, %s22
    %p26 = pneg %p20
    %p27 = scmp.eq.s32.totalorder %s11, 1
    %p28 = por %p26, %p27
    %p29 = scmp.ne.s32.totalorder %s21, %s24
    %p30 = scmp.eq.s32.totalorder %s11, 0
    %p31 = por %p29, %p30
    %p32 = scmp.ne.s32.totalorder %s21, %s24
    %p33 = scmp.eq.s32.totalorder %s16, 1
    %p34 = por %p32, %p33
    %p35 = scmp.ne.s32.totalorder %s24, %s25
    %p36 = scmp.eq.s32.totalorder %s16, 0
    %p37 = por %p35, %p36
    %p38 = scmp.ne.s32.totalorder %s24, %s25
    %p39 = scmp.eq.s32.totalorder %s17, 1
    %p40 = por %p38, %p39
    %p42 = scmp.ne.s32.totalorder %s25, %s41
    %p43 = scmp.eq.s32.totalorder %s17, 0
    %p44 = por %p42, %p43
    %s46 = sadd.s32 %s45, 1
    %p49 = scmp.eq.s32.totalorder %s11, 1
    %p50 = scmp.ne.s32.totalorder %s45, %s47
    %p51 = scmp.eq.s32.totalorder %s11, 0
    %p52 = por %p50, %p51
    %p53 = scmp.ne.s32.totalorder %s45, %s47
    %p54 = scmp.eq.s32.totalorder %s16, 1
    %p55 = por %p53, %p54
    %p56 = scmp.ne.s32.totalorder %s47, %s48
    %p57 = scmp.eq.s32.totalorder %s16, 0
    %p58 = por %p56, %p57
    %p59 = scmp.ne.s32.totalorder %s47, %s48
    %p60 = scmp.eq.s32.totalorder %s17, 1
    %p61 = por %p59, %p60
    %p63 = scmp.ne.s32.totalorder %s48, %s62
    %p64 = scmp.eq.s32.totalorder %s17, 0
    %p65 = por %p63, %p64
    %s67 = sadd.s32 %s66, 1
    %p70 = scmp.eq.s32.totalorder %s11, 1
    %p71 = scmp.ne.s32.totalorder %s66, %s68
    %p72 = scmp.eq.s32.totalorder %s11, 0
    %p73 = por %p71, %p72
    %p74 = scmp.ne.s32.totalorder %s66, %s68
    %p75 = scmp.eq.s32.totalorder %s16, 1
    %p76 = por %p74, %p75
    %p77 = scmp.ne.s32.totalorder %s68, %s69
    %p78 = scmp.eq.s32.totalorder %s16, 0
    %p79 = por %p77, %p78
    %p80 = scmp.ne.s32.totalorder %s68, %s69
    %p81 = scmp.eq.s32.totalorder %s17, 1
    %p82 = por %p80, %p81
    %p84 = scmp.ne.s32.totalorder %s69, %s83
    %p85 = scmp.eq.s32.totalorder %s17, 0
    %p86 = por %p84, %p85
    %s88 = sadd.s32 %s87, 1
    %p91 = scmp.eq.s32.totalorder %s11, 1
    %p92 = scmp.ne.s32.totalorder %s87, %s89
    %p93 = scmp.eq.s32.totalorder %s11, 0
    %p94 = por %p92, %p93
    %p95 = scmp.ne.s32.totalorder %s87, %s89
    %p96 = scmp.eq.s32.totalorder %s16, 1
    %p97 = por %p95, %p96
    %p98 = scmp.ne.s32.totalorder %s89, %s90
    %p99 = scmp.eq.s32.totalorder %s16, 0
    %p100 = por %p98, %p99
    %p101 = scmp.ne.s32.totalorder %s89, %s90
    %p102 = scmp.eq.s32.totalorder %s17, 1
    %p103 = por %p101, %p102
    %p105 = scmp.ne.s32.totalorder %s90, %s104
    %p106 = scmp.eq.s32.totalorder %s17, 0
    %p107 = por %p105, %p106
    %s109 = sadd.s32 %s108, 1
    %p112 = scmp.eq.s32.totalorder %s11, 1
    %p113 = scmp.ne.s32.totalorder %s108, %s110
    %p114 = scmp.eq.s32.totalorder %s11, 0
    %p115 = por %p113, %p114
    %p116 = scmp.ne.s32.totalorder %s108, %s110
    %p117 = scmp.eq.s32.totalorder %s16, 1
    %p118 = por %p116, %p117
    %p119 = scmp.ne.s32.totalorder %s110, %s111
    %p120 = scmp.eq.s32.totalorder %s16, 0
    %p121 = por %p119, %p120
    %p122 = scmp.ne.s32.totalorder %s110, %s111
    %p123 = scmp.eq.s32.totalorder %s17, 1
    %p124 = por %p122, %p123
    %p126 = scmp.ne.s32.totalorder %s111, %s125
    %p127 = scmp.eq.s32.totalorder %s17, 0
    %p128 = por %p126, %p127
    %s129 = ssub.s32 %s11, %s18
    %p130 = scmp.eq.s32.totalorder %s129, 0
    %s132 = sadd.s32 %s131, 1
    %s133 = scalar_select %p130, %s131, %s132
    %p136 = pneg %p130
    %p137 = scmp.eq.s32.totalorder %s11, 1
    %p138 = por %p136, %p137
    %p139 = scmp.ne.s32.totalorder %s131, %s134
    %p140 = scmp.eq.s32.totalorder %s11, 0
    %p141 = por %p139, %p140
    %p142 = scmp.ne.s32.totalorder %s131, %s134
    %p143 = scmp.eq.s32.totalorder %s16, 1
    %p144 = por %p142, %p143
    %p145 = scmp.ne.s32.totalorder %s134, %s135
    %p146 = scmp.eq.s32.totalorder %s16, 0
    %p147 = por %p145, %p146
    %p148 = scmp.ne.s32.totalorder %s134, %s135
    %p149 = scmp.eq.s32.totalorder %s17, 1
    %p150 = por %p148, %p149
    %p152 = scmp.ne.s32.totalorder %s135, %s151
    %p153 = scmp.eq.s32.totalorder %s17, 0
    %p154 = por %p152, %p153
    %p155 = scmp.le.s32.totalorder 1, %s11
    %p156 = scmp.lt.s32.totalorder %s11, 3
    %p157 = pnand %p155, %p156
    %p158 = pneg %p157
    // Predicated region
    $region9: #{cnn_forward.2} parent=5 // pred_check
      _
    $region10: #{cnn_forward.2} parent=5 // pred_check_branch
      %160 = sbr.rel (%p157) target = $region12
    $region11: #{cnn_forward.2} parent=5 // pred_region
      %s161 = ssub.s32 %s11, 1
      // Predicated region
      $region13: #{cnn_forward.2} parent=11 // pred_check
        %p162 = pneg %p58
      $region14: #{cnn_forward.2} parent=11 // pred_check_branch
        %164 = sbr.rel (%p162) target = $region16
      $region15: #{cnn_forward.2} parent=11 // pred_region
        _
      $region16: #{cnn_forward.2} parent=11 // pred_fallthru
        _
      // Predicated region
      $region17: #{cnn_forward.2} parent=11 // pred_check
        %p165 = pneg %p79
      $region18: #{cnn_forward.2} parent=11 // pred_check_branch
        %167 = sbr.rel (%p165) target = $region20
      $region19: #{cnn_forward.2} parent=11 // pred_region
        _
      $region20: #{cnn_forward.2} parent=11 // pred_fallthru
        _
      // Predicated region
      $region21: #{cnn_forward.2} parent=11 // pred_check
        %p168 = pneg %p100
      $region22: #{cnn_forward.2} parent=11 // pred_check_branch
        %170 = sbr.rel (%p168) target = $region24
      $region23: #{cnn_forward.2} parent=11 // pred_region
        _
      $region24: #{cnn_forward.2} parent=11 // pred_fallthru
        _
      // Predicated region
      $region25: #{cnn_forward.2} parent=11 // pred_check
        %p171 = pneg %p121
      $region26: #{cnn_forward.2} parent=11 // pred_check_branch
        %173 = sbr.rel (%p171) target = $region28
      $region27: #{cnn_forward.2} parent=11 // pred_region
        _
      $region28: #{cnn_forward.2} parent=11 // pred_fallthru
        _
    $region12: #{cnn_forward.2} parent=5 // pred_fallthru
      _
    %p174 = scmp.lt.s32.totalorder %s11, 2
    // Predicated region
    $region29: #{cnn_forward.2} parent=5 // pred_check
      %p175 = pneg %p174
    $region30: #{cnn_forward.2} parent=5 // pred_check_branch
      %177 = sbr.rel (%p175) target = $region32
    $region31: #{cnn_forward.2} parent=5 // pred_region
      // Predicated region
      $region33: #{cnn_forward.2} parent=31 // pred_check
        %p178 = pneg %p31
      $region34: #{cnn_forward.2} parent=31 // pred_check_branch
        %180 = sbr.rel (%p178) target = $region36
      $region35: #{cnn_forward.2} parent=31 // pred_region
        %p181 = scmp.lt.s32.totalorder %s11, 1
        %s182 = scalar_select %p181, %s11, 1
        %s183 = smul.addr %s182, 112
        %s184 = smul.addr %s183, 8
        %s185 = scalar_lea.vmem %s0, %s184
      $region36: #{cnn_forward.2} parent=31 // pred_fallthru
        _
    $region32: #{cnn_forward.2} parent=5 // pred_fallthru
      _
    %p186 = scmp.le.s32.totalorder 1, %s11
    %p187 = scmp.lt.s32.totalorder %s11, 3
    %p188 = pnand %p186, %p187
    %p189 = pneg %p188
    // Predicated region
    $region37: #{cnn_forward.2} parent=5 // pred_check
      _
    $region38: #{cnn_forward.2} parent=5 // pred_check_branch
      %191 = sbr.rel (%p188) target = $region40
    $region39: #{cnn_forward.2} parent=5 // pred_region
      %s192 = ssub.s32 %s11, 1
      %p193 = scmp.lt.s32.totalorder %s16, 1
      %s194 = scalar_select %p193, %s16, 1
      %s195 = smul.addr %s194, 112
      %s196 = smul.addr %s195, 8
      %s197 = scalar_lea.vmem %s0, %s196
      %p198 = pneg %p37
      %p199 = pneg %p34
      %p200 = pneg %p58
      %p201 = pneg %p55
      %p202 = pneg %p79
      %p203 = pneg %p76
      %p204 = pneg %p100
      %p205 = pneg %p97
      %p206 = pneg %p121
      %p207 = pneg %p118
      %p208 = pneg %p147
      %p209 = pneg %p144
      %p210 = scmp.lt.s32.totalorder %s16, 1
      %s211 = scalar_select %p210, %s16, 1
      %s212 = smul.addr %s211, 7
      %s213 = smul.addr %s212, 8
      %s214 = scalar_lea.vmem %s5, %s213
      %p215 = scmp.lt.s32.totalorder %s16, 1
      %s216 = scalar_select %p215, %s16, 1
      %s217 = smul.addr %s216, 112
      %s218 = smul.addr %s217, 8
      %s219 = scalar_lea.vmem %s0, %s218
      %p220 = scmp.lt.s32.totalorder %s16, 1
      %s221 = scalar_select %p220, %s16, 1
      %s222 = smul.addr %s221, 7
      %s223 = smul.addr %s222, 8
      %s224 = scalar_lea.vmem %s5, %s223
      %vm225 = vcmask 7168
      %226 = vst.msk [vmem:[#allocation2] sm:$0xff] %vm225, 0.0
      %227 = vst.msk [vmem:[#allocation2 + $0x8] sm:$0xff] %vm225, 0.0
      %228 = vst.msk [vmem:[#allocation2 + $0x10] sm:$0xff] %vm225, 0.0
      %vm229 = vcmask 5120
      %230 = vst.msk [vmem:[#allocation2 + $0x18] sm:$0x3f] %vm229, 0.0
      %231 = vst.msk [vmem:[#allocation2 + $0x20] sm:$0xff] %vm225, 0.0
      %232 = vst.msk [vmem:[#allocation2 + $0x28] sm:$0xff] %vm225, 0.0
      %233 = vst.msk [vmem:[#allocation2 + $0x30] sm:$0xff] %vm225, 0.0
      %234 = vst.msk [vmem:[#allocation2 + $0x38] sm:$0x3f] %vm229, 0.0
      %235 = vst.msk [vmem:[#allocation2 + $0x40] sm:$0xff] %vm225, 0.0
      %236 = vst.msk [vmem:[#allocation2 + $0x48] sm:$0xff] %vm225, 0.0
      %237 = vst.msk [vmem:[#allocation2 + $0x50] sm:$0xff] %vm225, 0.0
      %238 = vst.msk [vmem:[#allocation2 + $0x58] sm:$0x3f] %vm229, 0.0
      %239 = vst.msk [vmem:[#allocation2 + $0x60] sm:$0xff] %vm225, 0.0
      %240 = vst.msk [vmem:[#allocation2 + $0x68] sm:$0xff] %vm225, 0.0
      %241 = vst.msk [vmem:[#allocation2 + $0x70] sm:$0xff] %vm225, 0.0
      %242 = vst.msk [vmem:[#allocation2 + $0x78] sm:$0x3f] %vm229, 0.0
      %243 = vst.msk [vmem:[#allocation2 + $0x80] sm:$0xff] %vm225, 0.0
      %244 = vst.msk [vmem:[#allocation2 + $0x88] sm:$0xff] %vm225, 0.0
      %245 = vst.msk [vmem:[#allocation2 + $0x90] sm:$0xff] %vm225, 0.0
      %246 = vst.msk [vmem:[#allocation2 + $0x98] sm:$0x3f] %vm229, 0.0
      %247 = vst.msk [vmem:[#allocation2 + $0xa0] sm:$0xff] %vm225, 0.0
      %248 = vst.msk [vmem:[#allocation2 + $0xa8] sm:$0xff] %vm225, 0.0
      %249 = vst.msk [vmem:[#allocation2 + $0xb0] sm:$0xff] %vm225, 0.0
      %250 = vst.msk [vmem:[#allocation2 + $0xb8] sm:$0x3f] %vm229, 0.0
      %251 = vst.msk [vmem:[#allocation2 + $0xc0] sm:$0xff] %vm225, 0.0
      %252 = vst.msk [vmem:[#allocation2 + $0xc8] sm:$0xff] %vm225, 0.0
      %253 = vst.msk [vmem:[#allocation2 + $0xd0] sm:$0xff] %vm225, 0.0
      %254 = vst.msk [vmem:[#allocation2 + $0xd8] sm:$0x3f] %vm229, 0.0
      %255 = vst.msk [vmem:[#allocation2 + $0xe0] sm:$0xff] %vm225, 0.0
      %256 = vst.msk [vmem:[#allocation2 + $0xe8] sm:$0xff] %vm225, 0.0
      %257 = vst.msk [vmem:[#allocation2 + $0xf0] sm:$0xff] %vm225, 0.0
      %258 = vst.msk [vmem:[#allocation2 + $0xf8] sm:$0x3f] %vm229, 0.0
      %259 = vst.msk [vmem:[#allocation2 + $0x100] sm:$0xff] %vm225, 0.0
      %260 = vst.msk [vmem:[#allocation2 + $0x108] sm:$0xff] %vm225, 0.0
      %261 = vst.msk [vmem:[#allocation2 + $0x110] sm:$0xff] %vm225, 0.0
      %262 = vst.msk [vmem:[#allocation2 + $0x118] sm:$0x3f] %vm229, 0.0
      %263 = vst.msk [vmem:[#allocation2 + $0x120] sm:$0xff] %vm225, 0.0
      %264 = vst.msk [vmem:[#allocation2 + $0x128] sm:$0xff] %vm225, 0.0
      %265 = vst.msk [vmem:[#allocation2 + $0x130] sm:$0xff] %vm225, 0.0
      %266 = vst.msk [vmem:[#allocation2 + $0x138] sm:$0x3f] %vm229, 0.0
      %267 = vst.msk [vmem:[#allocation2 + $0x140] sm:$0xff] %vm225, 0.0
      %268 = vst.msk [vmem:[#allocation2 + $0x148] sm:$0xff] %vm225, 0.0
      %269 = vst.msk [vmem:[#allocation2 + $0x150] sm:$0xff] %vm225, 0.0
      %270 = vst.msk [vmem:[#allocation2 + $0x158] sm:$0x3f] %vm229, 0.0
      %271 = vst.msk [vmem:[#allocation2 + $0x160] sm:$0xff] %vm225, 0.0
      %272 = vst.msk [vmem:[#allocation2 + $0x168] sm:$0xff] %vm225, 0.0
      %273 = vst.msk [vmem:[#allocation2 + $0x170] sm:$0xff] %vm225, 0.0
      %274 = vst.msk [vmem:[#allocation2 + $0x178] sm:$0x3f] %vm229, 0.0
      %275 = vst.msk [vmem:[#allocation2 + $0x180] sm:$0xff] %vm225, 0.0
      %276 = vst.msk [vmem:[#allocation2 + $0x188] sm:$0xff] %vm225, 0.0
      %277 = vst.msk [vmem:[#allocation2 + $0x190] sm:$0xff] %vm225, 0.0
      %278 = vst.msk [vmem:[#allocation2 + $0x198] sm:$0x3f] %vm229, 0.0
      %279 = vst.msk [vmem:[#allocation2 + $0x1a0] sm:$0xff] %vm225, 0.0
      %280 = vst.msk [vmem:[#allocation2 + $0x1a8] sm:$0xff] %vm225, 0.0
      %281 = vst.msk [vmem:[#allocation2 + $0x1b0] sm:$0xff] %vm225, 0.0
      %282 = vst.msk [vmem:[#allocation2 + $0x1b8] sm:$0x3f] %vm229, 0.0
      %283 = vst.msk [vmem:[#allocation2 + $0x1c0] sm:$0xff] %vm225, 0.0
      %284 = vst.msk [vmem:[#allocation2 + $0x1c8] sm:$0xff] %vm225, 0.0
      %285 = vst.msk [vmem:[#allocation2 + $0x1d0] sm:$0xff] %vm225, 0.0
      %286 = vst.msk [vmem:[#allocation2 + $0x1d8] sm:$0x3f] %vm229, 0.0
      %287 = vst.msk [vmem:[#allocation2 + $0x1e0] sm:$0xff] %vm225, 0.0
      %288 = vst.msk [vmem:[#allocation2 + $0x1e8] sm:$0xff] %vm225, 0.0
      %289 = vst.msk [vmem:[#allocation2 + $0x1f0] sm:$0xff] %vm225, 0.0
      %290 = vst.msk [vmem:[#allocation2 + $0x1f8] sm:$0x3f] %vm229, 0.0
      %291 = vst.msk [vmem:[#allocation2 + $0x200] sm:$0xff] %vm225, 0.0
      %292 = vst.msk [vmem:[#allocation2 + $0x208] sm:$0xff] %vm225, 0.0
      %293 = vst.msk [vmem:[#allocation2 + $0x210] sm:$0xff] %vm225, 0.0
      %294 = vst.msk [vmem:[#allocation2 + $0x218] sm:$0x3f] %vm229, 0.0
      %295 = vst.msk [vmem:[#allocation2 + $0x220] sm:$0xff] %vm225, 0.0
      %296 = vst.msk [vmem:[#allocation2 + $0x228] sm:$0xff] %vm225, 0.0
      %297 = vst.msk [vmem:[#allocation2 + $0x230] sm:$0xff] %vm225, 0.0
      %298 = vst.msk [vmem:[#allocation2 + $0x238] sm:$0x3f] %vm229, 0.0
      %299 = vst.msk [vmem:[#allocation2 + $0x240] sm:$0xff] %vm225, 0.0
      %300 = vst.msk [vmem:[#allocation2 + $0x248] sm:$0xff] %vm225, 0.0
      %301 = vst.msk [vmem:[#allocation2 + $0x250] sm:$0xff] %vm225, 0.0
      %302 = vst.msk [vmem:[#allocation2 + $0x258] sm:$0x3f] %vm229, 0.0
      %303 = vst.msk [vmem:[#allocation2 + $0x260] sm:$0xff] %vm225, 0.0
      %304 = vst.msk [vmem:[#allocation2 + $0x268] sm:$0xff] %vm225, 0.0
      %305 = vst.msk [vmem:[#allocation2 + $0x270] sm:$0xff] %vm225, 0.0
      %306 = vst.msk [vmem:[#allocation2 + $0x278] sm:$0x3f] %vm229, 0.0
      %307 = vst.msk [vmem:[#allocation2 + $0x280] sm:$0xff] %vm225, 0.0
      %308 = vst.msk [vmem:[#allocation2 + $0x288] sm:$0xff] %vm225, 0.0
      %309 = vst.msk [vmem:[#allocation2 + $0x290] sm:$0xff] %vm225, 0.0
      %310 = vst.msk [vmem:[#allocation2 + $0x298] sm:$0x3f] %vm229, 0.0
      %311 = vst.msk [vmem:[#allocation2 + $0x2a0] sm:$0xff] %vm225, 0.0
      %312 = vst.msk [vmem:[#allocation2 + $0x2a8] sm:$0xff] %vm225, 0.0
      %313 = vst.msk [vmem:[#allocation2 + $0x2b0] sm:$0xff] %vm225, 0.0
      %314 = vst.msk [vmem:[#allocation2 + $0x2b8] sm:$0x3f] %vm229, 0.0
      %315 = vst.msk [vmem:[#allocation2 + $0x2c0] sm:$0xff] %vm225, 0.0
      %316 = vst.msk [vmem:[#allocation2 + $0x2c8] sm:$0xff] %vm225, 0.0
      %317 = vst.msk [vmem:[#allocation2 + $0x2d0] sm:$0xff] %vm225, 0.0
      %318 = vst.msk [vmem:[#allocation2 + $0x2d8] sm:$0x3f] %vm229, 0.0
      %319 = vst.msk [vmem:[#allocation2 + $0x2e0] sm:$0xff] %vm225, 0.0
      %320 = vst.msk [vmem:[#allocation2 + $0x2e8] sm:$0xff] %vm225, 0.0
      %321 = vst.msk [vmem:[#allocation2 + $0x2f0] sm:$0xff] %vm225, 0.0
      %322 = vst.msk [vmem:[#allocation2 + $0x2f8] sm:$0x3f] %vm229, 0.0
      %323 = vst.msk [vmem:[#allocation2 + $0x300] sm:$0xff] %vm225, 0.0
      %324 = vst.msk [vmem:[#allocation2 + $0x308] sm:$0xff] %vm225, 0.0
      %325 = vst.msk [vmem:[#allocation2 + $0x310] sm:$0xff] %vm225, 0.0
      %326 = vst.msk [vmem:[#allocation2 + $0x318] sm:$0x3f] %vm229, 0.0
      %327 = vst.msk [vmem:[#allocation2 + $0x320] sm:$0xff] %vm225, 0.0
      %328 = vst.msk [vmem:[#allocation2 + $0x328] sm:$0xff] %vm225, 0.0
      %329 = vst.msk [vmem:[#allocation2 + $0x330] sm:$0xff] %vm225, 0.0
      %330 = vst.msk [vmem:[#allocation2 + $0x338] sm:$0x3f] %vm229, 0.0
      %331 = vst.msk [vmem:[#allocation2 + $0x340] sm:$0xff] %vm225, 0.0
      %332 = vst.msk [vmem:[#allocation2 + $0x348] sm:$0xff] %vm225, 0.0
      %333 = vst.msk [vmem:[#allocation2 + $0x350] sm:$0xff] %vm225, 0.0
      %334 = vst.msk [vmem:[#allocation2 + $0x358] sm:$0x3f] %vm229, 0.0
      %335 = vst.msk [vmem:[#allocation2 + $0x360] sm:$0xff] %vm225, 0.0
      %336 = vst.msk [vmem:[#allocation2 + $0x368] sm:$0xff] %vm225, 0.0
      %337 = vst.msk [vmem:[#allocation2 + $0x370] sm:$0xff] %vm225, 0.0
      %338 = vst.msk [vmem:[#allocation2 + $0x378] sm:$0x3f] %vm229, 0.0
      %339 = vst.msk [vmem:[#allocation2 + $0x380] sm:$0xff] %vm225, 0.0
      %340 = vst.msk [vmem:[#allocation2 + $0x388] sm:$0xff] %vm225, 0.0
      %341 = vst.msk [vmem:[#allocation2 + $0x390] sm:$0xff] %vm225, 0.0
      %342 = vst.msk [vmem:[#allocation2 + $0x398] sm:$0x3f] %vm229, 0.0
      %343 = vst.msk [vmem:[#allocation2 + $0x3a0] sm:$0xff] %vm225, 0.0
      %344 = vst.msk [vmem:[#allocation2 + $0x3a8] sm:$0xff] %vm225, 0.0
      %345 = vst.msk [vmem:[#allocation2 + $0x3b0] sm:$0xff] %vm225, 0.0
      %346 = vst.msk [vmem:[#allocation2 + $0x3b8] sm:$0x3f] %vm229, 0.0
      %v347 = vld [vmem:[%s219] sm:$0xff]
      %v348 = vld [vmem:[%s219 + $0x8] sm:$0xff]
      %v349 = vld [vmem:[%s219 + $0x10] sm:$0xff]
      %v350 = vld [vmem:[%s219 + $0x18] sm:$0xf]
      %v351 = vld [vmem:[%s219 + $0x20] sm:$0xff]
      %v352 = vld [vmem:[%s219 + $0x28] sm:$0xff]
      %v353 = vld [vmem:[%s219 + $0x30] sm:$0xff]
      %v354 = vld [vmem:[%s219 + $0x38] sm:$0xf]
      %v355 = vld [vmem:[%s219 + $0x40] sm:$0xff]
      %v356 = vld [vmem:[%s219 + $0x48] sm:$0xff]
      %v357 = vld [vmem:[%s219 + $0x50] sm:$0xff]
      %v358 = vld [vmem:[%s219 + $0x58] sm:$0xf]
      %v359 = vld [vmem:[%s219 + $0x60] sm:$0xff]
      %v360 = vld [vmem:[%s219 + $0x68] sm:$0xff]
      %v361 = vld [vmem:[%s219 + $0x70] sm:$0xff]
      %v362 = vld [vmem:[%s219 + $0x78] sm:$0xf]
      %v363 = vld [vmem:[%s219 + $0x80] sm:$0xff]
      %v364 = vld [vmem:[%s219 + $0x88] sm:$0xff]
      %v365 = vld [vmem:[%s219 + $0x90] sm:$0xff]
      %v366 = vld [vmem:[%s219 + $0x98] sm:$0xf]
      %v367 = vld [vmem:[%s219 + $0xa0] sm:$0xff]
      %v368 = vld [vmem:[%s219 + $0xa8] sm:$0xff]
      %v369 = vld [vmem:[%s219 + $0xb0] sm:$0xff]
      %v370 = vld [vmem:[%s219 + $0xb8] sm:$0xf]
      %v371 = vld [vmem:[%s219 + $0xc0] sm:$0xff]
      %v372 = vld [vmem:[%s219 + $0xc8] sm:$0xff]
      %v373 = vld [vmem:[%s219 + $0xd0] sm:$0xff]
      %v374 = vld [vmem:[%s219 + $0xd8] sm:$0xf]
      %v375 = vld [vmem:[%s219 + $0xe0] sm:$0xff]
      %v376 = vld [vmem:[%s219 + $0xe8] sm:$0xff]
      %v377 = vld [vmem:[%s219 + $0xf0] sm:$0xff]
      %v378 = vld [vmem:[%s219 + $0xf8] sm:$0xf]
      %v379 = vld [vmem:[%s219 + $0x100] sm:$0xff]
      %v380 = vld [vmem:[%s219 + $0x108] sm:$0xff]
      %v381 = vld [vmem:[%s219 + $0x110] sm:$0xff]
      %v382 = vld [vmem:[%s219 + $0x118] sm:$0xf]
      %v383 = vld [vmem:[%s219 + $0x120] sm:$0xff]
      %v384 = vld [vmem:[%s219 + $0x128] sm:$0xff]
      %v385 = vld [vmem:[%s219 + $0x130] sm:$0xff]
      %v386 = vld [vmem:[%s219 + $0x138] sm:$0xf]
      %v387 = vld [vmem:[%s219 + $0x140] sm:$0xff]
      %v388 = vld [vmem:[%s219 + $0x148] sm:$0xff]
      %v389 = vld [vmem:[%s219 + $0x150] sm:$0xff]
      %v390 = vld [vmem:[%s219 + $0x158] sm:$0xf]
      %v391 = vld [vmem:[%s219 + $0x160] sm:$0xff]
      %v392 = vld [vmem:[%s219 + $0x168] sm:$0xff]
      %v393 = vld [vmem:[%s219 + $0x170] sm:$0xff]
      %v394 = vld [vmem:[%s219 + $0x178] sm:$0xf]
      %v395 = vld [vmem:[%s219 + $0x180] sm:$0xff]
      %v396 = vld [vmem:[%s219 + $0x188] sm:$0xff]
      %v397 = vld [vmem:[%s219 + $0x190] sm:$0xff]
      %v398 = vld [vmem:[%s219 + $0x198] sm:$0xf]
      %v399 = vld [vmem:[%s219 + $0x1a0] sm:$0xff]
      %v400 = vld [vmem:[%s219 + $0x1a8] sm:$0xff]
      %v401 = vld [vmem:[%s219 + $0x1b0] sm:$0xff]
      %v402 = vld [vmem:[%s219 + $0x1b8] sm:$0xf]
      %v403 = vld [vmem:[%s219 + $0x1c0] sm:$0xff]
      %v404 = vld [vmem:[%s219 + $0x1c8] sm:$0xff]
      %v405 = vld [vmem:[%s219 + $0x1d0] sm:$0xff]
      %v406 = vld [vmem:[%s219 + $0x1d8] sm:$0xf]
      %v407 = vld [vmem:[%s219 + $0x1e0] sm:$0xff]
      %v408 = vld [vmem:[%s219 + $0x1e8] sm:$0xff]
      %v409 = vld [vmem:[%s219 + $0x1f0] sm:$0xff]
      %v410 = vld [vmem:[%s219 + $0x1f8] sm:$0xf]
      %v411 = vld [vmem:[%s219 + $0x200] sm:$0xff]
      %v412 = vld [vmem:[%s219 + $0x208] sm:$0xff]
      %v413 = vld [vmem:[%s219 + $0x210] sm:$0xff]
      %v414 = vld [vmem:[%s219 + $0x218] sm:$0xf]
      %v415 = vld [vmem:[%s219 + $0x220] sm:$0xff]
      %v416 = vld [vmem:[%s219 + $0x228] sm:$0xff]
      %v417 = vld [vmem:[%s219 + $0x230] sm:$0xff]
      %v418 = vld [vmem:[%s219 + $0x238] sm:$0xf]
      %v419 = vld [vmem:[%s219 + $0x240] sm:$0xff]
      %v420 = vld [vmem:[%s219 + $0x248] sm:$0xff]
      %v421 = vld [vmem:[%s219 + $0x250] sm:$0xff]
      %v422 = vld [vmem:[%s219 + $0x258] sm:$0xf]
      %v423 = vld [vmem:[%s219 + $0x260] sm:$0xff]
      %v424 = vld [vmem:[%s219 + $0x268] sm:$0xff]
      %v425 = vld [vmem:[%s219 + $0x270] sm:$0xff]
      %v426 = vld [vmem:[%s219 + $0x278] sm:$0xf]
      %v427 = vld [vmem:[%s219 + $0x280] sm:$0xff]
      %v428 = vld [vmem:[%s219 + $0x288] sm:$0xff]
      %v429 = vld [vmem:[%s219 + $0x290] sm:$0xff]
      %v430 = vld [vmem:[%s219 + $0x298] sm:$0xf]
      %v431 = vld [vmem:[%s219 + $0x2a0] sm:$0xff]
      %v432 = vld [vmem:[%s219 + $0x2a8] sm:$0xff]
      %v433 = vld [vmem:[%s219 + $0x2b0] sm:$0xff]
      %v434 = vld [vmem:[%s219 + $0x2b8] sm:$0xf]
      %v435 = vld [vmem:[%s219 + $0x2c0] sm:$0xff]
      %v436 = vld [vmem:[%s219 + $0x2c8] sm:$0xff]
      %v437 = vld [vmem:[%s219 + $0x2d0] sm:$0xff]
      %v438 = vld [vmem:[%s219 + $0x2d8] sm:$0xf]
      %v439 = vld [vmem:[%s219 + $0x2e0] sm:$0xff]
      %v440 = vld [vmem:[%s219 + $0x2e8] sm:$0xff]
      %v441 = vld [vmem:[%s219 + $0x2f0] sm:$0xff]
      %v442 = vld [vmem:[%s219 + $0x2f8] sm:$0xf]
      %v443 = vld [vmem:[%s219 + $0x300] sm:$0xff]
      %v444 = vld [vmem:[%s219 + $0x308] sm:$0xff]
      %v445 = vld [vmem:[%s219 + $0x310] sm:$0xff]
      %v446 = vld [vmem:[%s219 + $0x318] sm:$0xf]
      %v447 = vld [vmem:[%s219 + $0x320] sm:$0xff]
      %v448 = vld [vmem:[%s219 + $0x328] sm:$0xff]
      %v449 = vld [vmem:[%s219 + $0x330] sm:$0xff]
      %v450 = vld [vmem:[%s219 + $0x338] sm:$0xf]
      %v451 = vld [vmem:[%s219 + $0x340] sm:$0xff]
      %v452 = vld [vmem:[%s219 + $0x348] sm:$0xff]
      %v453 = vld [vmem:[%s219 + $0x350] sm:$0xff]
      %v454 = vld [vmem:[%s219 + $0x358] sm:$0xf]
      %v455 = vld [vmem:[%s219 + $0x360] sm:$0xff]
      %v456 = vld [vmem:[%s219 + $0x368] sm:$0xff]
      %v457 = vld [vmem:[%s219 + $0x370] sm:$0xff]
      %v458 = vld [vmem:[%s219 + $0x378] sm:$0xf]
      %s459 = scalar_lea.vmem [#allocation2], 32
      %460 = vst.msk [vmem:[%s459 + $0x1] sm:$0xff] %vm225, %v347
      %461 = vst.msk [vmem:[%s459 + $0x9] sm:$0xff] %vm225, %v348
      %462 = vst.msk [vmem:[%s459 + $0x11] sm:$0xff] %vm225, %v349
      %vm463 = vcmask 3072
      %464 = vst.msk [vmem:[%s459 + $0x19] sm:$0xf] %vm463, %v350
      %465 = vst.msk [vmem:[%s459 + $0x21] sm:$0xff] %vm225, %v351
      %466 = vst.msk [vmem:[%s459 + $0x29] sm:$0xff] %vm225, %v352
      %467 = vst.msk [vmem:[%s459 + $0x31] sm:$0xff] %vm225, %v353
      %468 = vst.msk [vmem:[%s459 + $0x39] sm:$0xf] %vm463, %v354
      %469 = vst.msk [vmem:[%s459 + $0x41] sm:$0xff] %vm225, %v355
      %470 = vst.msk [vmem:[%s459 + $0x49] sm:$0xff] %vm225, %v356
      %471 = vst.msk [vmem:[%s459 + $0x51] sm:$0xff] %vm225, %v357
      %472 = vst.msk [vmem:[%s459 + $0x59] sm:$0xf] %vm463, %v358
      %473 = vst.msk [vmem:[%s459 + $0x61] sm:$0xff] %vm225, %v359
      %474 = vst.msk [vmem:[%s459 + $0x69] sm:$0xff] %vm225, %v360
      %475 = vst.msk [vmem:[%s459 + $0x71] sm:$0xff] %vm225, %v361
      %476 = vst.msk [vmem:[%s459 + $0x79] sm:$0xf] %vm463, %v362
      %477 = vst.msk [vmem:[%s459 + $0x81] sm:$0xff] %vm225, %v363
      %478 = vst.msk [vmem:[%s459 + $0x89] sm:$0xff] %vm225, %v364
      %479 = vst.msk [vmem:[%s459 + $0x91] sm:$0xff] %vm225, %v365
      %480 = vst.msk [vmem:[%s459 + $0x99] sm:$0xf] %vm463, %v366
      %481 = vst.msk [vmem:[%s459 + $0xa1] sm:$0xff] %vm225, %v367
      %482 = vst.msk [vmem:[%s459 + $0xa9] sm:$0xff] %vm225, %v368
      %483 = vst.msk [vmem:[%s459 + $0xb1] sm:$0xff] %vm225, %v369
      %484 = vst.msk [vmem:[%s459 + $0xb9] sm:$0xf] %vm463, %v370
      %485 = vst.msk [vmem:[%s459 + $0xc1] sm:$0xff] %vm225, %v371
      %486 = vst.msk [vmem:[%s459 + $0xc9] sm:$0xff] %vm225, %v372
      %487 = vst.msk [vmem:[%s459 + $0xd1] sm:$0xff] %vm225, %v373
      %488 = vst.msk [vmem:[%s459 + $0xd9] sm:$0xf] %vm463, %v374
      %489 = vst.msk [vmem:[%s459 + $0xe1] sm:$0xff] %vm225, %v375
      %490 = vst.msk [vmem:[%s459 + $0xe9] sm:$0xff] %vm225, %v376
      %491 = vst.msk [vmem:[%s459 + $0xf1] sm:$0xff] %vm225, %v377
      %492 = vst.msk [vmem:[%s459 + $0xf9] sm:$0xf] %vm463, %v378
      %493 = vst.msk [vmem:[%s459 + $0x101] sm:$0xff] %vm225, %v379
      %494 = vst.msk [vmem:[%s459 + $0x109] sm:$0xff] %vm225, %v380
      %495 = vst.msk [vmem:[%s459 + $0x111] sm:$0xff] %vm225, %v381
      %496 = vst.msk [vmem:[%s459 + $0x119] sm:$0xf] %vm463, %v382
      %497 = vst.msk [vmem:[%s459 + $0x121] sm:$0xff] %vm225, %v383
      %498 = vst.msk [vmem:[%s459 + $0x129] sm:$0xff] %vm225, %v384
      %499 = vst.msk [vmem:[%s459 + $0x131] sm:$0xff] %vm225, %v385
      %500 = vst.msk [vmem:[%s459 + $0x139] sm:$0xf] %vm463, %v386
      %501 = vst.msk [vmem:[%s459 + $0x141] sm:$0xff] %vm225, %v387
      %502 = vst.msk [vmem:[%s459 + $0x149] sm:$0xff] %vm225, %v388
      %503 = vst.msk [vmem:[%s459 + $0x151] sm:$0xff] %vm225, %v389
      %504 = vst.msk [vmem:[%s459 + $0x159] sm:$0xf] %vm463, %v390
      %505 = vst.msk [vmem:[%s459 + $0x161] sm:$0xff] %vm225, %v391
      %506 = vst.msk [vmem:[%s459 + $0x169] sm:$0xff] %vm225, %v392
      %507 = vst.msk [vmem:[%s459 + $0x171] sm:$0xff] %vm225, %v393
      %508 = vst.msk [vmem:[%s459 + $0x179] sm:$0xf] %vm463, %v394
      %509 = vst.msk [vmem:[%s459 + $0x181] sm:$0xff] %vm225, %v395
      %510 = vst.msk [vmem:[%s459 + $0x189] sm:$0xff] %vm225, %v396
      %511 = vst.msk [vmem:[%s459 + $0x191] sm:$0xff] %vm225, %v397
      %512 = vst.msk [vmem:[%s459 + $0x199] sm:$0xf] %vm463, %v398
      %513 = vst.msk [vmem:[%s459 + $0x1a1] sm:$0xff] %vm225, %v399
      %514 = vst.msk [vmem:[%s459 + $0x1a9] sm:$0xff] %vm225, %v400
      %515 = vst.msk [vmem:[%s459 + $0x1b1] sm:$0xff] %vm225, %v401
      %516 = vst.msk [vmem:[%s459 + $0x1b9] sm:$0xf] %vm463, %v402
      %517 = vst.msk [vmem:[%s459 + $0x1c1] sm:$0xff] %vm225, %v403
      %518 = vst.msk [vmem:[%s459 + $0x1c9] sm:$0xff] %vm225, %v404
      %519 = vst.msk [vmem:[%s459 + $0x1d1] sm:$0xff] %vm225, %v405
      %520 = vst.msk [vmem:[%s459 + $0x1d9] sm:$0xf] %vm463, %v406
      %521 = vst.msk [vmem:[%s459 + $0x1e1] sm:$0xff] %vm225, %v407
      %522 = vst.msk [vmem:[%s459 + $0x1e9] sm:$0xff] %vm225, %v408
      %523 = vst.msk [vmem:[%s459 + $0x1f1] sm:$0xff] %vm225, %v409
      %524 = vst.msk [vmem:[%s459 + $0x1f9] sm:$0xf] %vm463, %v410
      %525 = vst.msk [vmem:[%s459 + $0x201] sm:$0xff] %vm225, %v411
      %526 = vst.msk [vmem:[%s459 + $0x209] sm:$0xff] %vm225, %v412
      %527 = vst.msk [vmem:[%s459 + $0x211] sm:$0xff] %vm225, %v413
      %528 = vst.msk [vmem:[%s459 + $0x219] sm:$0xf] %vm463, %v414
      %529 = vst.msk [vmem:[%s459 + $0x221] sm:$0xff] %vm225, %v415
      %530 = vst.msk [vmem:[%s459 + $0x229] sm:$0xff] %vm225, %v416
      %531 = vst.msk [vmem:[%s459 + $0x231] sm:$0xff] %vm225, %v417
      %532 = vst.msk [vmem:[%s459 + $0x239] sm:$0xf] %vm463, %v418
      %533 = vst.msk [vmem:[%s459 + $0x241] sm:$0xff] %vm225, %v419
      %534 = vst.msk [vmem:[%s459 + $0x249] sm:$0xff] %vm225, %v420
      %535 = vst.msk [vmem:[%s459 + $0x251] sm:$0xff] %vm225, %v421
      %536 = vst.msk [vmem:[%s459 + $0x259] sm:$0xf] %vm463, %v422
      %537 = vst.msk [vmem:[%s459 + $0x261] sm:$0xff] %vm225, %v423
      %538 = vst.msk [vmem:[%s459 + $0x269] sm:$0xff] %vm225, %v424
      %539 = vst.msk [vmem:[%s459 + $0x271] sm:$0xff] %vm225, %v425
      %540 = vst.msk [vmem:[%s459 + $0x279] sm:$0xf] %vm463, %v426
      %541 = vst.msk [vmem:[%s459 + $0x281] sm:$0xff] %vm225, %v427
      %542 = vst.msk [vmem:[%s459 + $0x289] sm:$0xff] %vm225, %v428
      %543 = vst.msk [vmem:[%s459 + $0x291] sm:$0xff] %vm225, %v429
      %544 = vst.msk [vmem:[%s459 + $0x299] sm:$0xf] %vm463, %v430
      %545 = vst.msk [vmem:[%s459 + $0x2a1] sm:$0xff] %vm225, %v431
      %546 = vst.msk [vmem:[%s459 + $0x2a9] sm:$0xff] %vm225, %v432
      %547 = vst.msk [vmem:[%s459 + $0x2b1] sm:$0xff] %vm225, %v433
      %548 = vst.msk [vmem:[%s459 + $0x2b9] sm:$0xf] %vm463, %v434
      %549 = vst.msk [vmem:[%s459 + $0x2c1] sm:$0xff] %vm225, %v435
      %550 = vst.msk [vmem:[%s459 + $0x2c9] sm:$0xff] %vm225, %v436
      %551 = vst.msk [vmem:[%s459 + $0x2d1] sm:$0xff] %vm225, %v437
      %552 = vst.msk [vmem:[%s459 + $0x2d9] sm:$0xf] %vm463, %v438
      %553 = vst.msk [vmem:[%s459 + $0x2e1] sm:$0xff] %vm225, %v439
      %554 = vst.msk [vmem:[%s459 + $0x2e9] sm:$0xff] %vm225, %v440
      %555 = vst.msk [vmem:[%s459 + $0x2f1] sm:$0xff] %vm225, %v441
      %556 = vst.msk [vmem:[%s459 + $0x2f9] sm:$0xf] %vm463, %v442
      %557 = vst.msk [vmem:[%s459 + $0x301] sm:$0xff] %vm225, %v443
      %558 = vst.msk [vmem:[%s459 + $0x309] sm:$0xff] %vm225, %v444
      %559 = vst.msk [vmem:[%s459 + $0x311] sm:$0xff] %vm225, %v445
      %560 = vst.msk [vmem:[%s459 + $0x319] sm:$0xf] %vm463, %v446
      %561 = vst.msk [vmem:[%s459 + $0x321] sm:$0xff] %vm225, %v447
      %562 = vst.msk [vmem:[%s459 + $0x329] sm:$0xff] %vm225, %v448
      %563 = vst.msk [vmem:[%s459 + $0x331] sm:$0xff] %vm225, %v449
      %564 = vst.msk [vmem:[%s459 + $0x339] sm:$0xf] %vm463, %v450
      %565 = vst.msk [vmem:[%s459 + $0x341] sm:$0xff] %vm225, %v451
      %566 = vst.msk [vmem:[%s459 + $0x349] sm:$0xff] %vm225, %v452
      %567 = vst.msk [vmem:[%s459 + $0x351] sm:$0xff] %vm225, %v453
      %568 = vst.msk [vmem:[%s459 + $0x359] sm:$0xf] %vm463, %v454
      %569 = vst.msk [vmem:[%s459 + $0x361] sm:$0xff] %vm225, %v455
      %570 = vst.msk [vmem:[%s459 + $0x369] sm:$0xff] %vm225, %v456
      %571 = vst.msk [vmem:[%s459 + $0x371] sm:$0xff] %vm225, %v457
      %572 = vst.msk [vmem:[%s459 + $0x379] sm:$0xf] %vm463, %v458
      %v573 = vld [vmem:[%s1] sm:$0xff]
      %v574 = vld [vmem:[%s1 + $0x8] sm:$0x1]
      %v575 = vld [vmem:[%s2] sm:$0x1]
      loop: start=0, step=1, limit=14
      $region41: #{cnn_forward.2} parent=39 // loop_pre_header
        _
      $region42: #{cnn_forward.2} parent=39 // loop_header
        %s577 = sphi 0, %s581
        %p578 = scmp.ge.s32.totalorder %s577, 14
      $region43: #{cnn_forward.2} parent=39 // loop_header_branch
        %580 = sbr.rel (%p578) target = $region47
      $region44: #{cnn_forward.2} parent=39 // loop_body
        %s582 = smul.u32 %s577, 2
        %s583 = smul.u32 %s582, 32
        %s584 = scalar_lea.vmem [#allocation2], %s583
        %v585 = vld [vmem:[%s584] sm:$0xff]
        %v586 = vld [vmem:[%s584 + $0x8] sm:$0xff]
        %v587 = vld [vmem:[%s584 + $0x10] sm:$0xff]
        %v588 = vld [vmem:[%s584 + $0x18] sm:$0xf]
        %590 = vset.pattern.permute.xlu0 0
        %591 = vperm.xlu0 %590, %v585
        %v592 = vpop.permute.xlu0 %591
        %595 = vset.pattern.permute.xlu0 0
        %596 = vperm.xlu0 %595, %v586
        %v597 = vpop.permute.xlu0 %596
        %600 = vset.pattern.permute.xlu0 0
        %601 = vperm.xlu0 %600, %v587
        %v602 = vpop.permute.xlu0 %601
        %605 = vset.pattern.permute.xlu0 0
        %606 = vperm.xlu0 %605, %v588
        %v607 = vpop.permute.xlu0 %606
        %v609 = vperm.slane %v573, 0
        %v610 = vmul.f32 %v592, %v609
        %v611 = vmul.f32 %v597, %v609
        %v612 = vmul.f32 %v602, %v609
        %v613 = vmul.f32 %v607, %v609
        %v614 = vadd.f32 %v610, 0.0
        %v615 = vadd.f32 %v611, 0.0
        %v616 = vadd.f32 %v612, 0.0
        %v617 = vadd.f32 %v613, 0.0
        %v618 = vld [vmem:[%s584 + $0x1] sm:$0xff]
        %v619 = vld [vmem:[%s584 + $0x9] sm:$0xff]
        %v620 = vld [vmem:[%s584 + $0x11] sm:$0xff]
        %v621 = vld [vmem:[%s584 + $0x19] sm:$0xf]
        %623 = vset.pattern.permute.xlu0 0
        %624 = vperm.xlu0 %623, %v618
        %v625 = vpop.permute.xlu0 %624
        %628 = vset.pattern.permute.xlu0 0
        %629 = vperm.xlu0 %628, %v619
        %v630 = vpop.permute.xlu0 %629
        %633 = vset.pattern.permute.xlu0 0
        %634 = vperm.xlu0 %633, %v620
        %v635 = vpop.permute.xlu0 %634
        %638 = vset.pattern.permute.xlu0 0
        %639 = vperm.xlu0 %638, %v621
        %v640 = vpop.permute.xlu0 %639
        %v642 = vperm.slane %v573, 1
        %v643 = vmul.f32 %v625, %v642
        %v644 = vmul.f32 %v630, %v642
        %v645 = vmul.f32 %v635, %v642
        %v646 = vmul.f32 %v640, %v642
        %v647 = vadd.f32 %v614, %v643
        %v648 = vadd.f32 %v615, %v644
        %v649 = vadd.f32 %v616, %v645
        %v650 = vadd.f32 %v617, %v646
        %v651 = vld [vmem:[%s584 + $0x2] sm:$0xff]
        %v652 = vld [vmem:[%s584 + $0xa] sm:$0xff]
        %v653 = vld [vmem:[%s584 + $0x12] sm:$0xff]
        %v654 = vld [vmem:[%s584 + $0x1a] sm:$0xf]
        %656 = vset.pattern.permute.xlu0 0
        %657 = vperm.xlu0 %656, %v651
        %v658 = vpop.permute.xlu0 %657
        %661 = vset.pattern.permute.xlu0 0
        %662 = vperm.xlu0 %661, %v652
        %v663 = vpop.permute.xlu0 %662
        %666 = vset.pattern.permute.xlu0 0
        %667 = vperm.xlu0 %666, %v653
        %v668 = vpop.permute.xlu0 %667
        %671 = vset.pattern.permute.xlu0 0
        %672 = vperm.xlu0 %671, %v654
        %v673 = vpop.permute.xlu0 %672
        %v675 = vperm.slane %v573, 2
        %v676 = vmul.f32 %v658, %v675
        %v677 = vmul.f32 %v663, %v675
        %v678 = vmul.f32 %v668, %v675
        %v679 = vmul.f32 %v673, %v675
        %v680 = vadd.f32 %v647, %v676
        %v681 = vadd.f32 %v648, %v677
        %v682 = vadd.f32 %v649, %v678
        %v683 = vadd.f32 %v650, %v679
        %s684 = sadd.s32 %s582, 1
        %s685 = smul.u32 %s684, 32
        %s686 = scalar_lea.vmem [#allocation2], %s685
        %v687 = vld [vmem:[%s686] sm:$0xff]
        %v688 = vld [vmem:[%s686 + $0x8] sm:$0xff]
        %v689 = vld [vmem:[%s686 + $0x10] sm:$0xff]
        %v690 = vld [vmem:[%s686 + $0x18] sm:$0xf]
        %692 = vset.pattern.permute.xlu0 0
        %693 = vperm.xlu0 %692, %v687
        %v694 = vpop.permute.xlu0 %693
        %697 = vset.pattern.permute.xlu0 0
        %698 = vperm.xlu0 %697, %v688
        %v699 = vpop.permute.xlu0 %698
        %702 = vset.pattern.permute.xlu0 0
        %703 = vperm.xlu0 %702, %v689
        %v704 = vpop.permute.xlu0 %703
        %707 = vset.pattern.permute.xlu0 0
        %708 = vperm.xlu0 %707, %v690
        %v709 = vpop.permute.xlu0 %708
        %v711 = vperm.slane %v573, 3
        %v712 = vmul.f32 %v694, %v711
        %v713 = vmul.f32 %v699, %v711
        %v714 = vmul.f32 %v704, %v711
        %v715 = vmul.f32 %v709, %v711
        %v716 = vadd.f32 %v680, %v712
        %v717 = vadd.f32 %v681, %v713
        %v718 = vadd.f32 %v682, %v714
        %v719 = vadd.f32 %v683, %v715
        %v720 = vld [vmem:[%s686 + $0x1] sm:$0xff]
        %v721 = vld [vmem:[%s686 + $0x9] sm:$0xff]
        %v722 = vld [vmem:[%s686 + $0x11] sm:$0xff]
        %v723 = vld [vmem:[%s686 + $0x19] sm:$0xf]
        %725 = vset.pattern.permute.xlu0 0
        %726 = vperm.xlu0 %725, %v720
        %v727 = vpop.permute.xlu0 %726
        %730 = vset.pattern.permute.xlu0 0
        %731 = vperm.xlu0 %730, %v721
        %v732 = vpop.permute.xlu0 %731
        %735 = vset.pattern.permute.xlu0 0
        %736 = vperm.xlu0 %735, %v722
        %v737 = vpop.permute.xlu0 %736
        %740 = vset.pattern.permute.xlu0 0
        %741 = vperm.xlu0 %740, %v723
        %v742 = vpop.permute.xlu0 %741
        %v744 = vperm.slane %v573, 4
        %v745 = vmul.f32 %v727, %v744
        %v746 = vmul.f32 %v732, %v744
        %v747 = vmul.f32 %v737, %v744
        %v748 = vmul.f32 %v742, %v744
        %v749 = vadd.f32 %v716, %v745
        %v750 = vadd.f32 %v717, %v746
        %v751 = vadd.f32 %v718, %v747
        %v752 = vadd.f32 %v719, %v748
        %v753 = vld [vmem:[%s686 + $0x2] sm:$0xff]
        %v754 = vld [vmem:[%s686 + $0xa] sm:$0xff]
        %v755 = vld [vmem:[%s686 + $0x12] sm:$0xff]
        %v756 = vld [vmem:[%s686 + $0x1a] sm:$0xf]
        %758 = vset.pattern.permute.xlu0 0
        %759 = vperm.xlu0 %758, %v753
        %v760 = vpop.permute.xlu0 %759
        %763 = vset.pattern.permute.xlu0 0
        %764 = vperm.xlu0 %763, %v754
        %v765 = vpop.permute.xlu0 %764
        %768 = vset.pattern.permute.xlu0 0
        %769 = vperm.xlu0 %768, %v755
        %v770 = vpop.permute.xlu0 %769
        %773 = vset.pattern.permute.xlu0 0
        %774 = vperm.xlu0 %773, %v756
        %v775 = vpop.permute.xlu0 %774
        %v777 = vperm.slane %v573, 5
        %v778 = vmul.f32 %v760, %v777
        %v779 = vmul.f32 %v765, %v777
        %v780 = vmul.f32 %v770, %v777
        %v781 = vmul.f32 %v775, %v777
        %v782 = vadd.f32 %v749, %v778
        %v783 = vadd.f32 %v750, %v779
        %v784 = vadd.f32 %v751, %v780
        %v785 = vadd.f32 %v752, %v781
        %s786 = sadd.s32 %s582, 2
        %s787 = smul.u32 %s786, 32
        %s788 = scalar_lea.vmem [#allocation2], %s787
        %v789 = vld [vmem:[%s788] sm:$0xff]
        %v790 = vld [vmem:[%s788 + $0x8] sm:$0xff]
        %v791 = vld [vmem:[%s788 + $0x10] sm:$0xff]
        %v792 = vld [vmem:[%s788 + $0x18] sm:$0xf]
        %794 = vset.pattern.permute.xlu0 0
        %795 = vperm.xlu0 %794, %v789
        %v796 = vpop.permute.xlu0 %795
        %799 = vset.pattern.permute.xlu0 0
        %800 = vperm.xlu0 %799, %v790
        %v801 = vpop.permute.xlu0 %800
        %804 = vset.pattern.permute.xlu0 0
        %805 = vperm.xlu0 %804, %v791
        %v806 = vpop.permute.xlu0 %805
        %809 = vset.pattern.permute.xlu0 0
        %810 = vperm.xlu0 %809, %v792
        %v811 = vpop.permute.xlu0 %810
        %v813 = vperm.slane %v573, 6
        %v814 = vmul.f32 %v796, %v813
        %v815 = vmul.f32 %v801, %v813
        %v816 = vmul.f32 %v806, %v813
        %v817 = vmul.f32 %v811, %v813
        %v818 = vadd.f32 %v782, %v814
        %v819 = vadd.f32 %v783, %v815
        %v820 = vadd.f32 %v784, %v816
        %v821 = vadd.f32 %v785, %v817
        %v822 = vld [vmem:[%s788 + $0x1] sm:$0xff]
        %v823 = vld [vmem:[%s788 + $0x9] sm:$0xff]
        %v824 = vld [vmem:[%s788 + $0x11] sm:$0xff]
        %v825 = vld [vmem:[%s788 + $0x19] sm:$0xf]
        %827 = vset.pattern.permute.xlu0 0
        %828 = vperm.xlu0 %827, %v822
        %v829 = vpop.permute.xlu0 %828
        %832 = vset.pattern.permute.xlu0 0
        %833 = vperm.xlu0 %832, %v823
        %v834 = vpop.permute.xlu0 %833
        %837 = vset.pattern.permute.xlu0 0
        %838 = vperm.xlu0 %837, %v824
        %v839 = vpop.permute.xlu0 %838
        %842 = vset.pattern.permute.xlu0 0
        %843 = vperm.xlu0 %842, %v825
        %v844 = vpop.permute.xlu0 %843
        %v846 = vperm.slane %v573, 7
        %v847 = vmul.f32 %v829, %v846
        %v848 = vmul.f32 %v834, %v846
        %v849 = vmul.f32 %v839, %v846
        %v850 = vmul.f32 %v844, %v846
        %v851 = vadd.f32 %v818, %v847
        %v852 = vadd.f32 %v819, %v848
        %v853 = vadd.f32 %v820, %v849
        %v854 = vadd.f32 %v821, %v850
        %v855 = vld [vmem:[%s788 + $0x2] sm:$0xff]
        %v856 = vld [vmem:[%s788 + $0xa] sm:$0xff]
        %v857 = vld [vmem:[%s788 + $0x12] sm:$0xff]
        %v858 = vld [vmem:[%s788 + $0x1a] sm:$0xf]
        %860 = vset.pattern.permute.xlu0 0
        %861 = vperm.xlu0 %860, %v855
        %v862 = vpop.permute.xlu0 %861
        %865 = vset.pattern.permute.xlu0 0
        %866 = vperm.xlu0 %865, %v856
        %v867 = vpop.permute.xlu0 %866
        %870 = vset.pattern.permute.xlu0 0
        %871 = vperm.xlu0 %870, %v857
        %v872 = vpop.permute.xlu0 %871
        %875 = vset.pattern.permute.xlu0 0
        %876 = vperm.xlu0 %875, %v858
        %v877 = vpop.permute.xlu0 %876
        %v879 = vperm.slane %v574, 0
        %v880 = vmul.f32 %v862, %v879
        %v881 = vmul.f32 %v867, %v879
        %v882 = vmul.f32 %v872, %v879
        %v883 = vmul.f32 %v877, %v879
        %v884 = vadd.f32 %v851, %v880
        %v885 = vadd.f32 %v852, %v881
        %v886 = vadd.f32 %v853, %v882
        %v887 = vadd.f32 %v854, %v883
        %v888 = vmul.f32 %v694, %v609
        %v889 = vmul.f32 %v699, %v609
        %v890 = vmul.f32 %v704, %v609
        %v891 = vmul.f32 %v709, %v609
        %v892 = vadd.f32 %v888, 0.0
        %v893 = vadd.f32 %v889, 0.0
        %v894 = vadd.f32 %v890, 0.0
        %v895 = vadd.f32 %v891, 0.0
        %v896 = vmul.f32 %v727, %v642
        %v897 = vmul.f32 %v732, %v642
        %v898 = vmul.f32 %v737, %v642
        %v899 = vmul.f32 %v742, %v642
        %v900 = vadd.f32 %v892, %v896
        %v901 = vadd.f32 %v893, %v897
        %v902 = vadd.f32 %v894, %v898
        %v903 = vadd.f32 %v895, %v899
        %v904 = vmul.f32 %v760, %v675
        %v905 = vmul.f32 %v765, %v675
        %v906 = vmul.f32 %v770, %v675
        %v907 = vmul.f32 %v775, %v675
        %v908 = vadd.f32 %v900, %v904
        %v909 = vadd.f32 %v901, %v905
        %v910 = vadd.f32 %v902, %v906
        %v911 = vadd.f32 %v903, %v907
        %v912 = vmul.f32 %v796, %v711
        %v913 = vmul.f32 %v801, %v711
        %v914 = vmul.f32 %v806, %v711
        %v915 = vmul.f32 %v811, %v711
        %v916 = vadd.f32 %v908, %v912
        %v917 = vadd.f32 %v909, %v913
        %v918 = vadd.f32 %v910, %v914
        %v919 = vadd.f32 %v911, %v915
        %v920 = vmul.f32 %v829, %v744
        %v921 = vmul.f32 %v834, %v744
        %v922 = vmul.f32 %v839, %v744
        %v923 = vmul.f32 %v844, %v744
        %v924 = vadd.f32 %v916, %v920
        %v925 = vadd.f32 %v917, %v921
        %v926 = vadd.f32 %v918, %v922
        %v927 = vadd.f32 %v919, %v923
        %v928 = vmul.f32 %v862, %v777
        %v929 = vmul.f32 %v867, %v777
        %v930 = vmul.f32 %v872, %v777
        %v931 = vmul.f32 %v877, %v777
        %v932 = vadd.f32 %v924, %v928
        %v933 = vadd.f32 %v925, %v929
        %v934 = vadd.f32 %v926, %v930
        %v935 = vadd.f32 %v927, %v931
        %s936 = sadd.s32 %s582, 3
        %s937 = smul.u32 %s936, 32
        %s938 = scalar_lea.vmem [#allocation2], %s937
        %v939 = vld [vmem:[%s938] sm:$0xff]
        %v940 = vld [vmem:[%s938 + $0x8] sm:$0xff]
        %v941 = vld [vmem:[%s938 + $0x10] sm:$0xff]
        %v942 = vld [vmem:[%s938 + $0x18] sm:$0xf]
        %944 = vset.pattern.permute.xlu0 0
        %945 = vperm.xlu0 %944, %v939
        %v946 = vpop.permute.xlu0 %945
        %949 = vset.pattern.permute.xlu0 0
        %950 = vperm.xlu0 %949, %v940
        %v951 = vpop.permute.xlu0 %950
        %954 = vset.pattern.permute.xlu0 0
        %955 = vperm.xlu0 %954, %v941
        %v956 = vpop.permute.xlu0 %955
        %959 = vset.pattern.permute.xlu0 0
        %960 = vperm.xlu0 %959, %v942
        %v961 = vpop.permute.xlu0 %960
        %v963 = vmul.f32 %v946, %v813
        %v964 = vmul.f32 %v951, %v813
        %v965 = vmul.f32 %v956, %v813
        %v966 = vmul.f32 %v961, %v813
        %v967 = vadd.f32 %v932, %v963
        %v968 = vadd.f32 %v933, %v964
        %v969 = vadd.f32 %v934, %v965
        %v970 = vadd.f32 %v935, %v966
        %v971 = vld [vmem:[%s938 + $0x1] sm:$0xff]
        %v972 = vld [vmem:[%s938 + $0x9] sm:$0xff]
        %v973 = vld [vmem:[%s938 + $0x11] sm:$0xff]
        %v974 = vld [vmem:[%s938 + $0x19] sm:$0xf]
        %976 = vset.pattern.permute.xlu0 0
        %977 = vperm.xlu0 %976, %v971
        %v978 = vpop.permute.xlu0 %977
        %981 = vset.pattern.permute.xlu0 0
        %982 = vperm.xlu0 %981, %v972
        %v983 = vpop.permute.xlu0 %982
        %986 = vset.pattern.permute.xlu0 0
        %987 = vperm.xlu0 %986, %v973
        %v988 = vpop.permute.xlu0 %987
        %991 = vset.pattern.permute.xlu0 0
        %992 = vperm.xlu0 %991, %v974
        %v993 = vpop.permute.xlu0 %992
        %v995 = vmul.f32 %v978, %v846
        %v996 = vmul.f32 %v983, %v846
        %v997 = vmul.f32 %v988, %v846
        %v998 = vmul.f32 %v993, %v846
        %v999 = vadd.f32 %v967, %v995
        %v1000 = vadd.f32 %v968, %v996
        %v1001 = vadd.f32 %v969, %v997
        %v1002 = vadd.f32 %v970, %v998
        %v1003 = vld [vmem:[%s938 + $0x2] sm:$0xff]
        %v1004 = vld [vmem:[%s938 + $0xa] sm:$0xff]
        %v1005 = vld [vmem:[%s938 + $0x12] sm:$0xff]
        %v1006 = vld [vmem:[%s938 + $0x1a] sm:$0xf]
        %1008 = vset.pattern.permute.xlu0 0
        %1009 = vperm.xlu0 %1008, %v1003
        %v1010 = vpop.permute.xlu0 %1009
        %1013 = vset.pattern.permute.xlu0 0
        %1014 = vperm.xlu0 %1013, %v1004
        %v1015 = vpop.permute.xlu0 %1014
        %1018 = vset.pattern.permute.xlu0 0
        %1019 = vperm.xlu0 %1018, %v1005
        %v1020 = vpop.permute.xlu0 %1019
        %1023 = vset.pattern.permute.xlu0 0
        %1024 = vperm.xlu0 %1023, %v1006
        %v1025 = vpop.permute.xlu0 %1024
        %v1027 = vmul.f32 %v1010, %v879
        %v1028 = vmul.f32 %v1015, %v879
        %v1029 = vmul.f32 %v1020, %v879
        %v1030 = vmul.f32 %v1025, %v879
        %v1031 = vadd.f32 %v999, %v1027
        %v1032 = vadd.f32 %v1000, %v1028
        %v1033 = vadd.f32 %v1001, %v1029
        %v1034 = vadd.f32 %v1002, %v1030
        %v1035 = vmax.f32 %v884, %v1031
        %v1036 = vmax.f32 %v885, %v1032
        %v1037 = vmax.f32 %v886, %v1033
        %v1038 = vmax.f32 %v887, %v1034
        %v1040 = vperm.slane %v575, 0
        %v1042 = vadd.f32 %v1035, %v1040
        %v1043 = vadd.f32 %v1036, %v1040
        %v1044 = vadd.f32 %v1037, %v1040
        %v1045 = vadd.f32 %v1038, %v1040
        %v1046 = vmax.f32 %v1042, 0.0
        %v1047 = vmax.f32 %v1043, 0.0
        %v1048 = vmax.f32 %v1044, 0.0
        %v1049 = vmax.f32 %v1045, 0.0
        %s1050 = smul.u32 %s577, 32
        %s1051 = scalar_lea.vmem [#allocation3], %s1050
        %vm1052 = vcmask 261120
        %1053 = vst.msk [vmem:[%s1051] sm:$0xff] %vm1052, %v1046
        %1054 = vst.msk [vmem:[%s1051 + $0x8] sm:$0xff] %vm1052, %v1047
        %1055 = vst.msk [vmem:[%s1051 + $0x10] sm:$0xff] %vm1052, %v1048
        %vm1056 = vcmask 257024
        %1057 = vst.msk [vmem:[%s1051 + $0x18] sm:$0xf] %vm1056, %v1049
      $region45: #{cnn_forward.2} parent=39 // loop_footer
        %s581 = sadd.s32 1, %s577
      $region46: #{cnn_forward.2} parent=39 // loop_footer_branch
        %576 = sbr.rel target = $region42
      $region47: #{cnn_forward.2} parent=39 // loop_exit
        _
      %1058 = vst [vmem:[#allocation4] sm:$0xff] 0.0
      %1059 = vst [vmem:[#allocation4 + $0x8] sm:$0xff] 0.0
      %1060 = vst [vmem:[#allocation4 + $0x10] sm:$0xff] 0.0
      %1061 = vst [vmem:[#allocation4 + $0x18] sm:$0xff] 0.0
      %1062 = vst [vmem:[#allocation4 + $0x20] sm:$0xff] 0.0
      %1063 = vst [vmem:[#allocation4 + $0x28] sm:$0xff] 0.0
      %1064 = vst [vmem:[#allocation4 + $0x30] sm:$0xff] 0.0
      %1065 = vst [vmem:[#allocation4 + $0x38] sm:$0xff] 0.0
      %1066 = vst [vmem:[#allocation4 + $0x40] sm:$0xff] 0.0
      %1067 = vst [vmem:[#allocation4 + $0x48] sm:$0xff] 0.0
      %1068 = vst [vmem:[#allocation4 + $0x50] sm:$0xff] 0.0
      %1069 = vst [vmem:[#allocation4 + $0x58] sm:$0xff] 0.0
      %1070 = vst [vmem:[#allocation4 + $0x60] sm:$0xff] 0.0
      %1071 = vst [vmem:[#allocation4 + $0x68] sm:$0xff] 0.0
      %1072 = vst [vmem:[#allocation4 + $0x70] sm:$0xff] 0.0
      %1073 = vst [vmem:[#allocation4 + $0x78] sm:$0xff] 0.0
      %1074 = vst [vmem:[#allocation4 + $0x80] sm:$0xff] 0.0
      %1075 = vst [vmem:[#allocation4 + $0x88] sm:$0xff] 0.0
      %1076 = vst [vmem:[#allocation4 + $0x90] sm:$0xff] 0.0
      %1077 = vst [vmem:[#allocation4 + $0x98] sm:$0xff] 0.0
      %1078 = vst [vmem:[#allocation4 + $0xa0] sm:$0xff] 0.0
      %1079 = vst [vmem:[#allocation4 + $0xa8] sm:$0xff] 0.0
      %1080 = vst [vmem:[#allocation4 + $0xb0] sm:$0xff] 0.0
      %1081 = vst [vmem:[#allocation4 + $0xb8] sm:$0xff] 0.0
      %1082 = vst [vmem:[#allocation4 + $0xc0] sm:$0xff] 0.0
      %1083 = vst [vmem:[#allocation4 + $0xc8] sm:$0xff] 0.0
      %1084 = vst [vmem:[#allocation4 + $0xd0] sm:$0xff] 0.0
      %1085 = vst [vmem:[#allocation4 + $0xd8] sm:$0xff] 0.0
      %1086 = vst [vmem:[#allocation4 + $0xe0] sm:$0xff] 0.0
      %1087 = vst [vmem:[#allocation4 + $0xe8] sm:$0xff] 0.0
      %1088 = vst [vmem:[#allocation4 + $0xf0] sm:$0xff] 0.0
      %1089 = vst [vmem:[#allocation4 + $0xf8] sm:$0xff] 0.0
      %v1090 = vld [vmem:[#allocation3] ss:$2 sm:$0xff]
      %s1091 = scalar_lea.vmem [#allocation3], 16
      %v1092 = vld [vmem:[%s1091] ss:$2 sm:$0x3f]
      %s1093 = scalar_lea.vmem [#allocation3], 32
      %v1094 = vld [vmem:[%s1093] ss:$2 sm:$0xff]
      %s1095 = scalar_lea.vmem [#allocation3], 48
      %v1096 = vld [vmem:[%s1095] ss:$2 sm:$0x3f]
      %s1097 = scalar_lea.vmem [#allocation3], 64
      %v1098 = vld [vmem:[%s1097] ss:$2 sm:$0xff]
      %s1099 = scalar_lea.vmem [#allocation3], 80
      %v1100 = vld [vmem:[%s1099] ss:$2 sm:$0x3f]
      %s1101 = scalar_lea.vmem [#allocation3], 96
      %v1102 = vld [vmem:[%s1101] ss:$2 sm:$0xff]
      %s1103 = scalar_lea.vmem [#allocation3], 112
      %v1104 = vld [vmem:[%s1103] ss:$2 sm:$0x3f]
      %s1105 = scalar_lea.vmem [#allocation3], 128
      %v1106 = vld [vmem:[%s1105] ss:$2 sm:$0xff]
      %s1107 = scalar_lea.vmem [#allocation3], 144
      %v1108 = vld [vmem:[%s1107] ss:$2 sm:$0x3f]
      %s1109 = scalar_lea.vmem [#allocation3], 160
      %v1110 = vld [vmem:[%s1109] ss:$2 sm:$0xff]
      %s1111 = scalar_lea.vmem [#allocation3], 176
      %v1112 = vld [vmem:[%s1111] ss:$2 sm:$0x3f]
      %s1113 = scalar_lea.vmem [#allocation3], 192
      %v1114 = vld [vmem:[%s1113] ss:$2 sm:$0xff]
      %s1115 = scalar_lea.vmem [#allocation3], 208
      %v1116 = vld [vmem:[%s1115] ss:$2 sm:$0x3f]
      %s1117 = scalar_lea.vmem [#allocation3], 224
      %v1118 = vld [vmem:[%s1117] ss:$2 sm:$0xff]
      %s1119 = scalar_lea.vmem [#allocation3], 240
      %v1120 = vld [vmem:[%s1119] ss:$2 sm:$0x3f]
      %s1121 = scalar_lea.vmem [#allocation3], 256
      %v1122 = vld [vmem:[%s1121] ss:$2 sm:$0xff]
      %s1123 = scalar_lea.vmem [#allocation3], 272
      %v1124 = vld [vmem:[%s1123] ss:$2 sm:$0x3f]
      %s1125 = scalar_lea.vmem [#allocation3], 288
      %v1126 = vld [vmem:[%s1125] ss:$2 sm:$0xff]
      %s1127 = scalar_lea.vmem [#allocation3], 304
      %v1128 = vld [vmem:[%s1127] ss:$2 sm:$0x3f]
      %s1129 = scalar_lea.vmem [#allocation3], 320
      %v1130 = vld [vmem:[%s1129] ss:$2 sm:$0xff]
      %s1131 = scalar_lea.vmem [#allocation3], 336
      %v1132 = vld [vmem:[%s1131] ss:$2 sm:$0x3f]
      %s1133 = scalar_lea.vmem [#allocation3], 352
      %v1134 = vld [vmem:[%s1133] ss:$2 sm:$0xff]
      %s1135 = scalar_lea.vmem [#allocation3], 368
      %v1136 = vld [vmem:[%s1135] ss:$2 sm:$0x3f]
      %s1137 = scalar_lea.vmem [#allocation3], 384
      %v1138 = vld [vmem:[%s1137] ss:$2 sm:$0xff]
      %s1139 = scalar_lea.vmem [#allocation3], 400
      %v1140 = vld [vmem:[%s1139] ss:$2 sm:$0x3f]
      %s1141 = scalar_lea.vmem [#allocation3], 416
      %v1142 = vld [vmem:[%s1141] ss:$2 sm:$0xff]
      %s1143 = scalar_lea.vmem [#allocation3], 432
      %v1144 = vld [vmem:[%s1143] ss:$2 sm:$0x3f]
      %s1145 = scalar_lea.vmem [#allocation3], 1
      %v1146 = vld [vmem:[%s1145] ss:$2 sm:$0xff]
      %s1147 = scalar_lea.vmem [#allocation3], 17
      %v1148 = vld [vmem:[%s1147] ss:$2 sm:$0x3f]
      %s1149 = scalar_lea.vmem [#allocation3], 33
      %v1150 = vld [vmem:[%s1149] ss:$2 sm:$0xff]
      %s1151 = scalar_lea.vmem [#allocation3], 49
      %v1152 = vld [vmem:[%s1151] ss:$2 sm:$0x3f]
      %s1153 = scalar_lea.vmem [#allocation3], 65
      %v1154 = vld [vmem:[%s1153] ss:$2 sm:$0xff]
      %s1155 = scalar_lea.vmem [#allocation3], 81
      %v1156 = vld [vmem:[%s1155] ss:$2 sm:$0x3f]
      %s1157 = scalar_lea.vmem [#allocation3], 97
      %v1158 = vld [vmem:[%s1157] ss:$2 sm:$0xff]
      %s1159 = scalar_lea.vmem [#allocation3], 113
      %v1160 = vld [vmem:[%s1159] ss:$2 sm:$0x3f]
      %s1161 = scalar_lea.vmem [#allocation3], 129
      %v1162 = vld [vmem:[%s1161] ss:$2 sm:$0xff]
      %s1163 = scalar_lea.vmem [#allocation3], 145
      %v1164 = vld [vmem:[%s1163] ss:$2 sm:$0x3f]
      %s1165 = scalar_lea.vmem [#allocation3], 161
      %v1166 = vld [vmem:[%s1165] ss:$2 sm:$0xff]
      %s1167 = scalar_lea.vmem [#allocation3], 177
      %v1168 = vld [vmem:[%s1167] ss:$2 sm:$0x3f]
      %s1169 = scalar_lea.vmem [#allocation3], 193
      %v1170 = vld [vmem:[%s1169] ss:$2 sm:$0xff]
      %s1171 = scalar_lea.vmem [#allocation3], 209
      %v1172 = vld [vmem:[%s1171] ss:$2 sm:$0x3f]
      %s1173 = scalar_lea.vmem [#allocation3], 225
      %v1174 = vld [vmem:[%s1173] ss:$2 sm:$0xff]
      %s1175 = scalar_lea.vmem [#allocation3], 241
      %v1176 = vld [vmem:[%s1175] ss:$2 sm:$0x3f]
      %s1177 = scalar_lea.vmem [#allocation3], 257
      %v1178 = vld [vmem:[%s1177] ss:$2 sm:$0xff]
      %s1179 = scalar_lea.vmem [#allocation3], 273
      %v1180 = vld [vmem:[%s1179] ss:$2 sm:$0x3f]
      %s1181 = scalar_lea.vmem [#allocation3], 289
      %v1182 = vld [vmem:[%s1181] ss:$2 sm:$0xff]
      %s1183 = scalar_lea.vmem [#allocation3], 305
      %v1184 = vld [vmem:[%s1183] ss:$2 sm:$0x3f]
      %s1185 = scalar_lea.vmem [#allocation3], 321
      %v1186 = vld [vmem:[%s1185] ss:$2 sm:$0xff]
      %s1187 = scalar_lea.vmem [#allocation3], 337
      %v1188 = vld [vmem:[%s1187] ss:$2 sm:$0x3f]
      %s1189 = scalar_lea.vmem [#allocation3], 353
      %v1190 = vld [vmem:[%s1189] ss:$2 sm:$0xff]
      %s1191 = scalar_lea.vmem [#allocation3], 369
      %v1192 = vld [vmem:[%s1191] ss:$2 sm:$0x3f]
      %s1193 = scalar_lea.vmem [#allocation3], 385
      %v1194 = vld [vmem:[%s1193] ss:$2 sm:$0xff]
      %s1195 = scalar_lea.vmem [#allocation3], 401
      %v1196 = vld [vmem:[%s1195] ss:$2 sm:$0x3f]
      %s1197 = scalar_lea.vmem [#allocation3], 417
      %v1198 = vld [vmem:[%s1197] ss:$2 sm:$0xff]
      %s1199 = scalar_lea.vmem [#allocation3], 433
      %v1200 = vld [vmem:[%s1199] ss:$2 sm:$0x3f]
      %v1201 = vmax.f32 %v1090, %v1146
      %v1202 = vmax.f32 %v1092, %v1148
      %v1203 = vmax.f32 %v1094, %v1150
      %v1204 = vmax.f32 %v1096, %v1152
      %v1205 = vmax.f32 %v1098, %v1154
      %v1206 = vmax.f32 %v1100, %v1156
      %v1207 = vmax.f32 %v1102, %v1158
      %v1208 = vmax.f32 %v1104, %v1160
      %v1209 = vmax.f32 %v1106, %v1162
      %v1210 = vmax.f32 %v1108, %v1164
      %v1211 = vmax.f32 %v1110, %v1166
      %v1212 = vmax.f32 %v1112, %v1168
      %v1213 = vmax.f32 %v1114, %v1170
      %v1214 = vmax.f32 %v1116, %v1172
      %v1215 = vmax.f32 %v1118, %v1174
      %v1216 = vmax.f32 %v1120, %v1176
      %v1217 = vmax.f32 %v1122, %v1178
      %v1218 = vmax.f32 %v1124, %v1180
      %v1219 = vmax.f32 %v1126, %v1182
      %v1220 = vmax.f32 %v1128, %v1184
      %v1221 = vmax.f32 %v1130, %v1186
      %v1222 = vmax.f32 %v1132, %v1188
      %v1223 = vmax.f32 %v1134, %v1190
      %v1224 = vmax.f32 %v1136, %v1192
      %v1225 = vmax.f32 %v1138, %v1194
      %v1226 = vmax.f32 %v1140, %v1196
      %v1227 = vmax.f32 %v1142, %v1198
      %v1228 = vmax.f32 %v1144, %v1200
      %s1229 = scalar_lea.vmem [#allocation4], 16
      %vm1230 = vcmask 261120
      %1231 = vst.msk [vmem:[%s1229 + $0x1] sm:$0xff] %vm1230, %v1201
      %vm1232 = vcmask 259072
      %1233 = vst.msk [vmem:[%s1229 + $0x9] sm:$0x3f] %vm1232, %v1202
      %1234 = vst.msk [vmem:[%s1229 + $0x11] sm:$0xff] %vm1230, %v1203
      %1235 = vst.msk [vmem:[%s1229 + $0x19] sm:$0x3f] %vm1232, %v1204
      %1236 = vst.msk [vmem:[%s1229 + $0x21] sm:$0xff] %vm1230, %v1205
      %1237 = vst.msk [vmem:[%s1229 + $0x29] sm:$0x3f] %vm1232, %v1206
      %1238 = vst.msk [vmem:[%s1229 + $0x31] sm:$0xff] %vm1230, %v1207
      %1239 = vst.msk [vmem:[%s1229 + $0x39] sm:$0x3f] %vm1232, %v1208
      %1240 = vst.msk [vmem:[%s1229 + $0x41] sm:$0xff] %vm1230, %v1209
      %1241 = vst.msk [vmem:[%s1229 + $0x49] sm:$0x3f] %vm1232, %v1210
      %1242 = vst.msk [vmem:[%s1229 + $0x51] sm:$0xff] %vm1230, %v1211
      %1243 = vst.msk [vmem:[%s1229 + $0x59] sm:$0x3f] %vm1232, %v1212
      %1244 = vst.msk [vmem:[%s1229 + $0x61] sm:$0xff] %vm1230, %v1213
      %1245 = vst.msk [vmem:[%s1229 + $0x69] sm:$0x3f] %vm1232, %v1214
      %1246 = vst.msk [vmem:[%s1229 + $0x71] sm:$0xff] %vm1230, %v1215
      %1247 = vst.msk [vmem:[%s1229 + $0x79] sm:$0x3f] %vm1232, %v1216
      %1248 = vst.msk [vmem:[%s1229 + $0x81] sm:$0xff] %vm1230, %v1217
      %1249 = vst.msk [vmem:[%s1229 + $0x89] sm:$0x3f] %vm1232, %v1218
      %1250 = vst.msk [vmem:[%s1229 + $0x91] sm:$0xff] %vm1230, %v1219
      %1251 = vst.msk [vmem:[%s1229 + $0x99] sm:$0x3f] %vm1232, %v1220
      %1252 = vst.msk [vmem:[%s1229 + $0xa1] sm:$0xff] %vm1230, %v1221
      %1253 = vst.msk [vmem:[%s1229 + $0xa9] sm:$0x3f] %vm1232, %v1222
      %1254 = vst.msk [vmem:[%s1229 + $0xb1] sm:$0xff] %vm1230, %v1223
      %1255 = vst.msk [vmem:[%s1229 + $0xb9] sm:$0x3f] %vm1232, %v1224
      %1256 = vst.msk [vmem:[%s1229 + $0xc1] sm:$0xff] %vm1230, %v1225
      %1257 = vst.msk [vmem:[%s1229 + $0xc9] sm:$0x3f] %vm1232, %v1226
      %1258 = vst.msk [vmem:[%s1229 + $0xd1] sm:$0xff] %vm1230, %v1227
      %1259 = vst.msk [vmem:[%s1229 + $0xd9] sm:$0x3f] %vm1232, %v1228
      %v1260 = vld [vmem:[%s4] sm:$0x1]
      loop: start=0, step=1, limit=7
      $region48: #{cnn_forward.2} parent=39 // loop_pre_header
        _
      $region49: #{cnn_forward.2} parent=39 // loop_header
        %s1262 = sphi 0, %s1266
        %p1263 = scmp.ge.s32.totalorder %s1262, 7
      $region50: #{cnn_forward.2} parent=39 // loop_header_branch
        %1265 = sbr.rel (%p1263) target = $region54
      $region51: #{cnn_forward.2} parent=39 // loop_body
        %s1267 = smul.u32 %s1262, 2
        %s1268 = smul.u32 %s1267, 16
        %s1269 = scalar_lea.vmem [#allocation4], %s1268
        %v1270 = vld [vmem:[%s1269] sm:$0xff]
        %v1271 = vld [vmem:[%s1269 + $0x8] sm:$0x3f]
        %v1272 = vpack.c.bf16 %v1270, %v1270
        %v1273 = vpack.c.bf16 %v1271, %v1271
        %1274 = vst [vmem:[#allocation5] sm:$0xf] %v1272
        %1275 = vst [vmem:[#allocation5 + $0x24] sm:$0x7] %v1273
        %v1276 = vld [vmem:[%s1269 + $0x1] sm:$0xff]
        %v1277 = vld [vmem:[%s1269 + $0x9] sm:$0x3f]
        %v1278 = vpack.c.bf16 %v1276, %v1276
        %v1279 = vpack.c.bf16 %v1277, %v1277
        %1280 = vst [vmem:[#allocation5 + $0x4] sm:$0xf] %v1278
        %1281 = vst [vmem:[#allocation5 + $0x28] sm:$0x7] %v1279
        %v1282 = vld [vmem:[%s1269 + $0x2] sm:$0xff]
        %v1283 = vld [vmem:[%s1269 + $0xa] sm:$0x3f]
        %v1284 = vpack.c.bf16 %v1282, %v1282
        %v1285 = vpack.c.bf16 %v1283, %v1283
        %1286 = vst [vmem:[#allocation5 + $0x8] sm:$0xf] %v1284
        %1287 = vst [vmem:[#allocation5 + $0x2c] sm:$0x7] %v1285
        %s1288 = sadd.s32 %s1267, 1
        %s1289 = smul.u32 %s1288, 16
        %s1290 = scalar_lea.vmem [#allocation4], %s1289
        %v1291 = vld [vmem:[%s1290] sm:$0xff]
        %v1292 = vld [vmem:[%s1290 + $0x8] sm:$0x3f]
        %v1293 = vpack.c.bf16 %v1291, %v1291
        %v1294 = vpack.c.bf16 %v1292, %v1292
        %1295 = vst [vmem:[#allocation5 + $0xc] sm:$0xf] %v1293
        %1296 = vst [vmem:[#allocation5 + $0x30] sm:$0x7] %v1294
        %v1297 = vld [vmem:[%s1290 + $0x1] sm:$0xff]
        %v1298 = vld [vmem:[%s1290 + $0x9] sm:$0x3f]
        %v1299 = vpack.c.bf16 %v1297, %v1297
        %v1300 = vpack.c.bf16 %v1298, %v1298
        %1301 = vst [vmem:[#allocation5 + $0x10] sm:$0xf] %v1299
        %1302 = vst [vmem:[#allocation5 + $0x34] sm:$0x7] %v1300
        %v1303 = vld [vmem:[%s1290 + $0x2] sm:$0xff]
        %v1304 = vld [vmem:[%s1290 + $0xa] sm:$0x3f]
        %v1305 = vpack.c.bf16 %v1303, %v1303
        %v1306 = vpack.c.bf16 %v1304, %v1304
        %1307 = vst [vmem:[#allocation5 + $0x14] sm:$0xf] %v1305
        %1308 = vst [vmem:[#allocation5 + $0x38] sm:$0x7] %v1306
        %s1309 = sadd.s32 %s1267, 2
        %s1310 = smul.u32 %s1309, 16
        %s1311 = scalar_lea.vmem [#allocation4], %s1310
        %v1312 = vld [vmem:[%s1311] sm:$0xff]
        %v1313 = vld [vmem:[%s1311 + $0x8] sm:$0x3f]
        %v1314 = vpack.c.bf16 %v1312, %v1312
        %v1315 = vpack.c.bf16 %v1313, %v1313
        %1316 = vst [vmem:[#allocation5 + $0x18] sm:$0xf] %v1314
        %1317 = vst [vmem:[#allocation5 + $0x3c] sm:$0x7] %v1315
        %v1318 = vld [vmem:[%s1311 + $0x1] sm:$0xff]
        %v1319 = vld [vmem:[%s1311 + $0x9] sm:$0x3f]
        %v1320 = vpack.c.bf16 %v1318, %v1318
        %v1321 = vpack.c.bf16 %v1319, %v1319
        %1322 = vst [vmem:[#allocation5 + $0x1c] sm:$0xf] %v1320
        %1323 = vst [vmem:[#allocation5 + $0x40] sm:$0x7] %v1321
        %v1324 = vld [vmem:[%s1311 + $0x2] sm:$0xff]
        %v1325 = vld [vmem:[%s1311 + $0xa] sm:$0x3f]
        %v1326 = vpack.c.bf16 %v1324, %v1324
        %v1327 = vpack.c.bf16 %v1325, %v1325
        %1328 = vst [vmem:[#allocation5 + $0x20] sm:$0xf] %v1326
        %1329 = vst [vmem:[#allocation5 + $0x44] sm:$0x7] %v1327
        %v1330 = vld [vmem:[#allocation5] sm:$0xff]
        %v1331 = vld [vmem:[#allocation5 + $0x8] sm:$0xff]
        %v1332 = vld [vmem:[#allocation5 + $0x10] sm:$0xff]
        %v1333 = vld [vmem:[#allocation5 + $0x18] sm:$0xff]
        %v1334 = vld [vmem:[#allocation5 + $0x20] sm:$0xf]
        %v1335 = vld [vmem:[#allocation5 + $0x24] sm:$0x77]
        %v1336 = vld [vmem:[#allocation5 + $0x2c] sm:$0x77]
        %v1337 = vld [vmem:[#allocation5 + $0x34] sm:$0x77]
        %v1338 = vld [vmem:[#allocation5 + $0x3c] sm:$0x77]
        %v1339 = vld [vmem:[#allocation5 + $0x44] sm:$0x7]
        %v1340 = vld [vmem:[%s3] sm:$0xf]
        %v1341 = vld [vmem:[%s3 + $0x4] sm:$0xf]
        %v1342 = vld [vmem:[%s3 + $0x8] sm:$0xf]
        %v1343 = vld [vmem:[%s3 + $0xc] sm:$0xf]
        %v1344 = vld [vmem:[%s3 + $0x10] sm:$0xf]
        %v1345 = vld [vmem:[%s3 + $0x14] sm:$0xf]
        %v1346 = vld [vmem:[%s3 + $0x18] sm:$0xf]
        %v1347 = vld [vmem:[%s3 + $0x1c] sm:$0xf]
        %v1348 = vld [vmem:[%s3 + $0x20] sm:$0xf]
        %v1349 = vld [vmem:[%s3 + $0x24] sm:$0xf]
        %v1350 = vld [vmem:[%s3 + $0x28] sm:$0xf]
        %v1351 = vld [vmem:[%s3 + $0x2c] sm:$0xf]
        %v1352 = vld [vmem:[%s3 + $0x30] sm:$0xf]
        %v1353 = vld [vmem:[%s3 + $0x34] sm:$0xf]
        %v1354 = vld [vmem:[%s3 + $0x38] sm:$0xf]
        %v1355 = vld [vmem:[%s3 + $0x3c] sm:$0xf]
        %v1356 = vld [vmem:[%s3 + $0x40] sm:$0xf]
        %v1357 = vld [vmem:[%s3 + $0x44] sm:$0xf]
        %v1358 = vld [vmem:[%s3 + $0x48] sm:$0xf]
        %v1359 = vld [vmem:[%s3 + $0x4c] sm:$0xf]
        %v1360 = vld [vmem:[%s3 + $0x50] sm:$0xf]
        %v1361 = vld [vmem:[%s3 + $0x54] sm:$0xf]
        %v1362 = vld [vmem:[%s3 + $0x58] sm:$0xf]
        %v1363 = vld [vmem:[%s3 + $0x5c] sm:$0xf]
        %v1364 = vld [vmem:[%s3 + $0x60] sm:$0xf]
        %v1365 = vld [vmem:[%s3 + $0x64] sm:$0xf]
        %v1366 = vld [vmem:[%s3 + $0x68] sm:$0xf]
        %v1367 = vld [vmem:[%s3 + $0x6c] sm:$0xf]
        %v1368 = vld [vmem:[%s3 + $0x70] sm:$0xf]
        %v1369 = vld [vmem:[%s3 + $0x74] sm:$0xf]
        %v1370 = vld [vmem:[%s3 + $0x78] sm:$0xf]
        %v1371 = vld [vmem:[%s3 + $0x7c] sm:$0xf]
        %v1372 = vld [vmem:[%s3 + $0x80] sm:$0xf]
        %v1373 = vld [vmem:[%s3 + $0x84] sm:$0xf]
        %v1374 = vld [vmem:[%s3 + $0x88] sm:$0xf]
        %v1375 = vld [vmem:[%s3 + $0x8c] sm:$0xf]
        %v1376 = vld [vmem:[%s3 + $0x90] sm:$0xf]
        %v1377 = vld [vmem:[%s3 + $0x94] sm:$0xf]
        %v1378 = vld [vmem:[%s3 + $0x98] sm:$0xf]
        %v1379 = vld [vmem:[%s3 + $0x9c] sm:$0xf]
        %v1380 = vld [vmem:[%s3 + $0xa0] sm:$0xf]
        %v1381 = vld [vmem:[%s3 + $0xa4] sm:$0xf]
        %v1382 = vld [vmem:[%s3 + $0xa8] sm:$0xf]
        %v1383 = vld [vmem:[%s3 + $0xac] sm:$0xf]
        %v1384 = vld [vmem:[%s3 + $0xb0] sm:$0xf]
        %v1385 = vld [vmem:[%s3 + $0xb4] sm:$0xf]
        %v1386 = vld [vmem:[%s3 + $0xb8] sm:$0xf]
        %v1387 = vld [vmem:[%s3 + $0xbc] sm:$0xf]
        %v1388 = vld [vmem:[%s3 + $0xc0] sm:$0xf]
        %v1389 = vld [vmem:[%s3 + $0xc4] sm:$0xf]
        %v1390 = vld [vmem:[%s3 + $0xc8] sm:$0xf]
        %v1391 = vld [vmem:[%s3 + $0xcc] sm:$0xf]
        %v1392 = vld [vmem:[%s3 + $0xd0] sm:$0xf]
        %v1393 = vld [vmem:[%s3 + $0xd4] sm:$0xf]
        %v1394 = vld [vmem:[%s3 + $0xd8] sm:$0xf]
        %v1395 = vld [vmem:[%s3 + $0xdc] sm:$0xf]
        %v1396 = vld [vmem:[%s3 + $0xe0] sm:$0xf]
        %v1397 = vld [vmem:[%s3 + $0xe4] sm:$0xf]
        %v1398 = vld [vmem:[%s3 + $0xe8] sm:$0xf]
        %v1399 = vld [vmem:[%s3 + $0xec] sm:$0xf]
        %v1400 = vld [vmem:[%s3 + $0xf0] sm:$0xf]
        %v1401 = vld [vmem:[%s3 + $0xf4] sm:$0xf]
        %v1402 = vld [vmem:[%s3 + $0xf8] sm:$0xf]
        %v1403 = vld [vmem:[%s3 + $0xfc] sm:$0xf]
        %v1404 = vld [vmem:[%s3 + $0x100] sm:$0xf]
        %v1405 = vld [vmem:[%s3 + $0x104] sm:$0xf]
        %v1406 = vld [vmem:[%s3 + $0x108] sm:$0xf]
        %v1407 = vld [vmem:[%s3 + $0x10c] sm:$0xf]
        %v1408 = vld [vmem:[%s3 + $0x110] sm:$0xf]
        %v1409 = vld [vmem:[%s3 + $0x114] sm:$0xf]
        %v1410 = vld [vmem:[%s3 + $0x118] sm:$0xf]
        %v1411 = vld [vmem:[%s3 + $0x11c] sm:$0xf]
        %v1412 = vld [vmem:[%s3 + $0x120] sm:$0xf]
        %v1413 = vld [vmem:[%s3 + $0x124] sm:$0xf]
        %v1414 = vld [vmem:[%s3 + $0x128] sm:$0xf]
        %v1415 = vld [vmem:[%s3 + $0x12c] sm:$0xf]
        %v1416 = vld [vmem:[%s3 + $0x130] sm:$0xf]
        %v1417 = vld [vmem:[%s3 + $0x134] sm:$0xf]
        %v1418 = vld [vmem:[%s3 + $0x138] sm:$0xf]
        %v1419 = vld [vmem:[%s3 + $0x13c] sm:$0xf]
        %v1420 = vld [vmem:[%s3 + $0x140] sm:$0xf]
        %v1421 = vld [vmem:[%s3 + $0x144] sm:$0xf]
        %v1422 = vld [vmem:[%s3 + $0x148] sm:$0xf]
        %v1423 = vld [vmem:[%s3 + $0x14c] sm:$0xf]
        %v1424 = vld [vmem:[%s3 + $0x150] sm:$0xf]
        %v1425 = vld [vmem:[%s3 + $0x154] sm:$0xf]
        %v1426 = vld [vmem:[%s3 + $0x158] sm:$0xf]
        %v1427 = vld [vmem:[%s3 + $0x15c] sm:$0xf]
        %v1428 = vld [vmem:[%s3 + $0x160] sm:$0xf]
        %v1429 = vld [vmem:[%s3 + $0x164] sm:$0xf]
        %v1430 = vld [vmem:[%s3 + $0x168] sm:$0xf]
        %v1431 = vld [vmem:[%s3 + $0x16c] sm:$0xf]
        %v1432 = vld [vmem:[%s3 + $0x170] sm:$0xf]
        %v1433 = vld [vmem:[%s3 + $0x174] sm:$0xf]
        %v1434 = vld [vmem:[%s3 + $0x178] sm:$0xf]
        %v1435 = vld [vmem:[%s3 + $0x17c] sm:$0xf]
        %v1436 = vld [vmem:[%s3 + $0x180] sm:$0xf]
        %v1437 = vld [vmem:[%s3 + $0x184] sm:$0xf]
        %v1438 = vld [vmem:[%s3 + $0x188] sm:$0xf]
        %v1439 = vld [vmem:[%s3 + $0x18c] sm:$0xf]
        %v1440 = vld [vmem:[%s3 + $0x190] sm:$0xf]
        %v1441 = vld [vmem:[%s3 + $0x194] sm:$0xf]
        %v1442 = vld [vmem:[%s3 + $0x198] sm:$0xf]
        %v1443 = vld [vmem:[%s3 + $0x19c] sm:$0xf]
        %v1444 = vld [vmem:[%s3 + $0x1a0] sm:$0xf]
        %v1445 = vld [vmem:[%s3 + $0x1a4] sm:$0xf]
        %v1446 = vld [vmem:[%s3 + $0x1a8] sm:$0xf]
        %v1447 = vld [vmem:[%s3 + $0x1ac] sm:$0xf]
        %v1448 = vld [vmem:[%s3 + $0x1b0] sm:$0xf]
        %v1449 = vld [vmem:[%s3 + $0x1b4] sm:$0xf]
        %v1450 = vld [vmem:[%s3 + $0x1b8] sm:$0xf]
        %v1451 = vld [vmem:[%s3 + $0x1bc] sm:$0xf]
        %v1452 = vld [vmem:[%s3 + $0x1c0] sm:$0xf]
        %v1453 = vld [vmem:[%s3 + $0x1c4] sm:$0xf]
        %v1454 = vld [vmem:[%s3 + $0x1c8] sm:$0xf]
        %v1455 = vld [vmem:[%s3 + $0x1cc] sm:$0xf]
        %v1456 = vld [vmem:[%s3 + $0x1d0] sm:$0xf]
        %v1457 = vld [vmem:[%s3 + $0x1d4] sm:$0xf]
        %v1458 = vld [vmem:[%s3 + $0x1d8] sm:$0xf]
        %v1459 = vld [vmem:[%s3 + $0x1dc] sm:$0xf]
        %v1460 = vld [vmem:[%s3 + $0x1e0] sm:$0xf]
        %v1461 = vld [vmem:[%s3 + $0x1e4] sm:$0xf]
        %v1462 = vld [vmem:[%s3 + $0x1e8] sm:$0xf]
        %v1463 = vld [vmem:[%s3 + $0x1ec] sm:$0xf]
        %v1464 = vld [vmem:[%s3 + $0x1f0] sm:$0xf]
        %v1465 = vld [vmem:[%s3 + $0x1f4] sm:$0xf]
        %v1466 = vld [vmem:[%s3 + $0x1f8] sm:$0xf]
        %v1467 = vld [vmem:[%s3 + $0x1fc] sm:$0xf]
        %v1468 = vld [vmem:[%s3 + $0x200] sm:$0xf]
        %v1469 = vld [vmem:[%s3 + $0x204] sm:$0xf]
        %v1470 = vld [vmem:[%s3 + $0x208] sm:$0xf]
        %v1471 = vld [vmem:[%s3 + $0x20c] sm:$0xf]
        %v1472 = vld [vmem:[%s3 + $0x210] sm:$0xf]
        %v1473 = vld [vmem:[%s3 + $0x214] sm:$0xf]
        %v1474 = vld [vmem:[%s3 + $0x218] sm:$0xf]
        %v1475 = vld [vmem:[%s3 + $0x21c] sm:$0xf]
        %v1476 = vld [vmem:[%s3 + $0x220] sm:$0xf]
        %v1477 = vld [vmem:[%s3 + $0x224] sm:$0xf]
        %v1478 = vld [vmem:[%s3 + $0x228] sm:$0xf]
        %v1479 = vld [vmem:[%s3 + $0x22c] sm:$0xf]
        %v1480 = vld [vmem:[%s3 + $0x230] sm:$0xf]
        %v1481 = vld [vmem:[%s3 + $0x234] sm:$0xf]
        %v1482 = vld [vmem:[%s3 + $0x238] sm:$0xf]
        %v1483 = vld [vmem:[%s3 + $0x23c] sm:$0xf]
        %v1494 = vunpack.c.l.b16 %v1330
        %v1495 = vunpack.c.h.b16 %v1330
        %v1496 = vunpack.c.l.b16 %v1331
        %v1497 = vunpack.c.h.b16 %v1331
        %v1498 = vunpack.c.l.b16 %v1332
        %v1499 = vunpack.c.h.b16 %v1332
        %v1500 = vunpack.c.l.b16 %v1333
        %v1501 = vunpack.c.h.b16 %v1333
        %v1502 = vunpack.c.l.b16 %v1334
        %v1503 = vunpack.c.l.b16 %v1335
        %v1504 = vunpack.c.h.b16 %v1335
        %v1505 = vunpack.c.l.b16 %v1336
        %v1506 = vunpack.c.h.b16 %v1336
        %v1507 = vunpack.c.l.b16 %v1337
        %v1508 = vunpack.c.h.b16 %v1337
        %v1509 = vunpack.c.l.b16 %v1338
        %v1510 = vunpack.c.h.b16 %v1338
        %v1511 = vunpack.c.l.b16 %v1339
        %v1512 = vpack.c.b16 %v1503, %v1494
        %v1513 = vpack.c.b16 %v1504, %v1495
        %v1514 = vpack.c.b16 %v1505, %v1496
        %v1515 = vpack.c.b16 %v1506, %v1497
        %v1516 = vpack.c.b16 %v1507, %v1498
        %v1517 = vpack.c.b16 %v1508, %v1499
        %v1518 = vpack.c.b16 %v1509, %v1500
        %v1519 = vpack.c.b16 %v1510, %v1501
        %v1520 = vpack.c.b16 %v1511, %v1502
        %v1674 = vunpack.c.l.b16 %v1340
        %v1675 = vunpack.c.l.b16 %v1341
        %v1676 = vunpack.c.l.b16 %v1342
        %v1677 = vunpack.c.l.b16 %v1343
        %v1678 = vunpack.c.l.b16 %v1344
        %v1679 = vunpack.c.l.b16 %v1345
        %v1680 = vunpack.c.l.b16 %v1346
        %v1681 = vunpack.c.l.b16 %v1347
        %v1682 = vunpack.c.l.b16 %v1348
        %v1683 = vunpack.c.l.b16 %v1349
        %v1684 = vunpack.c.l.b16 %v1350
        %v1685 = vunpack.c.l.b16 %v1351
        %v1686 = vunpack.c.l.b16 %v1352
        %v1687 = vunpack.c.l.b16 %v1353
        %v1688 = vunpack.c.l.b16 %v1354
        %v1689 = vunpack.c.l.b16 %v1355
        %v1690 = vunpack.c.l.b16 %v1356
        %v1691 = vunpack.c.l.b16 %v1357
        %v1692 = vunpack.c.l.b16 %v1358
        %v1693 = vunpack.c.l.b16 %v1359
        %v1694 = vunpack.c.l.b16 %v1360
        %v1695 = vunpack.c.l.b16 %v1361
        %v1696 = vunpack.c.l.b16 %v1362
        %v1697 = vunpack.c.l.b16 %v1363
        %v1698 = vunpack.c.l.b16 %v1364
        %v1699 = vunpack.c.l.b16 %v1365
        %v1700 = vunpack.c.l.b16 %v1366
        %v1701 = vunpack.c.l.b16 %v1367
        %v1702 = vunpack.c.l.b16 %v1368
        %v1703 = vunpack.c.l.b16 %v1369
        %v1704 = vunpack.c.l.b16 %v1370
        %v1705 = vunpack.c.l.b16 %v1371
        %v1706 = vunpack.c.l.b16 %v1372
        %v1707 = vunpack.c.l.b16 %v1373
        %v1708 = vunpack.c.l.b16 %v1374
        %v1709 = vunpack.c.l.b16 %v1375
        %v1710 = vunpack.c.l.b16 %v1376
        %v1711 = vunpack.c.l.b16 %v1377
        %v1712 = vunpack.c.l.b16 %v1378
        %v1713 = vunpack.c.l.b16 %v1379
        %v1714 = vunpack.c.l.b16 %v1380
        %v1715 = vunpack.c.l.b16 %v1381
        %v1716 = vunpack.c.l.b16 %v1382
        %v1717 = vunpack.c.l.b16 %v1383
        %v1718 = vunpack.c.l.b16 %v1384
        %v1719 = vunpack.c.l.b16 %v1385
        %v1720 = vunpack.c.l.b16 %v1386
        %v1721 = vunpack.c.l.b16 %v1387
        %v1722 = vunpack.c.l.b16 %v1388
        %v1723 = vunpack.c.l.b16 %v1389
        %v1724 = vunpack.c.l.b16 %v1390
        %v1725 = vunpack.c.l.b16 %v1391
        %v1726 = vunpack.c.l.b16 %v1392
        %v1727 = vunpack.c.l.b16 %v1393
        %v1728 = vunpack.c.l.b16 %v1394
        %v1729 = vunpack.c.l.b16 %v1395
        %v1730 = vunpack.c.l.b16 %v1396
        %v1731 = vunpack.c.l.b16 %v1397
        %v1732 = vunpack.c.l.b16 %v1398
        %v1733 = vunpack.c.l.b16 %v1399
        %v1734 = vunpack.c.l.b16 %v1400
        %v1735 = vunpack.c.l.b16 %v1401
        %v1736 = vunpack.c.l.b16 %v1402
        %v1737 = vunpack.c.l.b16 %v1403
        %v1738 = vunpack.c.l.b16 %v1404
        %v1739 = vunpack.c.l.b16 %v1405
        %v1740 = vunpack.c.l.b16 %v1406
        %v1741 = vunpack.c.l.b16 %v1407
        %v1742 = vunpack.c.l.b16 %v1408
        %v1743 = vunpack.c.l.b16 %v1409
        %v1744 = vunpack.c.l.b16 %v1410
        %v1745 = vunpack.c.l.b16 %v1411
        %v1746 = vunpack.c.l.b16 %v1412
        %v1747 = vunpack.c.l.b16 %v1413
        %v1748 = vunpack.c.l.b16 %v1414
        %v1749 = vunpack.c.l.b16 %v1415
        %v1750 = vunpack.c.l.b16 %v1416
        %v1751 = vunpack.c.l.b16 %v1417
        %v1752 = vunpack.c.l.b16 %v1418
        %v1753 = vunpack.c.l.b16 %v1419
        %v1754 = vunpack.c.l.b16 %v1420
        %v1755 = vunpack.c.l.b16 %v1421
        %v1756 = vunpack.c.l.b16 %v1422
        %v1757 = vunpack.c.l.b16 %v1423
        %v1758 = vunpack.c.l.b16 %v1424
        %v1759 = vunpack.c.l.b16 %v1425
        %v1760 = vunpack.c.l.b16 %v1426
        %v1761 = vunpack.c.l.b16 %v1427
        %v1762 = vunpack.c.l.b16 %v1428
        %v1763 = vunpack.c.l.b16 %v1429
        %v1764 = vunpack.c.l.b16 %v1430
        %v1765 = vunpack.c.l.b16 %v1431
        %v1766 = vunpack.c.l.b16 %v1432
        %v1767 = vunpack.c.l.b16 %v1433
        %v1768 = vunpack.c.l.b16 %v1434
        %v1769 = vunpack.c.l.b16 %v1435
        %v1770 = vunpack.c.l.b16 %v1436
        %v1771 = vunpack.c.l.b16 %v1437
        %v1772 = vunpack.c.l.b16 %v1438
        %v1773 = vunpack.c.l.b16 %v1439
        %v1774 = vunpack.c.l.b16 %v1440
        %v1775 = vunpack.c.l.b16 %v1441
        %v1776 = vunpack.c.l.b16 %v1442
        %v1777 = vunpack.c.l.b16 %v1443
        %v1778 = vunpack.c.l.b16 %v1444
        %v1779 = vunpack.c.l.b16 %v1445
        %v1780 = vunpack.c.l.b16 %v1446
        %v1781 = vunpack.c.l.b16 %v1447
        %v1782 = vunpack.c.l.b16 %v1448
        %v1783 = vunpack.c.l.b16 %v1449
        %v1784 = vunpack.c.l.b16 %v1450
        %v1785 = vunpack.c.l.b16 %v1451
        %v1786 = vunpack.c.l.b16 %v1452
        %v1787 = vunpack.c.l.b16 %v1453
        %v1788 = vunpack.c.l.b16 %v1454
        %v1789 = vunpack.c.l.b16 %v1455
        %v1790 = vunpack.c.l.b16 %v1456
        %v1791 = vunpack.c.l.b16 %v1457
        %v1792 = vunpack.c.l.b16 %v1458
        %v1793 = vunpack.c.l.b16 %v1459
        %v1794 = vunpack.c.l.b16 %v1460
        %v1795 = vunpack.c.l.b16 %v1461
        %v1796 = vunpack.c.l.b16 %v1462
        %v1797 = vunpack.c.l.b16 %v1463
        %v1798 = vunpack.c.l.b16 %v1464
        %v1799 = vunpack.c.l.b16 %v1465
        %v1800 = vunpack.c.l.b16 %v1466
        %v1801 = vunpack.c.l.b16 %v1467
        %v1802 = vunpack.c.l.b16 %v1468
        %v1803 = vunpack.c.l.b16 %v1469
        %v1804 = vunpack.c.l.b16 %v1470
        %v1805 = vunpack.c.l.b16 %v1471
        %v1806 = vunpack.c.l.b16 %v1472
        %v1807 = vunpack.c.l.b16 %v1473
        %v1808 = vunpack.c.l.b16 %v1474
        %v1809 = vunpack.c.l.b16 %v1475
        %v1810 = vunpack.c.l.b16 %v1476
        %v1811 = vunpack.c.l.b16 %v1477
        %v1812 = vunpack.c.l.b16 %v1478
        %v1813 = vunpack.c.l.b16 %v1479
        %v1814 = vunpack.c.l.b16 %v1480
        %v1815 = vunpack.c.l.b16 %v1481
        %v1816 = vunpack.c.l.b16 %v1482
        %v1817 = vunpack.c.l.b16 %v1483
        %v1818 = vpack.c.b16 %v1675, %v1674
        %v1819 = vpack.c.b16 %v1677, %v1676
        %v1820 = vpack.c.b16 %v1679, %v1678
        %v1821 = vpack.c.b16 %v1681, %v1680
        %v1822 = vpack.c.b16 %v1683, %v1682
        %v1823 = vpack.c.b16 %v1685, %v1684
        %v1824 = vpack.c.b16 %v1687, %v1686
        %v1825 = vpack.c.b16 %v1689, %v1688
        %v1826 = vpack.c.b16 %v1691, %v1690
        %v1827 = vpack.c.b16 %v1693, %v1692
        %v1828 = vpack.c.b16 %v1695, %v1694
        %v1829 = vpack.c.b16 %v1697, %v1696
        %v1830 = vpack.c.b16 %v1699, %v1698
        %v1831 = vpack.c.b16 %v1701, %v1700
        %v1832 = vpack.c.b16 %v1703, %v1702
        %v1833 = vpack.c.b16 %v1705, %v1704
        %v1834 = vpack.c.b16 %v1707, %v1706
        %v1835 = vpack.c.b16 %v1709, %v1708
        %v1836 = vpack.c.b16 %v1711, %v1710
        %v1837 = vpack.c.b16 %v1713, %v1712
        %v1838 = vpack.c.b16 %v1715, %v1714
        %v1839 = vpack.c.b16 %v1717, %v1716
        %v1840 = vpack.c.b16 %v1719, %v1718
        %v1841 = vpack.c.b16 %v1721, %v1720
        %v1842 = vpack.c.b16 %v1723, %v1722
        %v1843 = vpack.c.b16 %v1725, %v1724
        %v1844 = vpack.c.b16 %v1727, %v1726
        %v1845 = vpack.c.b16 %v1729, %v1728
        %v1846 = vpack.c.b16 %v1731, %v1730
        %v1847 = vpack.c.b16 %v1733, %v1732
        %v1848 = vpack.c.b16 %v1735, %v1734
        %v1849 = vpack.c.b16 %v1737, %v1736
        %v1850 = vpack.c.b16 %v1739, %v1738
        %v1851 = vpack.c.b16 %v1741, %v1740
        %v1852 = vpack.c.b16 %v1743, %v1742
        %v1853 = vpack.c.b16 %v1745, %v1744
        %v1854 = vpack.c.b16 %v1747, %v1746
        %v1855 = vpack.c.b16 %v1749, %v1748
        %v1856 = vpack.c.b16 %v1751, %v1750
        %v1857 = vpack.c.b16 %v1753, %v1752
        %v1858 = vpack.c.b16 %v1755, %v1754
        %v1859 = vpack.c.b16 %v1757, %v1756
        %v1860 = vpack.c.b16 %v1759, %v1758
        %v1861 = vpack.c.b16 %v1761, %v1760
        %v1862 = vpack.c.b16 %v1763, %v1762
        %v1863 = vpack.c.b16 %v1765, %v1764
        %v1864 = vpack.c.b16 %v1767, %v1766
        %v1865 = vpack.c.b16 %v1769, %v1768
        %v1866 = vpack.c.b16 %v1771, %v1770
        %v1867 = vpack.c.b16 %v1773, %v1772
        %v1868 = vpack.c.b16 %v1775, %v1774
        %v1869 = vpack.c.b16 %v1777, %v1776
        %v1870 = vpack.c.b16 %v1779, %v1778
        %v1871 = vpack.c.b16 %v1781, %v1780
        %v1872 = vpack.c.b16 %v1783, %v1782
        %v1873 = vpack.c.b16 %v1785, %v1784
        %v1874 = vpack.c.b16 %v1787, %v1786
        %v1875 = vpack.c.b16 %v1789, %v1788
        %v1876 = vpack.c.b16 %v1791, %v1790
        %v1877 = vpack.c.b16 %v1793, %v1792
        %v1878 = vpack.c.b16 %v1795, %v1794
        %v1879 = vpack.c.b16 %v1797, %v1796
        %v1880 = vpack.c.b16 %v1799, %v1798
        %v1881 = vpack.c.b16 %v1801, %v1800
        %v1882 = vpack.c.b16 %v1803, %v1802
        %v1883 = vpack.c.b16 %v1805, %v1804
        %v1884 = vpack.c.b16 %v1807, %v1806
        %v1885 = vpack.c.b16 %v1809, %v1808
        %v1886 = vpack.c.b16 %v1811, %v1810
        %v1887 = vpack.c.b16 %v1813, %v1812
        %v1888 = vpack.c.b16 %v1815, %v1814
        %v1889 = vpack.c.b16 %v1817, %v1816
        %1962 = vmatpush.bf16.msra.mxu0 %v1825
        %1963 = vmatpush.bf16.msra.mxu0 %v1824
        %1964 = vmatpush.bf16.msra.mxu0 %v1823
        %1965 = vmatpush.bf16.msra.mxu0 %v1822
        %1966 = vmatpush.bf16.msra.mxu0 %v1821
        %1967 = vmatpush.bf16.msra.mxu0 %v1820
        %1968 = vmatpush.bf16.msra.mxu0 %v1819
        %1969 = vmatpush.bf16.msra.mxu0 %v1818
        %1970 = vmatmul.bf16.gmra.mxu0 %v1512
        %v1971 = vpop.f32.mrf.mxu0
        %v1972 = vadd.f32 0.0, %v1971
        %v1973 = vpop.f32.mrf.mxu0
        %v1974 = vadd.f32 0.0, %v1973
        %1975 = vdwg.mxu0
        %1976 = vmatpush.bf16.msra.mxu0 %v1833
        %1977 = vmatpush.bf16.msra.mxu0 %v1832
        %1978 = vmatpush.bf16.msra.mxu0 %v1831
        %1979 = vmatpush.bf16.msra.mxu0 %v1830
        %1980 = vmatpush.bf16.msra.mxu0 %v1829
        %1981 = vmatpush.bf16.msra.mxu0 %v1828
        %1982 = vmatpush.bf16.msra.mxu0 %v1827
        %1983 = vmatpush.bf16.msra.mxu0 %v1826
        %1984 = vmatmul.bf16.gmra.mxu0 %v1513
        %v1985 = vpop.f32.mrf.mxu0
        %v1986 = vadd.f32 %v1972, %v1985
        %v1987 = vpop.f32.mrf.mxu0
        %v1988 = vadd.f32 %v1974, %v1987
        %1989 = vdwg.mxu0
        %1990 = vmatpush.bf16.msra.mxu0 %v1841
        %1991 = vmatpush.bf16.msra.mxu0 %v1840
        %1992 = vmatpush.bf16.msra.mxu0 %v1839
        %1993 = vmatpush.bf16.msra.mxu0 %v1838
        %1994 = vmatpush.bf16.msra.mxu0 %v1837
        %1995 = vmatpush.bf16.msra.mxu0 %v1836
        %1996 = vmatpush.bf16.msra.mxu0 %v1835
        %1997 = vmatpush.bf16.msra.mxu0 %v1834
        %1998 = vmatmul.bf16.gmra.mxu0 %v1514
        %v1999 = vpop.f32.mrf.mxu0
        %v2000 = vadd.f32 %v1986, %v1999
        %v2001 = vpop.f32.mrf.mxu0
        %v2002 = vadd.f32 %v1988, %v2001
        %2003 = vdwg.mxu0
        %2004 = vmatpush.bf16.msra.mxu0 %v1849
        %2005 = vmatpush.bf16.msra.mxu0 %v1848
        %2006 = vmatpush.bf16.msra.mxu0 %v1847
        %2007 = vmatpush.bf16.msra.mxu0 %v1846
        %2008 = vmatpush.bf16.msra.mxu0 %v1845
        %2009 = vmatpush.bf16.msra.mxu0 %v1844
        %2010 = vmatpush.bf16.msra.mxu0 %v1843
        %2011 = vmatpush.bf16.msra.mxu0 %v1842
        %2012 = vmatmul.bf16.gmra.mxu0 %v1515
        %v2013 = vpop.f32.mrf.mxu0
        %v2014 = vadd.f32 %v2000, %v2013
        %v2015 = vpop.f32.mrf.mxu0
        %v2016 = vadd.f32 %v2002, %v2015
        %2017 = vdwg.mxu0
        %2018 = vmatpush.bf16.msra.mxu0 %v1857
        %2019 = vmatpush.bf16.msra.mxu0 %v1856
        %2020 = vmatpush.bf16.msra.mxu0 %v1855
        %2021 = vmatpush.bf16.msra.mxu0 %v1854
        %2022 = vmatpush.bf16.msra.mxu0 %v1853
        %2023 = vmatpush.bf16.msra.mxu0 %v1852
        %2024 = vmatpush.bf16.msra.mxu0 %v1851
        %2025 = vmatpush.bf16.msra.mxu0 %v1850
        %2026 = vmatmul.bf16.gmra.mxu0 %v1516
        %v2027 = vpop.f32.mrf.mxu0
        %v2028 = vadd.f32 %v2014, %v2027
        %v2029 = vpop.f32.mrf.mxu0
        %v2030 = vadd.f32 %v2016, %v2029
        %2031 = vdwg.mxu0
        %2032 = vmatpush.bf16.msra.mxu0 %v1865
        %2033 = vmatpush.bf16.msra.mxu0 %v1864
        %2034 = vmatpush.bf16.msra.mxu0 %v1863
        %2035 = vmatpush.bf16.msra.mxu0 %v1862
        %2036 = vmatpush.bf16.msra.mxu0 %v1861
        %2037 = vmatpush.bf16.msra.mxu0 %v1860
        %2038 = vmatpush.bf16.msra.mxu0 %v1859
        %2039 = vmatpush.bf16.msra.mxu0 %v1858
        %2040 = vmatmul.bf16.gmra.mxu0 %v1517
        %v2041 = vpop.f32.mrf.mxu0
        %v2042 = vadd.f32 %v2028, %v2041
        %v2043 = vpop.f32.mrf.mxu0
        %v2044 = vadd.f32 %v2030, %v2043
        %2045 = vdwg.mxu0
        %2046 = vmatpush.bf16.msra.mxu0 %v1873
        %2047 = vmatpush.bf16.msra.mxu0 %v1872
        %2048 = vmatpush.bf16.msra.mxu0 %v1871
        %2049 = vmatpush.bf16.msra.mxu0 %v1870
        %2050 = vmatpush.bf16.msra.mxu0 %v1869
        %2051 = vmatpush.bf16.msra.mxu0 %v1868
        %2052 = vmatpush.bf16.msra.mxu0 %v1867
        %2053 = vmatpush.bf16.msra.mxu0 %v1866
        %2054 = vmatmul.bf16.gmra.mxu0 %v1518
        %v2055 = vpop.f32.mrf.mxu0
        %v2056 = vadd.f32 %v2042, %v2055
        %v2057 = vpop.f32.mrf.mxu0
        %v2058 = vadd.f32 %v2044, %v2057
        %2059 = vdwg.mxu0
        %2060 = vmatpush.bf16.msra.mxu0 %v1881
        %2061 = vmatpush.bf16.msra.mxu0 %v1880
        %2062 = vmatpush.bf16.msra.mxu0 %v1879
        %2063 = vmatpush.bf16.msra.mxu0 %v1878
        %2064 = vmatpush.bf16.msra.mxu0 %v1877
        %2065 = vmatpush.bf16.msra.mxu0 %v1876
        %2066 = vmatpush.bf16.msra.mxu0 %v1875
        %2067 = vmatpush.bf16.msra.mxu0 %v1874
        %2068 = vmatmul.bf16.gmra.mxu0 %v1519
        %v2069 = vpop.f32.mrf.mxu0
        %v2070 = vadd.f32 %v2056, %v2069
        %v2071 = vpop.f32.mrf.mxu0
        %v2072 = vadd.f32 %v2058, %v2071
        %2073 = vdwg.mxu0
        %2074 = vmatpush.bf16.msra.mxu0 %v1889
        %2075 = vmatpush.bf16.msra.mxu0 %v1888
        %2076 = vmatpush.bf16.msra.mxu0 %v1887
        %2077 = vmatpush.bf16.msra.mxu0 %v1886
        %2078 = vmatpush.bf16.msra.mxu0 %v1885
        %2079 = vmatpush.bf16.msra.mxu0 %v1884
        %2080 = vmatpush.bf16.msra.mxu0 %v1883
        %2081 = vmatpush.bf16.msra.mxu0 %v1882
        %2082 = vmatmul.bf16.gmra.mxu0 %v1520
        %v2083 = vpop.f32.mrf.mxu0
        %v2084 = vadd.f32 %v2070, %v2083
        %v2085 = vpop.f32.mrf.mxu0
        %v2086 = vadd.f32 %v2072, %v2085
        %2087 = vdwg.mxu0
        %v2088 = vld [vmem:[%s1290] sm:$0xff]
        %v2089 = vld [vmem:[%s1290 + $0x8] sm:$0x3f]
        %v2090 = vpack.c.bf16 %v2088, %v2088
        %v2091 = vpack.c.bf16 %v2089, %v2089
        %2092 = vst [vmem:[#allocation5] sm:$0xf] %v2090
        %2093 = vst [vmem:[#allocation5 + $0x24] sm:$0x7] %v2091
        %v2094 = vld [vmem:[%s1290 + $0x1] sm:$0xff]
        %v2095 = vld [vmem:[%s1290 + $0x9] sm:$0x3f]
        %v2096 = vpack.c.bf16 %v2094, %v2094
        %v2097 = vpack.c.bf16 %v2095, %v2095
        %2098 = vst [vmem:[#allocation5 + $0x4] sm:$0xf] %v2096
        %2099 = vst [vmem:[#allocation5 + $0x28] sm:$0x7] %v2097
        %v2100 = vld [vmem:[%s1290 + $0x2] sm:$0xff]
        %v2101 = vld [vmem:[%s1290 + $0xa] sm:$0x3f]
        %v2102 = vpack.c.bf16 %v2100, %v2100
        %v2103 = vpack.c.bf16 %v2101, %v2101
        %2104 = vst [vmem:[#allocation5 + $0x8] sm:$0xf] %v2102
        %2105 = vst [vmem:[#allocation5 + $0x2c] sm:$0x7] %v2103
        %v2106 = vld [vmem:[%s1311] sm:$0xff]
        %v2107 = vld [vmem:[%s1311 + $0x8] sm:$0x3f]
        %v2108 = vpack.c.bf16 %v2106, %v2106
        %v2109 = vpack.c.bf16 %v2107, %v2107
        %2110 = vst [vmem:[#allocation5 + $0xc] sm:$0xf] %v2108
        %2111 = vst [vmem:[#allocation5 + $0x30] sm:$0x7] %v2109
        %v2112 = vld [vmem:[%s1311 + $0x1] sm:$0xff]
        %v2113 = vld [vmem:[%s1311 + $0x9] sm:$0x3f]
        %v2114 = vpack.c.bf16 %v2112, %v2112
        %v2115 = vpack.c.bf16 %v2113, %v2113
        %2116 = vst [vmem:[#allocation5 + $0x10] sm:$0xf] %v2114
        %2117 = vst [vmem:[#allocation5 + $0x34] sm:$0x7] %v2115
        %v2118 = vld [vmem:[%s1311 + $0x2] sm:$0xff]
        %v2119 = vld [vmem:[%s1311 + $0xa] sm:$0x3f]
        %v2120 = vpack.c.bf16 %v2118, %v2118
        %v2121 = vpack.c.bf16 %v2119, %v2119
        %2122 = vst [vmem:[#allocation5 + $0x14] sm:$0xf] %v2120
        %2123 = vst [vmem:[#allocation5 + $0x38] sm:$0x7] %v2121
        %s2124 = sadd.s32 %s1267, 3
        %s2125 = smul.u32 %s2124, 16
        %s2126 = scalar_lea.vmem [#allocation4], %s2125
        %v2127 = vld [vmem:[%s2126] sm:$0xff]
        %v2128 = vld [vmem:[%s2126 + $0x8] sm:$0x3f]
        %v2129 = vpack.c.bf16 %v2127, %v2127
        %v2130 = vpack.c.bf16 %v2128, %v2128
        %2131 = vst [vmem:[#allocation5 + $0x18] sm:$0xf] %v2129
        %2132 = vst [vmem:[#allocation5 + $0x3c] sm:$0x7] %v2130
        %v2133 = vld [vmem:[%s2126 + $0x1] sm:$0xff]
        %v2134 = vld [vmem:[%s2126 + $0x9] sm:$0x3f]
        %v2135 = vpack.c.bf16 %v2133, %v2133
        %v2136 = vpack.c.bf16 %v2134, %v2134
        %2137 = vst [vmem:[#allocation5 + $0x1c] sm:$0xf] %v2135
        %2138 = vst [vmem:[#allocation5 + $0x40] sm:$0x7] %v2136
        %v2139 = vld [vmem:[%s2126 + $0x2] sm:$0xff]
        %v2140 = vld [vmem:[%s2126 + $0xa] sm:$0x3f]
        %v2141 = vpack.c.bf16 %v2139, %v2139
        %v2142 = vpack.c.bf16 %v2140, %v2140
        %2143 = vst [vmem:[#allocation5 + $0x20] sm:$0xf] %v2141
        %2144 = vst [vmem:[#allocation5 + $0x44] sm:$0x7] %v2142
        %v2145 = vld [vmem:[#allocation5] sm:$0xff]
        %v2146 = vld [vmem:[#allocation5 + $0x8] sm:$0xff]
        %v2147 = vld [vmem:[#allocation5 + $0x10] sm:$0xff]
        %v2148 = vld [vmem:[#allocation5 + $0x18] sm:$0xff]
        %v2149 = vld [vmem:[#allocation5 + $0x20] sm:$0xf]
        %v2150 = vld [vmem:[#allocation5 + $0x24] sm:$0x77]
        %v2151 = vld [vmem:[#allocation5 + $0x2c] sm:$0x77]
        %v2152 = vld [vmem:[#allocation5 + $0x34] sm:$0x77]
        %v2153 = vld [vmem:[#allocation5 + $0x3c] sm:$0x77]
        %v2154 = vld [vmem:[#allocation5 + $0x44] sm:$0x7]
        %v2155 = vld [vmem:[%s3] sm:$0xf]
        %v2156 = vld [vmem:[%s3 + $0x4] sm:$0xf]
        %v2157 = vld [vmem:[%s3 + $0x8] sm:$0xf]
        %v2158 = vld [vmem:[%s3 + $0xc] sm:$0xf]
        %v2159 = vld [vmem:[%s3 + $0x10] sm:$0xf]
        %v2160 = vld [vmem:[%s3 + $0x14] sm:$0xf]
        %v2161 = vld [vmem:[%s3 + $0x18] sm:$0xf]
        %v2162 = vld [vmem:[%s3 + $0x1c] sm:$0xf]
        %v2163 = vld [vmem:[%s3 + $0x20] sm:$0xf]
        %v2164 = vld [vmem:[%s3 + $0x24] sm:$0xf]
        %v2165 = vld [vmem:[%s3 + $0x28] sm:$0xf]
        %v2166 = vld [vmem:[%s3 + $0x2c] sm:$0xf]
        %v2167 = vld [vmem:[%s3 + $0x30] sm:$0xf]
        %v2168 = vld [vmem:[%s3 + $0x34] sm:$0xf]
        %v2169 = vld [vmem:[%s3 + $0x38] sm:$0xf]
        %v2170 = vld [vmem:[%s3 + $0x3c] sm:$0xf]
        %v2171 = vld [vmem:[%s3 + $0x40] sm:$0xf]
        %v2172 = vld [vmem:[%s3 + $0x44] sm:$0xf]
        %v2173 = vld [vmem:[%s3 + $0x48] sm:$0xf]
        %v2174 = vld [vmem:[%s3 + $0x4c] sm:$0xf]
        %v2175 = vld [vmem:[%s3 + $0x50] sm:$0xf]
        %v2176 = vld [vmem:[%s3 + $0x54] sm:$0xf]
        %v2177 = vld [vmem:[%s3 + $0x58] sm:$0xf]
        %v2178 = vld [vmem:[%s3 + $0x5c] sm:$0xf]
        %v2179 = vld [vmem:[%s3 + $0x60] sm:$0xf]
        %v2180 = vld [vmem:[%s3 + $0x64] sm:$0xf]
        %v2181 = vld [vmem:[%s3 + $0x68] sm:$0xf]
        %v2182 = vld [vmem:[%s3 + $0x6c] sm:$0xf]
        %v2183 = vld [vmem:[%s3 + $0x70] sm:$0xf]
        %v2184 = vld [vmem:[%s3 + $0x74] sm:$0xf]
        %v2185 = vld [vmem:[%s3 + $0x78] sm:$0xf]
        %v2186 = vld [vmem:[%s3 + $0x7c] sm:$0xf]
        %v2187 = vld [vmem:[%s3 + $0x80] sm:$0xf]
        %v2188 = vld [vmem:[%s3 + $0x84] sm:$0xf]
        %v2189 = vld [vmem:[%s3 + $0x88] sm:$0xf]
        %v2190 = vld [vmem:[%s3 + $0x8c] sm:$0xf]
        %v2191 = vld [vmem:[%s3 + $0x90] sm:$0xf]
        %v2192 = vld [vmem:[%s3 + $0x94] sm:$0xf]
        %v2193 = vld [vmem:[%s3 + $0x98] sm:$0xf]
        %v2194 = vld [vmem:[%s3 + $0x9c] sm:$0xf]
        %v2195 = vld [vmem:[%s3 + $0xa0] sm:$0xf]
        %v2196 = vld [vmem:[%s3 + $0xa4] sm:$0xf]
        %v2197 = vld [vmem:[%s3 + $0xa8] sm:$0xf]
        %v2198 = vld [vmem:[%s3 + $0xac] sm:$0xf]
        %v2199 = vld [vmem:[%s3 + $0xb0] sm:$0xf]
        %v2200 = vld [vmem:[%s3 + $0xb4] sm:$0xf]
        %v2201 = vld [vmem:[%s3 + $0xb8] sm:$0xf]
        %v2202 = vld [vmem:[%s3 + $0xbc] sm:$0xf]
        %v2203 = vld [vmem:[%s3 + $0xc0] sm:$0xf]
        %v2204 = vld [vmem:[%s3 + $0xc4] sm:$0xf]
        %v2205 = vld [vmem:[%s3 + $0xc8] sm:$0xf]
        %v2206 = vld [vmem:[%s3 + $0xcc] sm:$0xf]
        %v2207 = vld [vmem:[%s3 + $0xd0] sm:$0xf]
        %v2208 = vld [vmem:[%s3 + $0xd4] sm:$0xf]
        %v2209 = vld [vmem:[%s3 + $0xd8] sm:$0xf]
        %v2210 = vld [vmem:[%s3 + $0xdc] sm:$0xf]
        %v2211 = vld [vmem:[%s3 + $0xe0] sm:$0xf]
        %v2212 = vld [vmem:[%s3 + $0xe4] sm:$0xf]
        %v2213 = vld [vmem:[%s3 + $0xe8] sm:$0xf]
        %v2214 = vld [vmem:[%s3 + $0xec] sm:$0xf]
        %v2215 = vld [vmem:[%s3 + $0xf0] sm:$0xf]
        %v2216 = vld [vmem:[%s3 + $0xf4] sm:$0xf]
        %v2217 = vld [vmem:[%s3 + $0xf8] sm:$0xf]
        %v2218 = vld [vmem:[%s3 + $0xfc] sm:$0xf]
        %v2219 = vld [vmem:[%s3 + $0x100] sm:$0xf]
        %v2220 = vld [vmem:[%s3 + $0x104] sm:$0xf]
        %v2221 = vld [vmem:[%s3 + $0x108] sm:$0xf]
        %v2222 = vld [vmem:[%s3 + $0x10c] sm:$0xf]
        %v2223 = vld [vmem:[%s3 + $0x110] sm:$0xf]
        %v2224 = vld [vmem:[%s3 + $0x114] sm:$0xf]
        %v2225 = vld [vmem:[%s3 + $0x118] sm:$0xf]
        %v2226 = vld [vmem:[%s3 + $0x11c] sm:$0xf]
        %v2227 = vld [vmem:[%s3 + $0x120] sm:$0xf]
        %v2228 = vld [vmem:[%s3 + $0x124] sm:$0xf]
        %v2229 = vld [vmem:[%s3 + $0x128] sm:$0xf]
        %v2230 = vld [vmem:[%s3 + $0x12c] sm:$0xf]
        %v2231 = vld [vmem:[%s3 + $0x130] sm:$0xf]
        %v2232 = vld [vmem:[%s3 + $0x134] sm:$0xf]
        %v2233 = vld [vmem:[%s3 + $0x138] sm:$0xf]
        %v2234 = vld [vmem:[%s3 + $0x13c] sm:$0xf]
        %v2235 = vld [vmem:[%s3 + $0x140] sm:$0xf]
        %v2236 = vld [vmem:[%s3 + $0x144] sm:$0xf]
        %v2237 = vld [vmem:[%s3 + $0x148] sm:$0xf]
        %v2238 = vld [vmem:[%s3 + $0x14c] sm:$0xf]
        %v2239 = vld [vmem:[%s3 + $0x150] sm:$0xf]
        %v2240 = vld [vmem:[%s3 + $0x154] sm:$0xf]
        %v2241 = vld [vmem:[%s3 + $0x158] sm:$0xf]
        %v2242 = vld [vmem:[%s3 + $0x15c] sm:$0xf]
        %v2243 = vld [vmem:[%s3 + $0x160] sm:$0xf]
        %v2244 = vld [vmem:[%s3 + $0x164] sm:$0xf]
        %v2245 = vld [vmem:[%s3 + $0x168] sm:$0xf]
        %v2246 = vld [vmem:[%s3 + $0x16c] sm:$0xf]
        %v2247 = vld [vmem:[%s3 + $0x170] sm:$0xf]
        %v2248 = vld [vmem:[%s3 + $0x174] sm:$0xf]
        %v2249 = vld [vmem:[%s3 + $0x178] sm:$0xf]
        %v2250 = vld [vmem:[%s3 + $0x17c] sm:$0xf]
        %v2251 = vld [vmem:[%s3 + $0x180] sm:$0xf]
        %v2252 = vld [vmem:[%s3 + $0x184] sm:$0xf]
        %v2253 = vld [vmem:[%s3 + $0x188] sm:$0xf]
        %v2254 = vld [vmem:[%s3 + $0x18c] sm:$0xf]
        %v2255 = vld [vmem:[%s3 + $0x190] sm:$0xf]
        %v2256 = vld [vmem:[%s3 + $0x194] sm:$0xf]
        %v2257 = vld [vmem:[%s3 + $0x198] sm:$0xf]
        %v2258 = vld [vmem:[%s3 + $0x19c] sm:$0xf]
        %v2259 = vld [vmem:[%s3 + $0x1a0] sm:$0xf]
        %v2260 = vld [vmem:[%s3 + $0x1a4] sm:$0xf]
        %v2261 = vld [vmem:[%s3 + $0x1a8] sm:$0xf]
        %v2262 = vld [vmem:[%s3 + $0x1ac] sm:$0xf]
        %v2263 = vld [vmem:[%s3 + $0x1b0] sm:$0xf]
        %v2264 = vld [vmem:[%s3 + $0x1b4] sm:$0xf]
        %v2265 = vld [vmem:[%s3 + $0x1b8] sm:$0xf]
        %v2266 = vld [vmem:[%s3 + $0x1bc] sm:$0xf]
        %v2267 = vld [vmem:[%s3 + $0x1c0] sm:$0xf]
        %v2268 = vld [vmem:[%s3 + $0x1c4] sm:$0xf]
        %v2269 = vld [vmem:[%s3 + $0x1c8] sm:$0xf]
        %v2270 = vld [vmem:[%s3 + $0x1cc] sm:$0xf]
        %v2271 = vld [vmem:[%s3 + $0x1d0] sm:$0xf]
        %v2272 = vld [vmem:[%s3 + $0x1d4] sm:$0xf]
        %v2273 = vld [vmem:[%s3 + $0x1d8] sm:$0xf]
        %v2274 = vld [vmem:[%s3 + $0x1dc] sm:$0xf]
        %v2275 = vld [vmem:[%s3 + $0x1e0] sm:$0xf]
        %v2276 = vld [vmem:[%s3 + $0x1e4] sm:$0xf]
        %v2277 = vld [vmem:[%s3 + $0x1e8] sm:$0xf]
        %v2278 = vld [vmem:[%s3 + $0x1ec] sm:$0xf]
        %v2279 = vld [vmem:[%s3 + $0x1f0] sm:$0xf]
        %v2280 = vld [vmem:[%s3 + $0x1f4] sm:$0xf]
        %v2281 = vld [vmem:[%s3 + $0x1f8] sm:$0xf]
        %v2282 = vld [vmem:[%s3 + $0x1fc] sm:$0xf]
        %v2283 = vld [vmem:[%s3 + $0x200] sm:$0xf]
        %v2284 = vld [vmem:[%s3 + $0x204] sm:$0xf]
        %v2285 = vld [vmem:[%s3 + $0x208] sm:$0xf]
        %v2286 = vld [vmem:[%s3 + $0x20c] sm:$0xf]
        %v2287 = vld [vmem:[%s3 + $0x210] sm:$0xf]
        %v2288 = vld [vmem:[%s3 + $0x214] sm:$0xf]
        %v2289 = vld [vmem:[%s3 + $0x218] sm:$0xf]
        %v2290 = vld [vmem:[%s3 + $0x21c] sm:$0xf]
        %v2291 = vld [vmem:[%s3 + $0x220] sm:$0xf]
        %v2292 = vld [vmem:[%s3 + $0x224] sm:$0xf]
        %v2293 = vld [vmem:[%s3 + $0x228] sm:$0xf]
        %v2294 = vld [vmem:[%s3 + $0x22c] sm:$0xf]
        %v2295 = vld [vmem:[%s3 + $0x230] sm:$0xf]
        %v2296 = vld [vmem:[%s3 + $0x234] sm:$0xf]
        %v2297 = vld [vmem:[%s3 + $0x238] sm:$0xf]
        %v2298 = vld [vmem:[%s3 + $0x23c] sm:$0xf]
        %v2309 = vunpack.c.l.b16 %v2145
        %v2310 = vunpack.c.h.b16 %v2145
        %v2311 = vunpack.c.l.b16 %v2146
        %v2312 = vunpack.c.h.b16 %v2146
        %v2313 = vunpack.c.l.b16 %v2147
        %v2314 = vunpack.c.h.b16 %v2147
        %v2315 = vunpack.c.l.b16 %v2148
        %v2316 = vunpack.c.h.b16 %v2148
        %v2317 = vunpack.c.l.b16 %v2149
        %v2318 = vunpack.c.l.b16 %v2150
        %v2319 = vunpack.c.h.b16 %v2150
        %v2320 = vunpack.c.l.b16 %v2151
        %v2321 = vunpack.c.h.b16 %v2151
        %v2322 = vunpack.c.l.b16 %v2152
        %v2323 = vunpack.c.h.b16 %v2152
        %v2324 = vunpack.c.l.b16 %v2153
        %v2325 = vunpack.c.h.b16 %v2153
        %v2326 = vunpack.c.l.b16 %v2154
        %v2327 = vpack.c.b16 %v2318, %v2309
        %v2328 = vpack.c.b16 %v2319, %v2310
        %v2329 = vpack.c.b16 %v2320, %v2311
        %v2330 = vpack.c.b16 %v2321, %v2312
        %v2331 = vpack.c.b16 %v2322, %v2313
        %v2332 = vpack.c.b16 %v2323, %v2314
        %v2333 = vpack.c.b16 %v2324, %v2315
        %v2334 = vpack.c.b16 %v2325, %v2316
        %v2335 = vpack.c.b16 %v2326, %v2317
        %v2489 = vunpack.c.l.b16 %v2155
        %v2490 = vunpack.c.l.b16 %v2156
        %v2491 = vunpack.c.l.b16 %v2157
        %v2492 = vunpack.c.l.b16 %v2158
        %v2493 = vunpack.c.l.b16 %v2159
        %v2494 = vunpack.c.l.b16 %v2160
        %v2495 = vunpack.c.l.b16 %v2161
        %v2496 = vunpack.c.l.b16 %v2162
        %v2497 = vunpack.c.l.b16 %v2163
        %v2498 = vunpack.c.l.b16 %v2164
        %v2499 = vunpack.c.l.b16 %v2165
        %v2500 = vunpack.c.l.b16 %v2166
        %v2501 = vunpack.c.l.b16 %v2167
        %v2502 = vunpack.c.l.b16 %v2168
        %v2503 = vunpack.c.l.b16 %v2169
        %v2504 = vunpack.c.l.b16 %v2170
        %v2505 = vunpack.c.l.b16 %v2171
        %v2506 = vunpack.c.l.b16 %v2172
        %v2507 = vunpack.c.l.b16 %v2173
        %v2508 = vunpack.c.l.b16 %v2174
        %v2509 = vunpack.c.l.b16 %v2175
        %v2510 = vunpack.c.l.b16 %v2176
        %v2511 = vunpack.c.l.b16 %v2177
        %v2512 = vunpack.c.l.b16 %v2178
        %v2513 = vunpack.c.l.b16 %v2179
        %v2514 = vunpack.c.l.b16 %v2180
        %v2515 = vunpack.c.l.b16 %v2181
        %v2516 = vunpack.c.l.b16 %v2182
        %v2517 = vunpack.c.l.b16 %v2183
        %v2518 = vunpack.c.l.b16 %v2184
        %v2519 = vunpack.c.l.b16 %v2185
        %v2520 = vunpack.c.l.b16 %v2186
        %v2521 = vunpack.c.l.b16 %v2187
        %v2522 = vunpack.c.l.b16 %v2188
        %v2523 = vunpack.c.l.b16 %v2189
        %v2524 = vunpack.c.l.b16 %v2190
        %v2525 = vunpack.c.l.b16 %v2191
        %v2526 = vunpack.c.l.b16 %v2192
        %v2527 = vunpack.c.l.b16 %v2193
        %v2528 = vunpack.c.l.b16 %v2194
        %v2529 = vunpack.c.l.b16 %v2195
        %v2530 = vunpack.c.l.b16 %v2196
        %v2531 = vunpack.c.l.b16 %v2197
        %v2532 = vunpack.c.l.b16 %v2198
        %v2533 = vunpack.c.l.b16 %v2199
        %v2534 = vunpack.c.l.b16 %v2200
        %v2535 = vunpack.c.l.b16 %v2201
        %v2536 = vunpack.c.l.b16 %v2202
        %v2537 = vunpack.c.l.b16 %v2203
        %v2538 = vunpack.c.l.b16 %v2204
        %v2539 = vunpack.c.l.b16 %v2205
        %v2540 = vunpack.c.l.b16 %v2206
        %v2541 = vunpack.c.l.b16 %v2207
        %v2542 = vunpack.c.l.b16 %v2208
        %v2543 = vunpack.c.l.b16 %v2209
        %v2544 = vunpack.c.l.b16 %v2210
        %v2545 = vunpack.c.l.b16 %v2211
        %v2546 = vunpack.c.l.b16 %v2212
        %v2547 = vunpack.c.l.b16 %v2213
        %v2548 = vunpack.c.l.b16 %v2214
        %v2549 = vunpack.c.l.b16 %v2215
        %v2550 = vunpack.c.l.b16 %v2216
        %v2551 = vunpack.c.l.b16 %v2217
        %v2552 = vunpack.c.l.b16 %v2218
        %v2553 = vunpack.c.l.b16 %v2219
        %v2554 = vunpack.c.l.b16 %v2220
        %v2555 = vunpack.c.l.b16 %v2221
        %v2556 = vunpack.c.l.b16 %v2222
        %v2557 = vunpack.c.l.b16 %v2223
        %v2558 = vunpack.c.l.b16 %v2224
        %v2559 = vunpack.c.l.b16 %v2225
        %v2560 = vunpack.c.l.b16 %v2226
        %v2561 = vunpack.c.l.b16 %v2227
        %v2562 = vunpack.c.l.b16 %v2228
        %v2563 = vunpack.c.l.b16 %v2229
        %v2564 = vunpack.c.l.b16 %v2230
        %v2565 = vunpack.c.l.b16 %v2231
        %v2566 = vunpack.c.l.b16 %v2232
        %v2567 = vunpack.c.l.b16 %v2233
        %v2568 = vunpack.c.l.b16 %v2234
        %v2569 = vunpack.c.l.b16 %v2235
        %v2570 = vunpack.c.l.b16 %v2236
        %v2571 = vunpack.c.l.b16 %v2237
        %v2572 = vunpack.c.l.b16 %v2238
        %v2573 = vunpack.c.l.b16 %v2239
        %v2574 = vunpack.c.l.b16 %v2240
        %v2575 = vunpack.c.l.b16 %v2241
        %v2576 = vunpack.c.l.b16 %v2242
        %v2577 = vunpack.c.l.b16 %v2243
        %v2578 = vunpack.c.l.b16 %v2244
        %v2579 = vunpack.c.l.b16 %v2245
        %v2580 = vunpack.c.l.b16 %v2246
        %v2581 = vunpack.c.l.b16 %v2247
        %v2582 = vunpack.c.l.b16 %v2248
        %v2583 = vunpack.c.l.b16 %v2249
        %v2584 = vunpack.c.l.b16 %v2250
        %v2585 = vunpack.c.l.b16 %v2251
        %v2586 = vunpack.c.l.b16 %v2252
        %v2587 = vunpack.c.l.b16 %v2253
        %v2588 = vunpack.c.l.b16 %v2254
        %v2589 = vunpack.c.l.b16 %v2255
        %v2590 = vunpack.c.l.b16 %v2256
        %v2591 = vunpack.c.l.b16 %v2257
        %v2592 = vunpack.c.l.b16 %v2258
        %v2593 = vunpack.c.l.b16 %v2259
        %v2594 = vunpack.c.l.b16 %v2260
        %v2595 = vunpack.c.l.b16 %v2261
        %v2596 = vunpack.c.l.b16 %v2262
        %v2597 = vunpack.c.l.b16 %v2263
        %v2598 = vunpack.c.l.b16 %v2264
        %v2599 = vunpack.c.l.b16 %v2265
        %v2600 = vunpack.c.l.b16 %v2266
        %v2601 = vunpack.c.l.b16 %v2267
        %v2602 = vunpack.c.l.b16 %v2268
        %v2603 = vunpack.c.l.b16 %v2269
        %v2604 = vunpack.c.l.b16 %v2270
        %v2605 = vunpack.c.l.b16 %v2271
        %v2606 = vunpack.c.l.b16 %v2272
        %v2607 = vunpack.c.l.b16 %v2273
        %v2608 = vunpack.c.l.b16 %v2274
        %v2609 = vunpack.c.l.b16 %v2275
        %v2610 = vunpack.c.l.b16 %v2276
        %v2611 = vunpack.c.l.b16 %v2277
        %v2612 = vunpack.c.l.b16 %v2278
        %v2613 = vunpack.c.l.b16 %v2279
        %v2614 = vunpack.c.l.b16 %v2280
        %v2615 = vunpack.c.l.b16 %v2281
        %v2616 = vunpack.c.l.b16 %v2282
        %v2617 = vunpack.c.l.b16 %v2283
        %v2618 = vunpack.c.l.b16 %v2284
        %v2619 = vunpack.c.l.b16 %v2285
        %v2620 = vunpack.c.l.b16 %v2286
        %v2621 = vunpack.c.l.b16 %v2287
        %v2622 = vunpack.c.l.b16 %v2288
        %v2623 = vunpack.c.l.b16 %v2289
        %v2624 = vunpack.c.l.b16 %v2290
        %v2625 = vunpack.c.l.b16 %v2291
        %v2626 = vunpack.c.l.b16 %v2292
        %v2627 = vunpack.c.l.b16 %v2293
        %v2628 = vunpack.c.l.b16 %v2294
        %v2629 = vunpack.c.l.b16 %v2295
        %v2630 = vunpack.c.l.b16 %v2296
        %v2631 = vunpack.c.l.b16 %v2297
        %v2632 = vunpack.c.l.b16 %v2298
        %v2633 = vpack.c.b16 %v2490, %v2489
        %v2634 = vpack.c.b16 %v2492, %v2491
        %v2635 = vpack.c.b16 %v2494, %v2493
        %v2636 = vpack.c.b16 %v2496, %v2495
        %v2637 = vpack.c.b16 %v2498, %v2497
        %v2638 = vpack.c.b16 %v2500, %v2499
        %v2639 = vpack.c.b16 %v2502, %v2501
        %v2640 = vpack.c.b16 %v2504, %v2503
        %v2641 = vpack.c.b16 %v2506, %v2505
        %v2642 = vpack.c.b16 %v2508, %v2507
        %v2643 = vpack.c.b16 %v2510, %v2509
        %v2644 = vpack.c.b16 %v2512, %v2511
        %v2645 = vpack.c.b16 %v2514, %v2513
        %v2646 = vpack.c.b16 %v2516, %v2515
        %v2647 = vpack.c.b16 %v2518, %v2517
        %v2648 = vpack.c.b16 %v2520, %v2519
        %v2649 = vpack.c.b16 %v2522, %v2521
        %v2650 = vpack.c.b16 %v2524, %v2523
        %v2651 = vpack.c.b16 %v2526, %v2525
        %v2652 = vpack.c.b16 %v2528, %v2527
        %v2653 = vpack.c.b16 %v2530, %v2529
        %v2654 = vpack.c.b16 %v2532, %v2531
        %v2655 = vpack.c.b16 %v2534, %v2533
        %v2656 = vpack.c.b16 %v2536, %v2535
        %v2657 = vpack.c.b16 %v2538, %v2537
        %v2658 = vpack.c.b16 %v2540, %v2539
        %v2659 = vpack.c.b16 %v2542, %v2541
        %v2660 = vpack.c.b16 %v2544, %v2543
        %v2661 = vpack.c.b16 %v2546, %v2545
        %v2662 = vpack.c.b16 %v2548, %v2547
        %v2663 = vpack.c.b16 %v2550, %v2549
        %v2664 = vpack.c.b16 %v2552, %v2551
        %v2665 = vpack.c.b16 %v2554, %v2553
        %v2666 = vpack.c.b16 %v2556, %v2555
        %v2667 = vpack.c.b16 %v2558, %v2557
        %v2668 = vpack.c.b16 %v2560, %v2559
        %v2669 = vpack.c.b16 %v2562, %v2561
        %v2670 = vpack.c.b16 %v2564, %v2563
        %v2671 = vpack.c.b16 %v2566, %v2565
        %v2672 = vpack.c.b16 %v2568, %v2567
        %v2673 = vpack.c.b16 %v2570, %v2569
        %v2674 = vpack.c.b16 %v2572, %v2571
        %v2675 = vpack.c.b16 %v2574, %v2573
        %v2676 = vpack.c.b16 %v2576, %v2575
        %v2677 = vpack.c.b16 %v2578, %v2577
        %v2678 = vpack.c.b16 %v2580, %v2579
        %v2679 = vpack.c.b16 %v2582, %v2581
        %v2680 = vpack.c.b16 %v2584, %v2583
        %v2681 = vpack.c.b16 %v2586, %v2585
        %v2682 = vpack.c.b16 %v2588, %v2587
        %v2683 = vpack.c.b16 %v2590, %v2589
        %v2684 = vpack.c.b16 %v2592, %v2591
        %v2685 = vpack.c.b16 %v2594, %v2593
        %v2686 = vpack.c.b16 %v2596, %v2595
        %v2687 = vpack.c.b16 %v2598, %v2597
        %v2688 = vpack.c.b16 %v2600, %v2599
        %v2689 = vpack.c.b16 %v2602, %v2601
        %v2690 = vpack.c.b16 %v2604, %v2603
        %v2691 = vpack.c.b16 %v2606, %v2605
        %v2692 = vpack.c.b16 %v2608, %v2607
        %v2693 = vpack.c.b16 %v2610, %v2609
        %v2694 = vpack.c.b16 %v2612, %v2611
        %v2695 = vpack.c.b16 %v2614, %v2613
        %v2696 = vpack.c.b16 %v2616, %v2615
        %v2697 = vpack.c.b16 %v2618, %v2617
        %v2698 = vpack.c.b16 %v2620, %v2619
        %v2699 = vpack.c.b16 %v2622, %v2621
        %v2700 = vpack.c.b16 %v2624, %v2623
        %v2701 = vpack.c.b16 %v2626, %v2625
        %v2702 = vpack.c.b16 %v2628, %v2627
        %v2703 = vpack.c.b16 %v2630, %v2629
        %v2704 = vpack.c.b16 %v2632, %v2631
        %2777 = vmatpush.bf16.msra.mxu0 %v2640
        %2778 = vmatpush.bf16.msra.mxu0 %v2639
        %2779 = vmatpush.bf16.msra.mxu0 %v2638
        %2780 = vmatpush.bf16.msra.mxu0 %v2637
        %2781 = vmatpush.bf16.msra.mxu0 %v2636
        %2782 = vmatpush.bf16.msra.mxu0 %v2635
        %2783 = vmatpush.bf16.msra.mxu0 %v2634
        %2784 = vmatpush.bf16.msra.mxu0 %v2633
        %2785 = vmatmul.bf16.gmra.mxu0 %v2327
        %v2786 = vpop.f32.mrf.mxu0
        %v2787 = vadd.f32 0.0, %v2786
        %v2788 = vpop.f32.mrf.mxu0
        %v2789 = vadd.f32 0.0, %v2788
        %2790 = vdwg.mxu0
        %2791 = vmatpush.bf16.msra.mxu0 %v2648
        %2792 = vmatpush.bf16.msra.mxu0 %v2647
        %2793 = vmatpush.bf16.msra.mxu0 %v2646
        %2794 = vmatpush.bf16.msra.mxu0 %v2645
        %2795 = vmatpush.bf16.msra.mxu0 %v2644
        %2796 = vmatpush.bf16.msra.mxu0 %v2643
        %2797 = vmatpush.bf16.msra.mxu0 %v2642
        %2798 = vmatpush.bf16.msra.mxu0 %v2641
        %2799 = vmatmul.bf16.gmra.mxu0 %v2328
        %v2800 = vpop.f32.mrf.mxu0
        %v2801 = vadd.f32 %v2787, %v2800
        %v2802 = vpop.f32.mrf.mxu0
        %v2803 = vadd.f32 %v2789, %v2802
        %2804 = vdwg.mxu0
        %2805 = vmatpush.bf16.msra.mxu0 %v2656
        %2806 = vmatpush.bf16.msra.mxu0 %v2655
        %2807 = vmatpush.bf16.msra.mxu0 %v2654
        %2808 = vmatpush.bf16.msra.mxu0 %v2653
        %2809 = vmatpush.bf16.msra.mxu0 %v2652
        %2810 = vmatpush.bf16.msra.mxu0 %v2651
        %2811 = vmatpush.bf16.msra.mxu0 %v2650
        %2812 = vmatpush.bf16.msra.mxu0 %v2649
        %2813 = vmatmul.bf16.gmra.mxu0 %v2329
        %v2814 = vpop.f32.mrf.mxu0
        %v2815 = vadd.f32 %v2801, %v2814
        %v2816 = vpop.f32.mrf.mxu0
        %v2817 = vadd.f32 %v2803, %v2816
        %2818 = vdwg.mxu0
        %2819 = vmatpush.bf16.msra.mxu0 %v2664
        %2820 = vmatpush.bf16.msra.mxu0 %v2663
        %2821 = vmatpush.bf16.msra.mxu0 %v2662
        %2822 = vmatpush.bf16.msra.mxu0 %v2661
        %2823 = vmatpush.bf16.msra.mxu0 %v2660
        %2824 = vmatpush.bf16.msra.mxu0 %v2659
        %2825 = vmatpush.bf16.msra.mxu0 %v2658
        %2826 = vmatpush.bf16.msra.mxu0 %v2657
        %2827 = vmatmul.bf16.gmra.mxu0 %v2330
        %v2828 = vpop.f32.mrf.mxu0
        %v2829 = vadd.f32 %v2815, %v2828
        %v2830 = vpop.f32.mrf.mxu0
        %v2831 = vadd.f32 %v2817, %v2830
        %2832 = vdwg.mxu0
        %2833 = vmatpush.bf16.msra.mxu0 %v2672
        %2834 = vmatpush.bf16.msra.mxu0 %v2671
        %2835 = vmatpush.bf16.msra.mxu0 %v2670
        %2836 = vmatpush.bf16.msra.mxu0 %v2669
        %2837 = vmatpush.bf16.msra.mxu0 %v2668
        %2838 = vmatpush.bf16.msra.mxu0 %v2667
        %2839 = vmatpush.bf16.msra.mxu0 %v2666
        %2840 = vmatpush.bf16.msra.mxu0 %v2665
        %2841 = vmatmul.bf16.gmra.mxu0 %v2331
        %v2842 = vpop.f32.mrf.mxu0
        %v2843 = vadd.f32 %v2829, %v2842
        %v2844 = vpop.f32.mrf.mxu0
        %v2845 = vadd.f32 %v2831, %v2844
        %2846 = vdwg.mxu0
        %2847 = vmatpush.bf16.msra.mxu0 %v2680
        %2848 = vmatpush.bf16.msra.mxu0 %v2679
        %2849 = vmatpush.bf16.msra.mxu0 %v2678
        %2850 = vmatpush.bf16.msra.mxu0 %v2677
        %2851 = vmatpush.bf16.msra.mxu0 %v2676
        %2852 = vmatpush.bf16.msra.mxu0 %v2675
        %2853 = vmatpush.bf16.msra.mxu0 %v2674
        %2854 = vmatpush.bf16.msra.mxu0 %v2673
        %2855 = vmatmul.bf16.gmra.mxu0 %v2332
        %v2856 = vpop.f32.mrf.mxu0
        %v2857 = vadd.f32 %v2843, %v2856
        %v2858 = vpop.f32.mrf.mxu0
        %v2859 = vadd.f32 %v2845, %v2858
        %2860 = vdwg.mxu0
        %2861 = vmatpush.bf16.msra.mxu0 %v2688
        %2862 = vmatpush.bf16.msra.mxu0 %v2687
        %2863 = vmatpush.bf16.msra.mxu0 %v2686
        %2864 = vmatpush.bf16.msra.mxu0 %v2685
        %2865 = vmatpush.bf16.msra.mxu0 %v2684
        %2866 = vmatpush.bf16.msra.mxu0 %v2683
        %2867 = vmatpush.bf16.msra.mxu0 %v2682
        %2868 = vmatpush.bf16.msra.mxu0 %v2681
        %2869 = vmatmul.bf16.gmra.mxu0 %v2333
        %v2870 = vpop.f32.mrf.mxu0
        %v2871 = vadd.f32 %v2857, %v2870
        %v2872 = vpop.f32.mrf.mxu0
        %v2873 = vadd.f32 %v2859, %v2872
        %2874 = vdwg.mxu0
        %2875 = vmatpush.bf16.msra.mxu0 %v2696
        %2876 = vmatpush.bf16.msra.mxu0 %v2695
        %2877 = vmatpush.bf16.msra.mxu0 %v2694
        %2878 = vmatpush.bf16.msra.mxu0 %v2693
        %2879 = vmatpush.bf16.msra.mxu0 %v2692
        %2880 = vmatpush.bf16.msra.mxu0 %v2691
        %2881 = vmatpush.bf16.msra.mxu0 %v2690
        %2882 = vmatpush.bf16.msra.mxu0 %v2689
        %2883 = vmatmul.bf16.gmra.mxu0 %v2334
        %v2884 = vpop.f32.mrf.mxu0
        %v2885 = vadd.f32 %v2871, %v2884
        %v2886 = vpop.f32.mrf.mxu0
        %v2887 = vadd.f32 %v2873, %v2886
        %2888 = vdwg.mxu0
        %2889 = vmatpush.bf16.msra.mxu0 %v2704
        %2890 = vmatpush.bf16.msra.mxu0 %v2703
        %2891 = vmatpush.bf16.msra.mxu0 %v2702
        %2892 = vmatpush.bf16.msra.mxu0 %v2701
        %2893 = vmatpush.bf16.msra.mxu0 %v2700
        %2894 = vmatpush.bf16.msra.mxu0 %v2699
        %2895 = vmatpush.bf16.msra.mxu0 %v2698
        %2896 = vmatpush.bf16.msra.mxu0 %v2697
        %2897 = vmatmul.bf16.gmra.mxu0 %v2335
        %v2898 = vpop.f32.mrf.mxu0
        %v2899 = vadd.f32 %v2885, %v2898
        %v2900 = vpop.f32.mrf.mxu0
        %v2901 = vadd.f32 %v2887, %v2900
        %2902 = vdwg.mxu0
        %v2903 = vmax.f32 %v2084, %v2899
        %v2904 = vmax.f32 %v2086, %v2901
        %v2906 = vperm.slane %v1260, 0
        %v2908 = vadd.f32 %v2903, %v2906
        %v2909 = vadd.f32 %v2904, %v2906
        %v2910 = vmax.f32 %v2908, 0.0
        %v2911 = vmax.f32 %v2909, 0.0
        %s2912 = smul.u32 %s1262, 16
        %s2913 = scalar_lea.vmem [#allocation6], %s2912
        %vm2914 = vcmask 523264
        %2915 = vst.msk [vmem:[%s2913] sm:$0xff] %vm2914, %v2910
        %vm2916 = vcmask 521216
        %2917 = vst.msk [vmem:[%s2913 + $0x8] sm:$0x3f] %vm2916, %v2911
      $region52: #{cnn_forward.2} parent=39 // loop_footer
        %s1266 = sadd.s32 1, %s1262
      $region53: #{cnn_forward.2} parent=39 // loop_footer_branch
        %1261 = sbr.rel target = $region49
      $region54: #{cnn_forward.2} parent=39 // loop_exit
        _
      %v2918 = vld [vmem:[#allocation6] ss:$2 sm:$0x7f]
      %s2919 = scalar_lea.vmem [#allocation6], 16
      %v2920 = vld [vmem:[%s2919] ss:$2 sm:$0x7f]
      %s2921 = scalar_lea.vmem [#allocation6], 32
      %v2922 = vld [vmem:[%s2921] ss:$2 sm:$0x7f]
      %s2923 = scalar_lea.vmem [#allocation6], 48
      %v2924 = vld [vmem:[%s2923] ss:$2 sm:$0x7f]
      %s2925 = scalar_lea.vmem [#allocation6], 64
      %v2926 = vld [vmem:[%s2925] ss:$2 sm:$0x7f]
      %s2927 = scalar_lea.vmem [#allocation6], 80
      %v2928 = vld [vmem:[%s2927] ss:$2 sm:$0x7f]
      %s2929 = scalar_lea.vmem [#allocation6], 96
      %v2930 = vld [vmem:[%s2929] ss:$2 sm:$0x7f]
      %s2931 = scalar_lea.vmem [#allocation6], 1
      %v2932 = vld [vmem:[%s2931] ss:$2 sm:$0x7f]
      %s2933 = scalar_lea.vmem [#allocation6], 17
      %v2934 = vld [vmem:[%s2933] ss:$2 sm:$0x7f]
      %s2935 = scalar_lea.vmem [#allocation6], 33
      %v2936 = vld [vmem:[%s2935] ss:$2 sm:$0x7f]
      %s2937 = scalar_lea.vmem [#allocation6], 49
      %v2938 = vld [vmem:[%s2937] ss:$2 sm:$0x7f]
      %s2939 = scalar_lea.vmem [#allocation6], 65
      %v2940 = vld [vmem:[%s2939] ss:$2 sm:$0x7f]
      %s2941 = scalar_lea.vmem [#allocation6], 81
      %v2942 = vld [vmem:[%s2941] ss:$2 sm:$0x7f]
      %s2943 = scalar_lea.vmem [#allocation6], 97
      %v2944 = vld [vmem:[%s2943] ss:$2 sm:$0x7f]
      %v2945 = vmax.f32 %v2918, %v2932
      %v2946 = vmax.f32 %v2920, %v2934
      %v2947 = vmax.f32 %v2922, %v2936
      %v2948 = vmax.f32 %v2924, %v2938
      %v2949 = vmax.f32 %v2926, %v2940
      %v2950 = vmax.f32 %v2928, %v2942
      %v2951 = vmax.f32 %v2930, %v2944
      %vm2952 = vcmask 522240
      %2953 = vst.msk [vmem:[%s224] sm:$0x7f] %vm2952, %v2945
      %2954 = vst.msk [vmem:[%s224 + $0x8] sm:$0x7f] %vm2952, %v2946
      %2955 = vst.msk [vmem:[%s224 + $0x10] sm:$0x7f] %vm2952, %v2947
      %2956 = vst.msk [vmem:[%s224 + $0x18] sm:$0x7f] %vm2952, %v2948
      %2957 = vst.msk [vmem:[%s224 + $0x20] sm:$0x7f] %vm2952, %v2949
      %2958 = vst.msk [vmem:[%s224 + $0x28] sm:$0x7f] %vm2952, %v2950
      %2959 = vst.msk [vmem:[%s224 + $0x30] sm:$0x7f] %vm2952, %v2951
      %p2960 = scmp.lt.s32.totalorder %s16, 1
      %s2961 = scalar_select %p2960, %s16, 1
      %s2962 = smul.addr %s2961, 7
      %s2963 = smul.addr %s2962, 8
      %s2964 = scalar_lea.vmem %s5, %s2963
      // Predicated region
      $region55: #{cnn_forward.2} parent=39 // pred_check
        %p2965 = pneg %p144
      $region56: #{cnn_forward.2} parent=39 // pred_check_branch
        %2967 = sbr.rel (%p2965) target = $region58
      $region57: #{cnn_forward.2} parent=39 // pred_region
        _
      $region58: #{cnn_forward.2} parent=39 // pred_fallthru
        _
    $region40: #{cnn_forward.2} parent=5 // pred_fallthru
      _
    %p2968 = scmp.le.s32.totalorder 2, %s11
    // Predicated region
    $region59: #{cnn_forward.2} parent=5 // pred_check
      %p2969 = pneg %p2968
    $region60: #{cnn_forward.2} parent=5 // pred_check_branch
      %2971 = sbr.rel (%p2969) target = $region62
    $region61: #{cnn_forward.2} parent=5 // pred_region
      %s2972 = ssub.s32 %s11, 2
      // Predicated region
      $region63: #{cnn_forward.2} parent=61 // pred_check
        %p2973 = pneg %p150
      $region64: #{cnn_forward.2} parent=61 // pred_check_branch
        %2975 = sbr.rel (%p2973) target = $region66
      $region65: #{cnn_forward.2} parent=61 // pred_region
        %p2976 = scmp.lt.s32.totalorder %s17, 1
        %s2977 = scalar_select %p2976, %s17, 1
        %s2978 = smul.addr %s2977, 7
        %s2979 = smul.addr %s2978, 8
        %s2980 = scalar_lea.vmem %s5, %s2979
      $region66: #{cnn_forward.2} parent=61 // pred_fallthru
        _
    $region62: #{cnn_forward.2} parent=5 // pred_fallthru
      _
  $region6: #{cnn_forward.2} parent=0 // loop_footer
    %s15 = sadd.s32 1, %s11
  $region7: #{cnn_forward.2} parent=0 // loop_footer_branch
    %10 = sbr.rel target = $region3
  $region8: #{cnn_forward.2} parent=0 // loop_exit
    _

</llo_original>
